<compile_context>
chip_gen: v5e
topology: v5e:2x2
jax: 0.10.0
libtpu: 0.0.40
codegen_flags: <defaults>
</compile_context>

<pallas_src>
import math

import jax
import jax.numpy as jnp
from jax import lax
from jax.experimental import pallas as pl
from jax.experimental.pallas import tpu as pltpu

_LANE = 128
_SUBLANE = 8
_MAX_B_TILE = 512          # ~85%+ of HBM writeback roofline per measured sweep
_ONE_HOT_MAX_VOCAB = 1024  # below this, one pass through the otherwise-idle
                           # MXU beats a gather lowering (esp. on v5e)


def _round_up(x, m):
    return (x + m - 1) // m * m


def _pick_batch_tile(batch):
    # Large tiles amortize the ~0.35 us / ~600 cycle per-grid-step overhead;
    # never pad a small batch up to the tile, and keep it sublane-aligned.
    return max(_SUBLANE, min(_MAX_B_TILE, _round_up(batch, _SUBLANE)))


def _make_fused_lookup(names, vocabs, dims):
    """Builds a jitted fused embedding lookup for a fixed feature config."""
    num_feats = len(names)
    d_total = sum(dims)
    d_pad = max(_LANE, _round_up(d_total, _LANE))
    offsets = []
    acc = 0
    for d in dims:
        offsets.append(acc)
        acc += d

    def lookup(x, tables):
        # x: [..., F] integer ids; tables: tuple of [V_f, D_f] float32.
        lead_shape = x.shape[:-1]
        batch = math.prod(lead_shape)
        b_tile = _pick_batch_tile(batch)
        bp = _round_up(batch, b_tile)

        ids = x.reshape(batch, num_feats).astype(jnp.int32)
        if bp != batch:
            ids = jnp.pad(ids, ((0, bp - batch), (0, 0)))

        def kernel(idx_ref, *refs):
            # idx_ref  : VMEM int32 [b_tile, F]      (per-tile category ids)
            # refs[:-1]: per-feature tables, VMEM [V_f, D_f] f32 (grid-invariant)
            # refs[-1] : output slab block, VMEM [b_tile, d_pad] f32
            out_ref = refs[-1]
            tab_refs = refs[:num_feats]

            pieces = []
            for f in range(num_feats):
                v = vocabs[f]
                # Clamp OOB ids like jnp.take (the pure-JAX reference);
                # nn.Embedding would raise instead.
                ids_col = jnp.clip(idx_ref[:, f:f + 1], 0, v - 1)  # [b_tile, 1]
                if v <= _ONE_HOT_MAX_VOCAB:
                    # One-hot MXU gather: one matmul per feature per tile.
                    iota = lax.broadcasted_iota(jnp.int32, (b_tile, v), 1)
                    onehot = (ids_col == iota).astype(jnp.float32)
                    pieces.append(
                        jnp.dot(onehot, tab_refs[f][...],
                                preferred_element_type=jnp.float32))
                else:
                    # Vectorized row gather for large vocabularies.
                    # TODO(synk): for production vocabularies that stress VMEM
                    # (esp. v7x 64 MiB), move this table's in_spec to
                    # memory_space=pl.ANY and DMA only the gathered rows.
                    pieces.append(
                        jnp.take(tab_refs[f][...], ids_col[:, 0], axis=0))
            if d_pad > d_total:
                pieces.append(jnp.zeros((b_tile, d_pad - d_total), jnp.float32))
            # Single unmasked, lane-dense full-width store per grid step.
            out_ref[...] = jnp.concatenate(pieces, axis=-1)

        table_bytes = sum(v * d * 4 for v, d in zip(vocabs, dims))
        cost = pl.CostEstimate(
            flops=2 * bp * sum(v * d for v, d in zip(vocabs, dims)),
            transcendentals=0,
            bytes_accessed=table_bytes + bp * num_feats * 4 + bp * d_pad * 4,
        )

        slab = pl.pallas_call(
            kernel,
            out_shape=jax.ShapeDtypeStruct((bp, d_pad), jnp.float32),
            grid_spec=pltpu.PrefetchScalarGridSpec(
                num_scalar_prefetch=0,
                grid=(bp // b_tile,),
                in_specs=[pl.BlockSpec((b_tile, num_feats), lambda i: (i, 0))]
                + [pl.BlockSpec((v, d), lambda i: (0, 0))
                   for v, d in zip(vocabs, dims)],
                out_specs=pl.BlockSpec((b_tile, d_pad), lambda i: (i, 0)),
            ),
            compiler_params=pltpu.CompilerParams(
                dimension_semantics=("parallel",)),
            cost_estimate=cost,
        )(ids, *tables)

        # NOTE: features sit at packed (non-128-aligned) offsets inside the
        # lane-dense slab; consumers that can take the slab directly (or
        # 128-aligned per-feature offsets) would avoid this second pass.
        return {
            name: slab[:batch, offsets[f]:offsets[f] + dims[f]]
            .reshape(*lead_shape, dims[f])
            for f, name in enumerate(names)
        }

    return jax.jit(lookup)


class CategoricalFeatureGraph:
    """JAX/Pallas port of the PyTorch CategoricalFeatureGraph module."""

    def __init__(self, configs, key):
        self.configs = configs
        self.hidden_cat_size = configs["hidden_cat_size"]  # parity; unused here
        self.cat_features = list(configs["cat_features"])
        # nn.Embedding-shaped parameters: [num_embeddings, embedding_dim],
        # standard-normal init like the PyTorch default.
        self.embeddings = {}
        for name, (num_emb, emb_dim) in configs["embedding_sizes"].items():
            key, sub = jax.random.split(key)
            self.embeddings[name] = jax.random.normal(
                sub, (num_emb, emb_dim), dtype=jnp.float32)
        vocabs = tuple(configs["embedding_sizes"][n][0] for n in self.cat_features)
        dims = tuple(configs["embedding_sizes"][n][1] for n in self.cat_features)
        self._lookup = _make_fused_lookup(tuple(self.cat_features), vocabs, dims)

    def __call__(self, x):
        # x: [..., F] integer categorical ids (F == len(cat_features)).
        tables = tuple(self.embeddings[n] for n in self.cat_features)
        self.cat_inputs = self._lookup(x, tables)
        return self.cat_inputs


def _reference(x, module):
    # Pure-JAX reference (plain take) for the correctness check.
    return {
        name: jnp.take(module.embeddings[name], x[..., idx], axis=0)
        for idx, name in enumerate(module.cat_features)
    }


if __name__ == "__main__":
    configs = {
        "hidden_cat_size": 32,
        "cat_features": ["feature_a", "feature_b", "feature_c"],
        "embedding_sizes": {
            "feature_a": (16, 32),
            "feature_b": (32, 64),
            "feature_c": (8, 16),
        },
    }

    key = jax.random.PRNGKey(0)
    key, k_mod, k_x = jax.random.split(key, 3)
    module = CategoricalFeatureGraph(configs, k_mod)

    def make_ids(k, lead_shape):
        cols = []
        for name in configs["cat_features"]:
            k, sub = jax.random.split(k)
            vocab = configs["embedding_sizes"][name][0]
            cols.append(jax.random.randint(sub, lead_shape, 0, vocab,
                                           dtype=jnp.int32))
        return jnp.stack(cols, axis=-1), k

    # Case 1: [B, T, F] like encoder_categoricals -> 1024 rows, 512-row tiles,
    # a 2-step "parallel" grid (keeps both v7x TensorCores busy).
    x_big, k_x = make_ids(k_x, (64, 16))
    # Case 2: small ragged batch exercising the pad/slice path.
    x_small, k_x = make_ids(k_x, (10,))

    for x in (x_big, x_small):
        out = module(x)
        out = jax.tree_util.tree_map(jax.block_until_ready, out)
        ref = _reference(x, module)
        for name in configs["cat_features"]:
            assert out[name].shape == ref[name].shape, name
            assert jnp.allclose(out[name], ref[name], atol=1e-5), name

    print("KERNEL_OK")
</pallas_src>

<mosaic_0001>
module attributes {stable_mosaic.version = 11 : i64} {
  func.func @kernel(%arg0: i32, %arg1: memref<512x3xi32, #tpu.memory_space<vmem>>, %arg2: memref<16x32xf32, #tpu.memory_space<vmem>>, %arg3: memref<32x64xf32, #tpu.memory_space<vmem>>, %arg4: memref<8x16xf32, #tpu.memory_space<vmem>>, %arg5: memref<512x128xf32, #tpu.memory_space<vmem>>) attributes {dimension_semantics = [#tpu.dimension_semantics<parallel>], iteration_bounds = array<i64: 2>, scalar_prefetch = 0 : i64, scratch_operands = 0 : i64, tpu.core_type = #tpu.core_type<tc>, window_params = [{transform_indices = @transform_0, window_bounds = array<i64: 512, 3>}, {pipeline_mode = #tpu.pipeline_mode<synchronous>, transform_indices = @transform_1, window_bounds = array<i64: 16, 32>}, {pipeline_mode = #tpu.pipeline_mode<synchronous>, transform_indices = @transform_2, window_bounds = array<i64: 32, 64>}, {pipeline_mode = #tpu.pipeline_mode<synchronous>, transform_indices = @transform_3, window_bounds = array<i64: 8, 16>}, {transform_indices = @transform_4, window_bounds = array<i64: 512, 128>}]} {
    %c0 = arith.constant 0 : index
    %c0_0 = arith.constant 0 : index
    %0 = vector.load %arg1[%c0, %c0_0] : memref<512x3xi32, #tpu.memory_space<vmem>>, vector<512x1xi32>
    %c0_i32 = arith.constant 0 : i32
    %c15_i32 = arith.constant 15 : i32
    %1 = vector.broadcast %c0_i32 : i32 to vector<512x1xi32>
    %2 = arith.maxsi %1, %0 : vector<512x1xi32>
    %3 = vector.broadcast %c15_i32 : i32 to vector<512x1xi32>
    %4 = arith.minsi %3, %2 : vector<512x1xi32>
    %5 = tpu.iota {dimensions = array<i32: 1>} : vector<512x16xi32>
    %6 = vector.broadcast %4 : vector<512x1xi32> to vector<512x16xi32>
    %7 = arith.cmpi eq, %6, %5 : vector<512x16xi32>
    %8 = arith.extui %7 : vector<512x16xi1> to vector<512x16xi32>
    %9 = arith.sitofp %8 : vector<512x16xi32> to vector<512x16xf32>
    %c0_1 = arith.constant 0 : index
    %c0_2 = arith.constant 0 : index
    %10 = vector.load %arg2[%c0_1, %c0_2] : memref<16x32xf32, #tpu.memory_space<vmem>>, vector<16x32xf32>
    %cst = arith.constant dense<0.000000e+00> : vector<512x32xf32>
    %11 = tpu.matmul %9, %10, %cst {dimension_numbers = #tpu.dot_dimension_numbers<[1], [0], [0], [1], [0, 0, 1, 1], [], []>} : vector<512x16xf32>, vector<16x32xf32>, vector<512x32xf32> -> vector<512x32xf32>
    %c0_3 = arith.constant 0 : index
    %c1 = arith.constant 1 : index
    %12 = vector.load %arg1[%c0_3, %c1] : memref<512x3xi32, #tpu.memory_space<vmem>>, vector<512x1xi32>
    %c0_i32_4 = arith.constant 0 : i32
    %c31_i32 = arith.constant 31 : i32
    %13 = vector.broadcast %c0_i32_4 : i32 to vector<512x1xi32>
    %14 = arith.maxsi %13, %12 : vector<512x1xi32>
    %15 = vector.broadcast %c31_i32 : i32 to vector<512x1xi32>
    %16 = arith.minsi %15, %14 : vector<512x1xi32>
    %17 = tpu.iota {dimensions = array<i32: 1>} : vector<512x32xi32>
    %18 = vector.broadcast %16 : vector<512x1xi32> to vector<512x32xi32>
    %19 = arith.cmpi eq, %18, %17 : vector<512x32xi32>
    %20 = arith.extui %19 : vector<512x32xi1> to vector<512x32xi32>
    %21 = arith.sitofp %20 : vector<512x32xi32> to vector<512x32xf32>
    %c0_5 = arith.constant 0 : index
    %c0_6 = arith.constant 0 : index
    %22 = vector.load %arg3[%c0_5, %c0_6] : memref<32x64xf32, #tpu.memory_space<vmem>>, vector<32x64xf32>
    %cst_7 = arith.constant dense<0.000000e+00> : vector<512x64xf32>
    %23 = tpu.matmul %21, %22, %cst_7 {dimension_numbers = #tpu.dot_dimension_numbers<[1], [0], [0], [1], [0, 0, 1, 1], [], []>} : vector<512x32xf32>, vector<32x64xf32>, vector<512x64xf32> -> vector<512x64xf32>
    %c0_8 = arith.constant 0 : index
    %c2 = arith.constant 2 : index
    %24 = vector.load %arg1[%c0_8, %c2] : memref<512x3xi32, #tpu.memory_space<vmem>>, vector<512x1xi32>
    %c0_i32_9 = arith.constant 0 : i32
    %c7_i32 = arith.constant 7 : i32
    %25 = vector.broadcast %c0_i32_9 : i32 to vector<512x1xi32>
    %26 = arith.maxsi %25, %24 : vector<512x1xi32>
    %27 = vector.broadcast %c7_i32 : i32 to vector<512x1xi32>
    %28 = arith.minsi %27, %26 : vector<512x1xi32>
    %29 = tpu.iota {dimensions = array<i32: 1>} : vector<512x8xi32>
    %30 = vector.broadcast %28 : vector<512x1xi32> to vector<512x8xi32>
    %31 = arith.cmpi eq, %30, %29 : vector<512x8xi32>
    %32 = arith.extui %31 : vector<512x8xi1> to vector<512x8xi32>
    %33 = arith.sitofp %32 : vector<512x8xi32> to vector<512x8xf32>
    %c0_10 = arith.constant 0 : index
    %c0_11 = arith.constant 0 : index
    %34 = vector.load %arg4[%c0_10, %c0_11] : memref<8x16xf32, #tpu.memory_space<vmem>>, vector<8x16xf32>
    %cst_12 = arith.constant dense<0.000000e+00> : vector<512x16xf32>
    %35 = tpu.matmul %33, %34, %cst_12 {dimension_numbers = #tpu.dot_dimension_numbers<[1], [0], [0], [1], [0, 0, 1, 1], [], []>} : vector<512x8xf32>, vector<8x16xf32>, vector<512x16xf32> -> vector<512x16xf32>
    %cst_13 = arith.constant 0.000000e+00 : f32
    %36 = vector.broadcast %cst_13 : f32 to vector<512x16xf32>
    %37 = tpu.concatenate %11, %23, %35, %36 in 1 : vector<512x32xf32>, vector<512x64xf32>, vector<512x16xf32>, vector<512x16xf32> -> vector<512x128xf32>
    %c0_14 = arith.constant 0 : index
    %c0_15 = arith.constant 0 : index
    %38 = vector.load %arg5[%c0_14, %c0_15] : memref<512x128xf32, #tpu.memory_space<vmem>>, vector<512x128xf32>
    tpu.vector_store %arg5[%c0_14, %c0_15], %37 {strides = array<i32>} : memref<512x128xf32, #tpu.memory_space<vmem>>, vector<512x128xf32>,
    return
  }
  func.func @transform_0(%arg0: i32) -> (i32, i32) {
    %c0_i32 = arith.constant 0 : i32
    %c0_i32_0 = arith.constant 0 : i32
    return %arg0, %c0_i32 : i32, i32
  }
  func.func @transform_1(%arg0: i32) -> (i32, i32) {
    %c0_i32 = arith.constant 0 : i32
    %c0_i32_0 = arith.constant 0 : i32
    %c0_i32_1 = arith.constant 0 : i32
    return %c0_i32, %c0_i32_0 : i32, i32
  }
  func.func @transform_2(%arg0: i32) -> (i32, i32) {
    %c0_i32 = arith.constant 0 : i32
    %c0_i32_0 = arith.constant 0 : i32
    %c0_i32_1 = arith.constant 0 : i32
    return %c0_i32, %c0_i32_0 : i32, i32
  }
  func.func @transform_3(%arg0: i32) -> (i32, i32) {
    %c0_i32 = arith.constant 0 : i32
    %c0_i32_0 = arith.constant 0 : i32
    %c0_i32_1 = arith.constant 0 : i32
    return %c0_i32, %c0_i32_0 : i32, i32
  }
  func.func @transform_4(%arg0: i32) -> (i32, i32) {
    %c0_i32 = arith.constant 0 : i32
    %c0_i32_0 = arith.constant 0 : i32
    return %arg0, %c0_i32 : i32, i32
  }
}

</mosaic_0001>

<llo_original>
// kernel: lookup.1
$region0: #{lookup.1}
  #allocation0 [shape = 'u32[]', space=smem, size = 0x4, offset = 0x4, fixed_abs, tag = 'smem constant byte address 0x4 - core index']
  #allocation1 [shape = 'u32[72,128]{1,0:T(1,128)}', space=vmem, size = 0x9000, scoped, tag = 'internal scratch']
  %s0 = inlined_call_operand.vmem [shape: s32[1024,3], index: 0, kind: input, shape index: {}]
  %s1 = inlined_call_operand.vmem [shape: f32[16,32], index: 1, kind: input, shape index: {}]
  %s2 = inlined_call_operand.vmem [shape: f32[32,64], index: 2, kind: input, shape index: {}]
  %s3 = inlined_call_operand.vmem [shape: f32[8,16], index: 3, kind: input, shape index: {}]
  %s4 = inlined_call_operand.vmem [shape: f32[1024,128], index: 4, kind: output, shape index: {}]
  %s5 = sld [smem:[#allocation0]]
  $region49: #{lookup.1} parent=0
    _
  %s7 = ssub.s32 1, %s5
  %s8 = scalar_select 0, %s7, %s5
  loop: start=0, step=1, limit=4
  $region2: #{lookup.1} parent=0 // loop_pre_header
    _
  $region3: #{lookup.1} parent=0 // loop_header
    %s10 = sphi 0, %s14
    %p11 = scmp.ge.s32.totalorder %s10, 4
    %s20 = sphi 0, %s22
    %s23 = sphi 0, %s20
    %s24 = sphi 0, %s23
    %s40 = sphi 0, %s24
    %s44 = sphi 0, %s44
    %s46 = sphi 0, %s44
    %s47 = sphi 0, %s46
    %s61 = sphi 0, %s47
    %s65 = sphi 0, %s65
    %s67 = sphi 0, %s65
    %s68 = sphi 0, %s67
    %s82 = sphi 0, %s68
    %s86 = sphi 0, %s86
    %s88 = sphi 0, %s86
    %s89 = sphi 0, %s88
    %s103 = sphi 0, %s89
    %s109 = sphi 0, %s111
    %s112 = sphi 0, %s109
    %s113 = sphi 0, %s112
    %s129 = sphi 0, %s113
  $region4: #{lookup.1} parent=0 // loop_header_branch
    %13 = sbr.rel (%p11) target = $region8
  $region5: #{lookup.1} parent=0 // loop_body
    %s15 = ssub.s32 %s10, 1
    %s16 = ssub.s32 %s10, 2
    %s17 = sadd.s32 %s10, 1
    %s18 = ssub.s32 %s10, %s17
    %p19 = scmp.eq.s32.totalorder %s18, 0
    %s21 = sadd.s32 %s20, 1
    %s22 = scalar_select %p19, %s20, %s21
    %p25 = pneg %p19
    %p26 = scmp.eq.s32.totalorder %s10, 1
    %p27 = por %p25, %p26
    %p28 = scmp.ne.s32.totalorder %s20, %s23
    %p29 = scmp.eq.s32.totalorder %s10, 0
    %p30 = por %p28, %p29
    %p31 = scmp.ne.s32.totalorder %s20, %s23
    %p32 = scmp.eq.s32.totalorder %s15, 1
    %p33 = por %p31, %p32
    %p34 = scmp.ne.s32.totalorder %s23, %s24
    %p35 = scmp.eq.s32.totalorder %s15, 0
    %p36 = por %p34, %p35
    %p37 = scmp.ne.s32.totalorder %s23, %s24
    %p38 = scmp.eq.s32.totalorder %s16, 1
    %p39 = por %p37, %p38
    %p41 = scmp.ne.s32.totalorder %s24, %s40
    %p42 = scmp.eq.s32.totalorder %s16, 0
    %p43 = por %p41, %p42
    %s45 = sadd.s32 %s44, 1
    %p48 = scmp.eq.s32.totalorder %s10, 1
    %p49 = scmp.ne.s32.totalorder %s44, %s46
    %p50 = scmp.eq.s32.totalorder %s10, 0
    %p51 = por %p49, %p50
    %p52 = scmp.ne.s32.totalorder %s44, %s46
    %p53 = scmp.eq.s32.totalorder %s15, 1
    %p54 = por %p52, %p53
    %p55 = scmp.ne.s32.totalorder %s46, %s47
    %p56 = scmp.eq.s32.totalorder %s15, 0
    %p57 = por %p55, %p56
    %p58 = scmp.ne.s32.totalorder %s46, %s47
    %p59 = scmp.eq.s32.totalorder %s16, 1
    %p60 = por %p58, %p59
    %p62 = scmp.ne.s32.totalorder %s47, %s61
    %p63 = scmp.eq.s32.totalorder %s16, 0
    %p64 = por %p62, %p63
    %s66 = sadd.s32 %s65, 1
    %p69 = scmp.eq.s32.totalorder %s10, 1
    %p70 = scmp.ne.s32.totalorder %s65, %s67
    %p71 = scmp.eq.s32.totalorder %s10, 0
    %p72 = por %p70, %p71
    %p73 = scmp.ne.s32.totalorder %s65, %s67
    %p74 = scmp.eq.s32.totalorder %s15, 1
    %p75 = por %p73, %p74
    %p76 = scmp.ne.s32.totalorder %s67, %s68
    %p77 = scmp.eq.s32.totalorder %s15, 0
    %p78 = por %p76, %p77
    %p79 = scmp.ne.s32.totalorder %s67, %s68
    %p80 = scmp.eq.s32.totalorder %s16, 1
    %p81 = por %p79, %p80
    %p83 = scmp.ne.s32.totalorder %s68, %s82
    %p84 = scmp.eq.s32.totalorder %s16, 0
    %p85 = por %p83, %p84
    %s87 = sadd.s32 %s86, 1
    %p90 = scmp.eq.s32.totalorder %s10, 1
    %p91 = scmp.ne.s32.totalorder %s86, %s88
    %p92 = scmp.eq.s32.totalorder %s10, 0
    %p93 = por %p91, %p92
    %p94 = scmp.ne.s32.totalorder %s86, %s88
    %p95 = scmp.eq.s32.totalorder %s15, 1
    %p96 = por %p94, %p95
    %p97 = scmp.ne.s32.totalorder %s88, %s89
    %p98 = scmp.eq.s32.totalorder %s15, 0
    %p99 = por %p97, %p98
    %p100 = scmp.ne.s32.totalorder %s88, %s89
    %p101 = scmp.eq.s32.totalorder %s16, 1
    %p102 = por %p100, %p101
    %p104 = scmp.ne.s32.totalorder %s89, %s103
    %p105 = scmp.eq.s32.totalorder %s16, 0
    %p106 = por %p104, %p105
    %s107 = ssub.s32 %s10, %s17
    %p108 = scmp.eq.s32.totalorder %s107, 0
    %s110 = sadd.s32 %s109, 1
    %s111 = scalar_select %p108, %s109, %s110
    %p114 = pneg %p108
    %p115 = scmp.eq.s32.totalorder %s10, 1
    %p116 = por %p114, %p115
    %p117 = scmp.ne.s32.totalorder %s109, %s112
    %p118 = scmp.eq.s32.totalorder %s10, 0
    %p119 = por %p117, %p118
    %p120 = scmp.ne.s32.totalorder %s109, %s112
    %p121 = scmp.eq.s32.totalorder %s15, 1
    %p122 = por %p120, %p121
    %p123 = scmp.ne.s32.totalorder %s112, %s113
    %p124 = scmp.eq.s32.totalorder %s15, 0
    %p125 = por %p123, %p124
    %p126 = scmp.ne.s32.totalorder %s112, %s113
    %p127 = scmp.eq.s32.totalorder %s16, 1
    %p128 = por %p126, %p127
    %p130 = scmp.ne.s32.totalorder %s113, %s129
    %p131 = scmp.eq.s32.totalorder %s16, 0
    %p132 = por %p130, %p131
    %p133 = scmp.le.s32.totalorder 1, %s10
    %p134 = scmp.lt.s32.totalorder %s10, 3
    %p135 = pnand %p133, %p134
    %p136 = pneg %p135
    // Predicated region
    $region9: #{lookup.1} parent=5 // pred_check
      _
    $region10: #{lookup.1} parent=5 // pred_check_branch
      %138 = sbr.rel (%p135) target = $region12
    $region11: #{lookup.1} parent=5 // pred_region
      %s139 = ssub.s32 %s10, 1
      // Predicated region
      $region13: #{lookup.1} parent=11 // pred_check
        %p140 = pneg %p57
      $region14: #{lookup.1} parent=11 // pred_check_branch
        %142 = sbr.rel (%p140) target = $region16
      $region15: #{lookup.1} parent=11 // pred_region
        _
      $region16: #{lookup.1} parent=11 // pred_fallthru
        _
      // Predicated region
      $region17: #{lookup.1} parent=11 // pred_check
        %p143 = pneg %p78
      $region18: #{lookup.1} parent=11 // pred_check_branch
        %145 = sbr.rel (%p143) target = $region20
      $region19: #{lookup.1} parent=11 // pred_region
        _
      $region20: #{lookup.1} parent=11 // pred_fallthru
        _
      // Predicated region
      $region21: #{lookup.1} parent=11 // pred_check
        %p146 = pneg %p99
      $region22: #{lookup.1} parent=11 // pred_check_branch
        %148 = sbr.rel (%p146) target = $region24
      $region23: #{lookup.1} parent=11 // pred_region
        _
      $region24: #{lookup.1} parent=11 // pred_fallthru
        _
    $region12: #{lookup.1} parent=5 // pred_fallthru
      _
    %p149 = scmp.lt.s32.totalorder %s10, 2
    // Predicated region
    $region25: #{lookup.1} parent=5 // pred_check
      %p150 = pneg %p149
    $region26: #{lookup.1} parent=5 // pred_check_branch
      %152 = sbr.rel (%p150) target = $region28
    $region27: #{lookup.1} parent=5 // pred_region
      // Predicated region
      $region29: #{lookup.1} parent=27 // pred_check
        %p153 = pneg %p30
      $region30: #{lookup.1} parent=27 // pred_check_branch
        %155 = sbr.rel (%p153) target = $region32
      $region31: #{lookup.1} parent=27 // pred_region
        %s156 = smul.u32 64, %s10
        %p157 = scmp.lt.s32.totalorder %s156, 127
        %s158 = scalar_select %p157, %s156, 127
        %s159 = smul.addr %s158, 8
        %s160 = scalar_lea.vmem %s0, %s159
        %s161 = smul.u32 64, %s10
      $region32: #{lookup.1} parent=27 // pred_fallthru
        _
    $region28: #{lookup.1} parent=5 // pred_fallthru
      _
    %p162 = scmp.le.s32.totalorder 1, %s10
    %p163 = scmp.lt.s32.totalorder %s10, 3
    %p164 = pnand %p162, %p163
    %p165 = pneg %p164
    // Predicated region
    $region33: #{lookup.1} parent=5 // pred_check
      _
    $region34: #{lookup.1} parent=5 // pred_check_branch
      %167 = sbr.rel (%p164) target = $region36
    $region35: #{lookup.1} parent=5 // pred_region
      %s168 = ssub.s32 %s10, 1
      %s169 = smul.u32 64, %s15
      %p170 = scmp.lt.s32.totalorder %s169, 127
      %s171 = scalar_select %p170, %s169, 127
      %s172 = smul.addr %s171, 8
      %s173 = scalar_lea.vmem %s0, %s172
      %p174 = pneg %p36
      %p175 = pneg %p33
      %p176 = pneg %p57
      %p177 = pneg %p54
      %p178 = pneg %p78
      %p179 = pneg %p75
      %p180 = pneg %p99
      %p181 = pneg %p96
      %p182 = pneg %p125
      %p183 = pneg %p122
      %s184 = smul.u32 64, %s15
      %p185 = scmp.lt.s32.totalorder %s184, 127
      %s186 = scalar_select %p185, %s184, 127
      %s187 = smul.addr %s186, 8
      %s188 = scalar_lea.vmem %s4, %s187
      %s189 = smul.u32 64, %s15
      %p190 = scmp.lt.s32.totalorder %s189, 127
      %s191 = scalar_select %p190, %s189, 127
      %s192 = smul.addr %s191, 8
      %s193 = scalar_lea.vmem %s0, %s192
      %s194 = smul.u32 64, %s15
      %s195 = smul.u32 64, %s15
      %p196 = scmp.lt.s32.totalorder %s195, 127
      %s197 = scalar_select %p196, %s195, 127
      %s198 = smul.addr %s197, 8
      %s199 = scalar_lea.vmem %s4, %s198
      %s200 = smul.u32 64, %s15
      %v201 = vld [vmem:[%s193] sm:$0xff]
      %v202 = vld [vmem:[%s193 + $0x8] sm:$0xff]
      %v203 = vld [vmem:[%s193 + $0x10] sm:$0xff]
      %v204 = vld [vmem:[%s193 + $0x18] sm:$0xff]
      %v205 = vld [vmem:[%s193 + $0x20] sm:$0xff]
      %v206 = vld [vmem:[%s193 + $0x28] sm:$0xff]
      %v207 = vld [vmem:[%s193 + $0x30] sm:$0xff]
      %v208 = vld [vmem:[%s193 + $0x38] sm:$0xff]
      %v209 = vld [vmem:[%s193 + $0x40] sm:$0xff]
      %v210 = vld [vmem:[%s193 + $0x48] sm:$0xff]
      %v211 = vld [vmem:[%s193 + $0x50] sm:$0xff]
      %v212 = vld [vmem:[%s193 + $0x58] sm:$0xff]
      %v213 = vld [vmem:[%s193 + $0x60] sm:$0xff]
      %v214 = vld [vmem:[%s193 + $0x68] sm:$0xff]
      %v215 = vld [vmem:[%s193 + $0x70] sm:$0xff]
      %v216 = vld [vmem:[%s193 + $0x78] sm:$0xff]
      %v217 = vld [vmem:[%s193 + $0x80] sm:$0xff]
      %v218 = vld [vmem:[%s193 + $0x88] sm:$0xff]
      %v219 = vld [vmem:[%s193 + $0x90] sm:$0xff]
      %v220 = vld [vmem:[%s193 + $0x98] sm:$0xff]
      %v221 = vld [vmem:[%s193 + $0xa0] sm:$0xff]
      %v222 = vld [vmem:[%s193 + $0xa8] sm:$0xff]
      %v223 = vld [vmem:[%s193 + $0xb0] sm:$0xff]
      %v224 = vld [vmem:[%s193 + $0xb8] sm:$0xff]
      %v225 = vld [vmem:[%s193 + $0xc0] sm:$0xff]
      %v226 = vld [vmem:[%s193 + $0xc8] sm:$0xff]
      %v227 = vld [vmem:[%s193 + $0xd0] sm:$0xff]
      %v228 = vld [vmem:[%s193 + $0xd8] sm:$0xff]
      %v229 = vld [vmem:[%s193 + $0xe0] sm:$0xff]
      %v230 = vld [vmem:[%s193 + $0xe8] sm:$0xff]
      %v231 = vld [vmem:[%s193 + $0xf0] sm:$0xff]
      %v232 = vld [vmem:[%s193 + $0xf8] sm:$0xff]
      %v233 = vld [vmem:[%s193 + $0x100] sm:$0xff]
      %v234 = vld [vmem:[%s193 + $0x108] sm:$0xff]
      %v235 = vld [vmem:[%s193 + $0x110] sm:$0xff]
      %v236 = vld [vmem:[%s193 + $0x118] sm:$0xff]
      %v237 = vld [vmem:[%s193 + $0x120] sm:$0xff]
      %v238 = vld [vmem:[%s193 + $0x128] sm:$0xff]
      %v239 = vld [vmem:[%s193 + $0x130] sm:$0xff]
      %v240 = vld [vmem:[%s193 + $0x138] sm:$0xff]
      %v241 = vld [vmem:[%s193 + $0x140] sm:$0xff]
      %v242 = vld [vmem:[%s193 + $0x148] sm:$0xff]
      %v243 = vld [vmem:[%s193 + $0x150] sm:$0xff]
      %v244 = vld [vmem:[%s193 + $0x158] sm:$0xff]
      %v245 = vld [vmem:[%s193 + $0x160] sm:$0xff]
      %v246 = vld [vmem:[%s193 + $0x168] sm:$0xff]
      %v247 = vld [vmem:[%s193 + $0x170] sm:$0xff]
      %v248 = vld [vmem:[%s193 + $0x178] sm:$0xff]
      %v249 = vld [vmem:[%s193 + $0x180] sm:$0xff]
      %v250 = vld [vmem:[%s193 + $0x188] sm:$0xff]
      %v251 = vld [vmem:[%s193 + $0x190] sm:$0xff]
      %v252 = vld [vmem:[%s193 + $0x198] sm:$0xff]
      %v253 = vld [vmem:[%s193 + $0x1a0] sm:$0xff]
      %v254 = vld [vmem:[%s193 + $0x1a8] sm:$0xff]
      %v255 = vld [vmem:[%s193 + $0x1b0] sm:$0xff]
      %v256 = vld [vmem:[%s193 + $0x1b8] sm:$0xff]
      %v257 = vld [vmem:[%s193 + $0x1c0] sm:$0xff]
      %v258 = vld [vmem:[%s193 + $0x1c8] sm:$0xff]
      %v259 = vld [vmem:[%s193 + $0x1d0] sm:$0xff]
      %v260 = vld [vmem:[%s193 + $0x1d8] sm:$0xff]
      %v261 = vld [vmem:[%s193 + $0x1e0] sm:$0xff]
      %v262 = vld [vmem:[%s193 + $0x1e8] sm:$0xff]
      %v263 = vld [vmem:[%s193 + $0x1f0] sm:$0xff]
      %v264 = vld [vmem:[%s193 + $0x1f8] sm:$0xff]
      %vm265 = vcmp.gt.s32.totalorder %v201, 0
      %v266 = vsel %vm265, %v201, 0
      %vm267 = vcmp.gt.s32.totalorder %v202, 0
      %v268 = vsel %vm267, %v202, 0
      %vm269 = vcmp.gt.s32.totalorder %v203, 0
      %v270 = vsel %vm269, %v203, 0
      %vm271 = vcmp.gt.s32.totalorder %v204, 0
      %v272 = vsel %vm271, %v204, 0
      %vm273 = vcmp.gt.s32.totalorder %v205, 0
      %v274 = vsel %vm273, %v205, 0
      %vm275 = vcmp.gt.s32.totalorder %v206, 0
      %v276 = vsel %vm275, %v206, 0
      %vm277 = vcmp.gt.s32.totalorder %v207, 0
      %v278 = vsel %vm277, %v207, 0
      %vm279 = vcmp.gt.s32.totalorder %v208, 0
      %v280 = vsel %vm279, %v208, 0
      %vm281 = vcmp.gt.s32.totalorder %v209, 0
      %v282 = vsel %vm281, %v209, 0
      %vm283 = vcmp.gt.s32.totalorder %v210, 0
      %v284 = vsel %vm283, %v210, 0
      %vm285 = vcmp.gt.s32.totalorder %v211, 0
      %v286 = vsel %vm285, %v211, 0
      %vm287 = vcmp.gt.s32.totalorder %v212, 0
      %v288 = vsel %vm287, %v212, 0
      %vm289 = vcmp.gt.s32.totalorder %v213, 0
      %v290 = vsel %vm289, %v213, 0
      %vm291 = vcmp.gt.s32.totalorder %v214, 0
      %v292 = vsel %vm291, %v214, 0
      %vm293 = vcmp.gt.s32.totalorder %v215, 0
      %v294 = vsel %vm293, %v215, 0
      %vm295 = vcmp.gt.s32.totalorder %v216, 0
      %v296 = vsel %vm295, %v216, 0
      %vm297 = vcmp.gt.s32.totalorder %v217, 0
      %v298 = vsel %vm297, %v217, 0
      %vm299 = vcmp.gt.s32.totalorder %v218, 0
      %v300 = vsel %vm299, %v218, 0
      %vm301 = vcmp.gt.s32.totalorder %v219, 0
      %v302 = vsel %vm301, %v219, 0
      %vm303 = vcmp.gt.s32.totalorder %v220, 0
      %v304 = vsel %vm303, %v220, 0
      %vm305 = vcmp.gt.s32.totalorder %v221, 0
      %v306 = vsel %vm305, %v221, 0
      %vm307 = vcmp.gt.s32.totalorder %v222, 0
      %v308 = vsel %vm307, %v222, 0
      %vm309 = vcmp.gt.s32.totalorder %v223, 0
      %v310 = vsel %vm309, %v223, 0
      %vm311 = vcmp.gt.s32.totalorder %v224, 0
      %v312 = vsel %vm311, %v224, 0
      %vm313 = vcmp.gt.s32.totalorder %v225, 0
      %v314 = vsel %vm313, %v225, 0
      %vm315 = vcmp.gt.s32.totalorder %v226, 0
      %v316 = vsel %vm315, %v226, 0
      %vm317 = vcmp.gt.s32.totalorder %v227, 0
      %v318 = vsel %vm317, %v227, 0
      %vm319 = vcmp.gt.s32.totalorder %v228, 0
      %v320 = vsel %vm319, %v228, 0
      %vm321 = vcmp.gt.s32.totalorder %v229, 0
      %v322 = vsel %vm321, %v229, 0
      %vm323 = vcmp.gt.s32.totalorder %v230, 0
      %v324 = vsel %vm323, %v230, 0
      %vm325 = vcmp.gt.s32.totalorder %v231, 0
      %v326 = vsel %vm325, %v231, 0
      %vm327 = vcmp.gt.s32.totalorder %v232, 0
      %v328 = vsel %vm327, %v232, 0
      %vm329 = vcmp.gt.s32.totalorder %v233, 0
      %v330 = vsel %vm329, %v233, 0
      %vm331 = vcmp.gt.s32.totalorder %v234, 0
      %v332 = vsel %vm331, %v234, 0
      %vm333 = vcmp.gt.s32.totalorder %v235, 0
      %v334 = vsel %vm333, %v235, 0
      %vm335 = vcmp.gt.s32.totalorder %v236, 0
      %v336 = vsel %vm335, %v236, 0
      %vm337 = vcmp.gt.s32.totalorder %v237, 0
      %v338 = vsel %vm337, %v237, 0
      %vm339 = vcmp.gt.s32.totalorder %v238, 0
      %v340 = vsel %vm339, %v238, 0
      %vm341 = vcmp.gt.s32.totalorder %v239, 0
      %v342 = vsel %vm341, %v239, 0
      %vm343 = vcmp.gt.s32.totalorder %v240, 0
      %v344 = vsel %vm343, %v240, 0
      %vm345 = vcmp.gt.s32.totalorder %v241, 0
      %v346 = vsel %vm345, %v241, 0
      %vm347 = vcmp.gt.s32.totalorder %v242, 0
      %v348 = vsel %vm347, %v242, 0
      %vm349 = vcmp.gt.s32.totalorder %v243, 0
      %v350 = vsel %vm349, %v243, 0
      %vm351 = vcmp.gt.s32.totalorder %v244, 0
      %v352 = vsel %vm351, %v244, 0
      %vm353 = vcmp.gt.s32.totalorder %v245, 0
      %v354 = vsel %vm353, %v245, 0
      %vm355 = vcmp.gt.s32.totalorder %v246, 0
      %v356 = vsel %vm355, %v246, 0
      %vm357 = vcmp.gt.s32.totalorder %v247, 0
      %v358 = vsel %vm357, %v247, 0
      %vm359 = vcmp.gt.s32.totalorder %v248, 0
      %v360 = vsel %vm359, %v248, 0
      %vm361 = vcmp.gt.s32.totalorder %v249, 0
      %v362 = vsel %vm361, %v249, 0
      %vm363 = vcmp.gt.s32.totalorder %v250, 0
      %v364 = vsel %vm363, %v250, 0
      %vm365 = vcmp.gt.s32.totalorder %v251, 0
      %v366 = vsel %vm365, %v251, 0
      %vm367 = vcmp.gt.s32.totalorder %v252, 0
      %v368 = vsel %vm367, %v252, 0
      %vm369 = vcmp.gt.s32.totalorder %v253, 0
      %v370 = vsel %vm369, %v253, 0
      %vm371 = vcmp.gt.s32.totalorder %v254, 0
      %v372 = vsel %vm371, %v254, 0
      %vm373 = vcmp.gt.s32.totalorder %v255, 0
      %v374 = vsel %vm373, %v255, 0
      %vm375 = vcmp.gt.s32.totalorder %v256, 0
      %v376 = vsel %vm375, %v256, 0
      %vm377 = vcmp.gt.s32.totalorder %v257, 0
      %v378 = vsel %vm377, %v257, 0
      %vm379 = vcmp.gt.s32.totalorder %v258, 0
      %v380 = vsel %vm379, %v258, 0
      %vm381 = vcmp.gt.s32.totalorder %v259, 0
      %v382 = vsel %vm381, %v259, 0
      %vm383 = vcmp.gt.s32.totalorder %v260, 0
      %v384 = vsel %vm383, %v260, 0
      %vm385 = vcmp.gt.s32.totalorder %v261, 0
      %v386 = vsel %vm385, %v261, 0
      %vm387 = vcmp.gt.s32.totalorder %v262, 0
      %v388 = vsel %vm387, %v262, 0
      %vm389 = vcmp.gt.s32.totalorder %v263, 0
      %v390 = vsel %vm389, %v263, 0
      %vm391 = vcmp.gt.s32.totalorder %v264, 0
      %v392 = vsel %vm391, %v264, 0
      %vm393 = vcmp.lt.s32.totalorder %v266, 15
      %v394 = vsel %vm393, %v266, 15
      %vm395 = vcmp.lt.s32.totalorder %v268, 15
      %v396 = vsel %vm395, %v268, 15
      %vm397 = vcmp.lt.s32.totalorder %v270, 15
      %v398 = vsel %vm397, %v270, 15
      %vm399 = vcmp.lt.s32.totalorder %v272, 15
      %v400 = vsel %vm399, %v272, 15
      %vm401 = vcmp.lt.s32.totalorder %v274, 15
      %v402 = vsel %vm401, %v274, 15
      %vm403 = vcmp.lt.s32.totalorder %v276, 15
      %v404 = vsel %vm403, %v276, 15
      %vm405 = vcmp.lt.s32.totalorder %v278, 15
      %v406 = vsel %vm405, %v278, 15
      %vm407 = vcmp.lt.s32.totalorder %v280, 15
      %v408 = vsel %vm407, %v280, 15
      %vm409 = vcmp.lt.s32.totalorder %v282, 15
      %v410 = vsel %vm409, %v282, 15
      %vm411 = vcmp.lt.s32.totalorder %v284, 15
      %v412 = vsel %vm411, %v284, 15
      %vm413 = vcmp.lt.s32.totalorder %v286, 15
      %v414 = vsel %vm413, %v286, 15
      %vm415 = vcmp.lt.s32.totalorder %v288, 15
      %v416 = vsel %vm415, %v288, 15
      %vm417 = vcmp.lt.s32.totalorder %v290, 15
      %v418 = vsel %vm417, %v290, 15
      %vm419 = vcmp.lt.s32.totalorder %v292, 15
      %v420 = vsel %vm419, %v292, 15
      %vm421 = vcmp.lt.s32.totalorder %v294, 15
      %v422 = vsel %vm421, %v294, 15
      %vm423 = vcmp.lt.s32.totalorder %v296, 15
      %v424 = vsel %vm423, %v296, 15
      %vm425 = vcmp.lt.s32.totalorder %v298, 15
      %v426 = vsel %vm425, %v298, 15
      %vm427 = vcmp.lt.s32.totalorder %v300, 15
      %v428 = vsel %vm427, %v300, 15
      %vm429 = vcmp.lt.s32.totalorder %v302, 15
      %v430 = vsel %vm429, %v302, 15
      %vm431 = vcmp.lt.s32.totalorder %v304, 15
      %v432 = vsel %vm431, %v304, 15
      %vm433 = vcmp.lt.s32.totalorder %v306, 15
      %v434 = vsel %vm433, %v306, 15
      %vm435 = vcmp.lt.s32.totalorder %v308, 15
      %v436 = vsel %vm435, %v308, 15
      %vm437 = vcmp.lt.s32.totalorder %v310, 15
      %v438 = vsel %vm437, %v310, 15
      %vm439 = vcmp.lt.s32.totalorder %v312, 15
      %v440 = vsel %vm439, %v312, 15
      %vm441 = vcmp.lt.s32.totalorder %v314, 15
      %v442 = vsel %vm441, %v314, 15
      %vm443 = vcmp.lt.s32.totalorder %v316, 15
      %v444 = vsel %vm443, %v316, 15
      %vm445 = vcmp.lt.s32.totalorder %v318, 15
      %v446 = vsel %vm445, %v318, 15
      %vm447 = vcmp.lt.s32.totalorder %v320, 15
      %v448 = vsel %vm447, %v320, 15
      %vm449 = vcmp.lt.s32.totalorder %v322, 15
      %v450 = vsel %vm449, %v322, 15
      %vm451 = vcmp.lt.s32.totalorder %v324, 15
      %v452 = vsel %vm451, %v324, 15
      %vm453 = vcmp.lt.s32.totalorder %v326, 15
      %v454 = vsel %vm453, %v326, 15
      %vm455 = vcmp.lt.s32.totalorder %v328, 15
      %v456 = vsel %vm455, %v328, 15
      %vm457 = vcmp.lt.s32.totalorder %v330, 15
      %v458 = vsel %vm457, %v330, 15
      %vm459 = vcmp.lt.s32.totalorder %v332, 15
      %v460 = vsel %vm459, %v332, 15
      %vm461 = vcmp.lt.s32.totalorder %v334, 15
      %v462 = vsel %vm461, %v334, 15
      %vm463 = vcmp.lt.s32.totalorder %v336, 15
      %v464 = vsel %vm463, %v336, 15
      %vm465 = vcmp.lt.s32.totalorder %v338, 15
      %v466 = vsel %vm465, %v338, 15
      %vm467 = vcmp.lt.s32.totalorder %v340, 15
      %v468 = vsel %vm467, %v340, 15
      %vm469 = vcmp.lt.s32.totalorder %v342, 15
      %v470 = vsel %vm469, %v342, 15
      %vm471 = vcmp.lt.s32.totalorder %v344, 15
      %v472 = vsel %vm471, %v344, 15
      %vm473 = vcmp.lt.s32.totalorder %v346, 15
      %v474 = vsel %vm473, %v346, 15
      %vm475 = vcmp.lt.s32.totalorder %v348, 15
      %v476 = vsel %vm475, %v348, 15
      %vm477 = vcmp.lt.s32.totalorder %v350, 15
      %v478 = vsel %vm477, %v350, 15
      %vm479 = vcmp.lt.s32.totalorder %v352, 15
      %v480 = vsel %vm479, %v352, 15
      %vm481 = vcmp.lt.s32.totalorder %v354, 15
      %v482 = vsel %vm481, %v354, 15
      %vm483 = vcmp.lt.s32.totalorder %v356, 15
      %v484 = vsel %vm483, %v356, 15
      %vm485 = vcmp.lt.s32.totalorder %v358, 15
      %v486 = vsel %vm485, %v358, 15
      %vm487 = vcmp.lt.s32.totalorder %v360, 15
      %v488 = vsel %vm487, %v360, 15
      %vm489 = vcmp.lt.s32.totalorder %v362, 15
      %v490 = vsel %vm489, %v362, 15
      %vm491 = vcmp.lt.s32.totalorder %v364, 15
      %v492 = vsel %vm491, %v364, 15
      %vm493 = vcmp.lt.s32.totalorder %v366, 15
      %v494 = vsel %vm493, %v366, 15
      %vm495 = vcmp.lt.s32.totalorder %v368, 15
      %v496 = vsel %vm495, %v368, 15
      %vm497 = vcmp.lt.s32.totalorder %v370, 15
      %v498 = vsel %vm497, %v370, 15
      %vm499 = vcmp.lt.s32.totalorder %v372, 15
      %v500 = vsel %vm499, %v372, 15
      %vm501 = vcmp.lt.s32.totalorder %v374, 15
      %v502 = vsel %vm501, %v374, 15
      %vm503 = vcmp.lt.s32.totalorder %v376, 15
      %v504 = vsel %vm503, %v376, 15
      %vm505 = vcmp.lt.s32.totalorder %v378, 15
      %v506 = vsel %vm505, %v378, 15
      %vm507 = vcmp.lt.s32.totalorder %v380, 15
      %v508 = vsel %vm507, %v380, 15
      %vm509 = vcmp.lt.s32.totalorder %v382, 15
      %v510 = vsel %vm509, %v382, 15
      %vm511 = vcmp.lt.s32.totalorder %v384, 15
      %v512 = vsel %vm511, %v384, 15
      %vm513 = vcmp.lt.s32.totalorder %v386, 15
      %v514 = vsel %vm513, %v386, 15
      %vm515 = vcmp.lt.s32.totalorder %v388, 15
      %v516 = vsel %vm515, %v388, 15
      %vm517 = vcmp.lt.s32.totalorder %v390, 15
      %v518 = vsel %vm517, %v390, 15
      %vm519 = vcmp.lt.s32.totalorder %v392, 15
      %v520 = vsel %vm519, %v392, 15
      %v521 = vlaneseq
      %v522 = vand.u32 %v521, 127
      %523 = vset.pattern.permute.xlu0 0
      %524 = vperm.xlu0 %523, %v394
      %v525 = vpop.permute.xlu0 %524
      %526 = vset.pattern.permute.xlu0 0
      %527 = vperm.xlu0 %526, %v396
      %v528 = vpop.permute.xlu0 %527
      %529 = vset.pattern.permute.xlu0 0
      %530 = vperm.xlu0 %529, %v398
      %v531 = vpop.permute.xlu0 %530
      %532 = vset.pattern.permute.xlu0 0
      %533 = vperm.xlu0 %532, %v400
      %v534 = vpop.permute.xlu0 %533
      %535 = vset.pattern.permute.xlu0 0
      %536 = vperm.xlu0 %535, %v402
      %v537 = vpop.permute.xlu0 %536
      %538 = vset.pattern.permute.xlu0 0
      %539 = vperm.xlu0 %538, %v404
      %v540 = vpop.permute.xlu0 %539
      %541 = vset.pattern.permute.xlu0 0
      %542 = vperm.xlu0 %541, %v406
      %v543 = vpop.permute.xlu0 %542
      %544 = vset.pattern.permute.xlu0 0
      %545 = vperm.xlu0 %544, %v408
      %v546 = vpop.permute.xlu0 %545
      %547 = vset.pattern.permute.xlu0 0
      %548 = vperm.xlu0 %547, %v410
      %v549 = vpop.permute.xlu0 %548
      %550 = vset.pattern.permute.xlu0 0
      %551 = vperm.xlu0 %550, %v412
      %v552 = vpop.permute.xlu0 %551
      %553 = vset.pattern.permute.xlu0 0
      %554 = vperm.xlu0 %553, %v414
      %v555 = vpop.permute.xlu0 %554
      %556 = vset.pattern.permute.xlu0 0
      %557 = vperm.xlu0 %556, %v416
      %v558 = vpop.permute.xlu0 %557
      %559 = vset.pattern.permute.xlu0 0
      %560 = vperm.xlu0 %559, %v418
      %v561 = vpop.permute.xlu0 %560
      %562 = vset.pattern.permute.xlu0 0
      %563 = vperm.xlu0 %562, %v420
      %v564 = vpop.permute.xlu0 %563
      %565 = vset.pattern.permute.xlu0 0
      %566 = vperm.xlu0 %565, %v422
      %v567 = vpop.permute.xlu0 %566
      %568 = vset.pattern.permute.xlu0 0
      %569 = vperm.xlu0 %568, %v424
      %v570 = vpop.permute.xlu0 %569
      %571 = vset.pattern.permute.xlu0 0
      %572 = vperm.xlu0 %571, %v426
      %v573 = vpop.permute.xlu0 %572
      %574 = vset.pattern.permute.xlu0 0
      %575 = vperm.xlu0 %574, %v428
      %v576 = vpop.permute.xlu0 %575
      %577 = vset.pattern.permute.xlu0 0
      %578 = vperm.xlu0 %577, %v430
      %v579 = vpop.permute.xlu0 %578
      %580 = vset.pattern.permute.xlu0 0
      %581 = vperm.xlu0 %580, %v432
      %v582 = vpop.permute.xlu0 %581
      %583 = vset.pattern.permute.xlu0 0
      %584 = vperm.xlu0 %583, %v434
      %v585 = vpop.permute.xlu0 %584
      %586 = vset.pattern.permute.xlu0 0
      %587 = vperm.xlu0 %586, %v436
      %v588 = vpop.permute.xlu0 %587
      %589 = vset.pattern.permute.xlu0 0
      %590 = vperm.xlu0 %589, %v438
      %v591 = vpop.permute.xlu0 %590
      %592 = vset.pattern.permute.xlu0 0
      %593 = vperm.xlu0 %592, %v440
      %v594 = vpop.permute.xlu0 %593
      %595 = vset.pattern.permute.xlu0 0
      %596 = vperm.xlu0 %595, %v442
      %v597 = vpop.permute.xlu0 %596
      %598 = vset.pattern.permute.xlu0 0
      %599 = vperm.xlu0 %598, %v444
      %v600 = vpop.permute.xlu0 %599
      %601 = vset.pattern.permute.xlu0 0
      %602 = vperm.xlu0 %601, %v446
      %v603 = vpop.permute.xlu0 %602
      %604 = vset.pattern.permute.xlu0 0
      %605 = vperm.xlu0 %604, %v448
      %v606 = vpop.permute.xlu0 %605
      %607 = vset.pattern.permute.xlu0 0
      %608 = vperm.xlu0 %607, %v450
      %v609 = vpop.permute.xlu0 %608
      %610 = vset.pattern.permute.xlu0 0
      %611 = vperm.xlu0 %610, %v452
      %v612 = vpop.permute.xlu0 %611
      %613 = vset.pattern.permute.xlu0 0
      %614 = vperm.xlu0 %613, %v454
      %v615 = vpop.permute.xlu0 %614
      %616 = vset.pattern.permute.xlu0 0
      %617 = vperm.xlu0 %616, %v456
      %v618 = vpop.permute.xlu0 %617
      %619 = vset.pattern.permute.xlu0 0
      %620 = vperm.xlu0 %619, %v458
      %v621 = vpop.permute.xlu0 %620
      %622 = vset.pattern.permute.xlu0 0
      %623 = vperm.xlu0 %622, %v460
      %v624 = vpop.permute.xlu0 %623
      %625 = vset.pattern.permute.xlu0 0
      %626 = vperm.xlu0 %625, %v462
      %v627 = vpop.permute.xlu0 %626
      %628 = vset.pattern.permute.xlu0 0
      %629 = vperm.xlu0 %628, %v464
      %v630 = vpop.permute.xlu0 %629
      %631 = vset.pattern.permute.xlu0 0
      %632 = vperm.xlu0 %631, %v466
      %v633 = vpop.permute.xlu0 %632
      %634 = vset.pattern.permute.xlu0 0
      %635 = vperm.xlu0 %634, %v468
      %v636 = vpop.permute.xlu0 %635
      %637 = vset.pattern.permute.xlu0 0
      %638 = vperm.xlu0 %637, %v470
      %v639 = vpop.permute.xlu0 %638
      %640 = vset.pattern.permute.xlu0 0
      %641 = vperm.xlu0 %640, %v472
      %v642 = vpop.permute.xlu0 %641
      %643 = vset.pattern.permute.xlu0 0
      %644 = vperm.xlu0 %643, %v474
      %v645 = vpop.permute.xlu0 %644
      %646 = vset.pattern.permute.xlu0 0
      %647 = vperm.xlu0 %646, %v476
      %v648 = vpop.permute.xlu0 %647
      %649 = vset.pattern.permute.xlu0 0
      %650 = vperm.xlu0 %649, %v478
      %v651 = vpop.permute.xlu0 %650
      %652 = vset.pattern.permute.xlu0 0
      %653 = vperm.xlu0 %652, %v480
      %v654 = vpop.permute.xlu0 %653
      %655 = vset.pattern.permute.xlu0 0
      %656 = vperm.xlu0 %655, %v482
      %v657 = vpop.permute.xlu0 %656
      %658 = vset.pattern.permute.xlu0 0
      %659 = vperm.xlu0 %658, %v484
      %v660 = vpop.permute.xlu0 %659
      %661 = vset.pattern.permute.xlu0 0
      %662 = vperm.xlu0 %661, %v486
      %v663 = vpop.permute.xlu0 %662
      %664 = vset.pattern.permute.xlu0 0
      %665 = vperm.xlu0 %664, %v488
      %v666 = vpop.permute.xlu0 %665
      %667 = vset.pattern.permute.xlu0 0
      %668 = vperm.xlu0 %667, %v490
      %v669 = vpop.permute.xlu0 %668
      %670 = vset.pattern.permute.xlu0 0
      %671 = vperm.xlu0 %670, %v492
      %v672 = vpop.permute.xlu0 %671
      %673 = vset.pattern.permute.xlu0 0
      %674 = vperm.xlu0 %673, %v494
      %v675 = vpop.permute.xlu0 %674
      %676 = vset.pattern.permute.xlu0 0
      %677 = vperm.xlu0 %676, %v496
      %v678 = vpop.permute.xlu0 %677
      %679 = vset.pattern.permute.xlu0 0
      %680 = vperm.xlu0 %679, %v498
      %v681 = vpop.permute.xlu0 %680
      %682 = vset.pattern.permute.xlu0 0
      %683 = vperm.xlu0 %682, %v500
      %v684 = vpop.permute.xlu0 %683
      %685 = vset.pattern.permute.xlu0 0
      %686 = vperm.xlu0 %685, %v502
      %v687 = vpop.permute.xlu0 %686
      %688 = vset.pattern.permute.xlu0 0
      %689 = vperm.xlu0 %688, %v504
      %v690 = vpop.permute.xlu0 %689
      %691 = vset.pattern.permute.xlu0 0
      %692 = vperm.xlu0 %691, %v506
      %v693 = vpop.permute.xlu0 %692
      %694 = vset.pattern.permute.xlu0 0
      %695 = vperm.xlu0 %694, %v508
      %v696 = vpop.permute.xlu0 %695
      %697 = vset.pattern.permute.xlu0 0
      %698 = vperm.xlu0 %697, %v510
      %v699 = vpop.permute.xlu0 %698
      %700 = vset.pattern.permute.xlu0 0
      %701 = vperm.xlu0 %700, %v512
      %v702 = vpop.permute.xlu0 %701
      %703 = vset.pattern.permute.xlu0 0
      %704 = vperm.xlu0 %703, %v514
      %v705 = vpop.permute.xlu0 %704
      %706 = vset.pattern.permute.xlu0 0
      %707 = vperm.xlu0 %706, %v516
      %v708 = vpop.permute.xlu0 %707
      %709 = vset.pattern.permute.xlu0 0
      %710 = vperm.xlu0 %709, %v518
      %v711 = vpop.permute.xlu0 %710
      %712 = vset.pattern.permute.xlu0 0
      %713 = vperm.xlu0 %712, %v520
      %v714 = vpop.permute.xlu0 %713
      %vm715 = vcmp.eq.s32.totalorder %v525, %v522
      %vm716 = vcmp.eq.s32.totalorder %v528, %v522
      %vm717 = vcmp.eq.s32.totalorder %v531, %v522
      %vm718 = vcmp.eq.s32.totalorder %v534, %v522
      %vm719 = vcmp.eq.s32.totalorder %v537, %v522
      %vm720 = vcmp.eq.s32.totalorder %v540, %v522
      %vm721 = vcmp.eq.s32.totalorder %v543, %v522
      %vm722 = vcmp.eq.s32.totalorder %v546, %v522
      %vm723 = vcmp.eq.s32.totalorder %v549, %v522
      %vm724 = vcmp.eq.s32.totalorder %v552, %v522
      %vm725 = vcmp.eq.s32.totalorder %v555, %v522
      %vm726 = vcmp.eq.s32.totalorder %v558, %v522
      %vm727 = vcmp.eq.s32.totalorder %v561, %v522
      %vm728 = vcmp.eq.s32.totalorder %v564, %v522
      %vm729 = vcmp.eq.s32.totalorder %v567, %v522
      %vm730 = vcmp.eq.s32.totalorder %v570, %v522
      %vm731 = vcmp.eq.s32.totalorder %v573, %v522
      %vm732 = vcmp.eq.s32.totalorder %v576, %v522
      %vm733 = vcmp.eq.s32.totalorder %v579, %v522
      %vm734 = vcmp.eq.s32.totalorder %v582, %v522
      %vm735 = vcmp.eq.s32.totalorder %v585, %v522
      %vm736 = vcmp.eq.s32.totalorder %v588, %v522
      %vm737 = vcmp.eq.s32.totalorder %v591, %v522
      %vm738 = vcmp.eq.s32.totalorder %v594, %v522
      %vm739 = vcmp.eq.s32.totalorder %v597, %v522
      %vm740 = vcmp.eq.s32.totalorder %v600, %v522
      %vm741 = vcmp.eq.s32.totalorder %v603, %v522
      %vm742 = vcmp.eq.s32.totalorder %v606, %v522
      %vm743 = vcmp.eq.s32.totalorder %v609, %v522
      %vm744 = vcmp.eq.s32.totalorder %v612, %v522
      %vm745 = vcmp.eq.s32.totalorder %v615, %v522
      %vm746 = vcmp.eq.s32.totalorder %v618, %v522
      %vm747 = vcmp.eq.s32.totalorder %v621, %v522
      %vm748 = vcmp.eq.s32.totalorder %v624, %v522
      %vm749 = vcmp.eq.s32.totalorder %v627, %v522
      %vm750 = vcmp.eq.s32.totalorder %v630, %v522
      %vm751 = vcmp.eq.s32.totalorder %v633, %v522
      %vm752 = vcmp.eq.s32.totalorder %v636, %v522
      %vm753 = vcmp.eq.s32.totalorder %v639, %v522
      %vm754 = vcmp.eq.s32.totalorder %v642, %v522
      %vm755 = vcmp.eq.s32.totalorder %v645, %v522
      %vm756 = vcmp.eq.s32.totalorder %v648, %v522
      %vm757 = vcmp.eq.s32.totalorder %v651, %v522
      %vm758 = vcmp.eq.s32.totalorder %v654, %v522
      %vm759 = vcmp.eq.s32.totalorder %v657, %v522
      %vm760 = vcmp.eq.s32.totalorder %v660, %v522
      %vm761 = vcmp.eq.s32.totalorder %v663, %v522
      %vm762 = vcmp.eq.s32.totalorder %v666, %v522
      %vm763 = vcmp.eq.s32.totalorder %v669, %v522
      %vm764 = vcmp.eq.s32.totalorder %v672, %v522
      %vm765 = vcmp.eq.s32.totalorder %v675, %v522
      %vm766 = vcmp.eq.s32.totalorder %v678, %v522
      %vm767 = vcmp.eq.s32.totalorder %v681, %v522
      %vm768 = vcmp.eq.s32.totalorder %v684, %v522
      %vm769 = vcmp.eq.s32.totalorder %v687, %v522
      %vm770 = vcmp.eq.s32.totalorder %v690, %v522
      %vm771 = vcmp.eq.s32.totalorder %v693, %v522
      %vm772 = vcmp.eq.s32.totalorder %v696, %v522
      %vm773 = vcmp.eq.s32.totalorder %v699, %v522
      %vm774 = vcmp.eq.s32.totalorder %v702, %v522
      %vm775 = vcmp.eq.s32.totalorder %v705, %v522
      %vm776 = vcmp.eq.s32.totalorder %v708, %v522
      %vm777 = vcmp.eq.s32.totalorder %v711, %v522
      %vm778 = vcmp.eq.s32.totalorder %v714, %v522
      %v779 = vsel %vm715, 1, 0
      %v780 = vsel %vm716, 1, 0
      %v781 = vsel %vm717, 1, 0
      %v782 = vsel %vm718, 1, 0
      %v783 = vsel %vm719, 1, 0
      %v784 = vsel %vm720, 1, 0
      %v785 = vsel %vm721, 1, 0
      %v786 = vsel %vm722, 1, 0
      %v787 = vsel %vm723, 1, 0
      %v788 = vsel %vm724, 1, 0
      %v789 = vsel %vm725, 1, 0
      %v790 = vsel %vm726, 1, 0
      %v791 = vsel %vm727, 1, 0
      %v792 = vsel %vm728, 1, 0
      %v793 = vsel %vm729, 1, 0
      %v794 = vsel %vm730, 1, 0
      %v795 = vsel %vm731, 1, 0
      %v796 = vsel %vm732, 1, 0
      %v797 = vsel %vm733, 1, 0
      %v798 = vsel %vm734, 1, 0
      %v799 = vsel %vm735, 1, 0
      %v800 = vsel %vm736, 1, 0
      %v801 = vsel %vm737, 1, 0
      %v802 = vsel %vm738, 1, 0
      %v803 = vsel %vm739, 1, 0
      %v804 = vsel %vm740, 1, 0
      %v805 = vsel %vm741, 1, 0
      %v806 = vsel %vm742, 1, 0
      %v807 = vsel %vm743, 1, 0
      %v808 = vsel %vm744, 1, 0
      %v809 = vsel %vm745, 1, 0
      %v810 = vsel %vm746, 1, 0
      %v811 = vsel %vm747, 1, 0
      %v812 = vsel %vm748, 1, 0
      %v813 = vsel %vm749, 1, 0
      %v814 = vsel %vm750, 1, 0
      %v815 = vsel %vm751, 1, 0
      %v816 = vsel %vm752, 1, 0
      %v817 = vsel %vm753, 1, 0
      %v818 = vsel %vm754, 1, 0
      %v819 = vsel %vm755, 1, 0
      %v820 = vsel %vm756, 1, 0
      %v821 = vsel %vm757, 1, 0
      %v822 = vsel %vm758, 1, 0
      %v823 = vsel %vm759, 1, 0
      %v824 = vsel %vm760, 1, 0
      %v825 = vsel %vm761, 1, 0
      %v826 = vsel %vm762, 1, 0
      %v827 = vsel %vm763, 1, 0
      %v828 = vsel %vm764, 1, 0
      %v829 = vsel %vm765, 1, 0
      %v830 = vsel %vm766, 1, 0
      %v831 = vsel %vm767, 1, 0
      %v832 = vsel %vm768, 1, 0
      %v833 = vsel %vm769, 1, 0
      %v834 = vsel %vm770, 1, 0
      %v835 = vsel %vm771, 1, 0
      %v836 = vsel %vm772, 1, 0
      %v837 = vsel %vm773, 1, 0
      %v838 = vsel %vm774, 1, 0
      %v839 = vsel %vm775, 1, 0
      %v840 = vsel %vm776, 1, 0
      %v841 = vsel %vm777, 1, 0
      %v842 = vsel %vm778, 1, 0
      %v843 = vcvt.s32.f32 %v779
      %v844 = vcvt.s32.f32 %v780
      %v845 = vcvt.s32.f32 %v781
      %v846 = vcvt.s32.f32 %v782
      %v847 = vcvt.s32.f32 %v783
      %v848 = vcvt.s32.f32 %v784
      %v849 = vcvt.s32.f32 %v785
      %v850 = vcvt.s32.f32 %v786
      %v851 = vcvt.s32.f32 %v787
      %v852 = vcvt.s32.f32 %v788
      %v853 = vcvt.s32.f32 %v789
      %v854 = vcvt.s32.f32 %v790
      %v855 = vcvt.s32.f32 %v791
      %v856 = vcvt.s32.f32 %v792
      %v857 = vcvt.s32.f32 %v793
      %v858 = vcvt.s32.f32 %v794
      %v859 = vcvt.s32.f32 %v795
      %v860 = vcvt.s32.f32 %v796
      %v861 = vcvt.s32.f32 %v797
      %v862 = vcvt.s32.f32 %v798
      %v863 = vcvt.s32.f32 %v799
      %v864 = vcvt.s32.f32 %v800
      %v865 = vcvt.s32.f32 %v801
      %v866 = vcvt.s32.f32 %v802
      %v867 = vcvt.s32.f32 %v803
      %v868 = vcvt.s32.f32 %v804
      %v869 = vcvt.s32.f32 %v805
      %v870 = vcvt.s32.f32 %v806
      %v871 = vcvt.s32.f32 %v807
      %v872 = vcvt.s32.f32 %v808
      %v873 = vcvt.s32.f32 %v809
      %v874 = vcvt.s32.f32 %v810
      %v875 = vcvt.s32.f32 %v811
      %v876 = vcvt.s32.f32 %v812
      %v877 = vcvt.s32.f32 %v813
      %v878 = vcvt.s32.f32 %v814
      %v879 = vcvt.s32.f32 %v815
      %v880 = vcvt.s32.f32 %v816
      %v881 = vcvt.s32.f32 %v817
      %v882 = vcvt.s32.f32 %v818
      %v883 = vcvt.s32.f32 %v819
      %v884 = vcvt.s32.f32 %v820
      %v885 = vcvt.s32.f32 %v821
      %v886 = vcvt.s32.f32 %v822
      %v887 = vcvt.s32.f32 %v823
      %v888 = vcvt.s32.f32 %v824
      %v889 = vcvt.s32.f32 %v825
      %v890 = vcvt.s32.f32 %v826
      %v891 = vcvt.s32.f32 %v827
      %v892 = vcvt.s32.f32 %v828
      %v893 = vcvt.s32.f32 %v829
      %v894 = vcvt.s32.f32 %v830
      %v895 = vcvt.s32.f32 %v831
      %v896 = vcvt.s32.f32 %v832
      %v897 = vcvt.s32.f32 %v833
      %v898 = vcvt.s32.f32 %v834
      %v899 = vcvt.s32.f32 %v835
      %v900 = vcvt.s32.f32 %v836
      %v901 = vcvt.s32.f32 %v837
      %v902 = vcvt.s32.f32 %v838
      %v903 = vcvt.s32.f32 %v839
      %v904 = vcvt.s32.f32 %v840
      %v905 = vcvt.s32.f32 %v841
      %v906 = vcvt.s32.f32 %v842
      %v907 = vld [vmem:[%s1] sm:$0xff]
      %v908 = vld [vmem:[%s1 + $0x8] sm:$0xff]
      %vm909 = vcmask 130048
      %v911 = vsel %vm909, %v843, 0
      %v914 = vsel %vm909, %v844, 0
      %v917 = vsel %vm909, %v845, 0
      %v920 = vsel %vm909, %v846, 0
      %v923 = vsel %vm909, %v847, 0
      %v926 = vsel %vm909, %v848, 0
      %v929 = vsel %vm909, %v849, 0
      %v932 = vsel %vm909, %v850, 0
      %v935 = vsel %vm909, %v851, 0
      %v938 = vsel %vm909, %v852, 0
      %v941 = vsel %vm909, %v853, 0
      %v944 = vsel %vm909, %v854, 0
      %v947 = vsel %vm909, %v855, 0
      %v950 = vsel %vm909, %v856, 0
      %v953 = vsel %vm909, %v857, 0
      %v956 = vsel %vm909, %v858, 0
      %v959 = vsel %vm909, %v859, 0
      %v962 = vsel %vm909, %v860, 0
      %v965 = vsel %vm909, %v861, 0
      %v968 = vsel %vm909, %v862, 0
      %v971 = vsel %vm909, %v863, 0
      %v974 = vsel %vm909, %v864, 0
      %v977 = vsel %vm909, %v865, 0
      %v980 = vsel %vm909, %v866, 0
      %v983 = vsel %vm909, %v867, 0
      %v986 = vsel %vm909, %v868, 0
      %v989 = vsel %vm909, %v869, 0
      %v992 = vsel %vm909, %v870, 0
      %v995 = vsel %vm909, %v871, 0
      %v998 = vsel %vm909, %v872, 0
      %v1001 = vsel %vm909, %v873, 0
      %v1004 = vsel %vm909, %v874, 0
      %v1007 = vsel %vm909, %v875, 0
      %v1010 = vsel %vm909, %v876, 0
      %v1013 = vsel %vm909, %v877, 0
      %v1016 = vsel %vm909, %v878, 0
      %v1019 = vsel %vm909, %v879, 0
      %v1022 = vsel %vm909, %v880, 0
      %v1025 = vsel %vm909, %v881, 0
      %v1028 = vsel %vm909, %v882, 0
      %v1031 = vsel %vm909, %v883, 0
      %v1034 = vsel %vm909, %v884, 0
      %v1037 = vsel %vm909, %v885, 0
      %v1040 = vsel %vm909, %v886, 0
      %v1043 = vsel %vm909, %v887, 0
      %v1046 = vsel %vm909, %v888, 0
      %v1049 = vsel %vm909, %v889, 0
      %v1052 = vsel %vm909, %v890, 0
      %v1055 = vsel %vm909, %v891, 0
      %v1058 = vsel %vm909, %v892, 0
      %v1061 = vsel %vm909, %v893, 0
      %v1064 = vsel %vm909, %v894, 0
      %v1067 = vsel %vm909, %v895, 0
      %v1070 = vsel %vm909, %v896, 0
      %v1073 = vsel %vm909, %v897, 0
      %v1076 = vsel %vm909, %v898, 0
      %v1079 = vsel %vm909, %v899, 0
      %v1082 = vsel %vm909, %v900, 0
      %v1085 = vsel %vm909, %v901, 0
      %v1088 = vsel %vm909, %v902, 0
      %v1091 = vsel %vm909, %v903, 0
      %v1094 = vsel %vm909, %v904, 0
      %v1097 = vsel %vm909, %v905, 0
      %v1100 = vsel %vm909, %v906, 0
      %1102 = vmatpush.msra.mxu0 0.0
      %1103 = vmatpush.msra.mxu0 0.0
      %1104 = vmatpush.msra.mxu0 0.0
      %1105 = vmatpush.msra.mxu0 0.0
      %1106 = vmatpush.msra.mxu0 0.0
      %1107 = vmatpush.msra.mxu0 0.0
      %1108 = vmatpush.msra.mxu0 0.0
      %1109 = vmatpush.msra.mxu0 0.0
      %1110 = vmatpush.msra.mxu0 0.0
      %1111 = vmatpush.msra.mxu0 0.0
      %1112 = vmatpush.msra.mxu0 0.0
      %1113 = vmatpush.msra.mxu0 0.0
      %1114 = vmatpush.msra.mxu0 0.0
      %1115 = vmatpush.msra.mxu0 0.0
      %1116 = vmatpush.msra.mxu0 %v908
      %1117 = vmatpush.msra.mxu0 %v907
      %1118 = vmatmul.f32.gmra.mxu0 %v911
      %v1119 = vpop.f32.mrf.mxu0
      %v1120 = vadd.f32 0.0, %v1119
      %1121 = vmatmul.f32.gmra.mxu0 %v914
      %v1122 = vpop.f32.mrf.mxu0
      %v1123 = vadd.f32 0.0, %v1122
      %1124 = vmatmul.f32.gmra.mxu0 %v917
      %v1125 = vpop.f32.mrf.mxu0
      %v1126 = vadd.f32 0.0, %v1125
      %1127 = vmatmul.f32.gmra.mxu0 %v920
      %v1128 = vpop.f32.mrf.mxu0
      %v1129 = vadd.f32 0.0, %v1128
      %1130 = vmatmul.f32.gmra.mxu0 %v923
      %v1131 = vpop.f32.mrf.mxu0
      %v1132 = vadd.f32 0.0, %v1131
      %1133 = vmatmul.f32.gmra.mxu0 %v926
      %v1134 = vpop.f32.mrf.mxu0
      %v1135 = vadd.f32 0.0, %v1134
      %1136 = vmatmul.f32.gmra.mxu0 %v929
      %v1137 = vpop.f32.mrf.mxu0
      %v1138 = vadd.f32 0.0, %v1137
      %1139 = vmatmul.f32.gmra.mxu0 %v932
      %v1140 = vpop.f32.mrf.mxu0
      %v1141 = vadd.f32 0.0, %v1140
      %1142 = vmatmul.f32.gmra.mxu0 %v935
      %v1143 = vpop.f32.mrf.mxu0
      %v1144 = vadd.f32 0.0, %v1143
      %1145 = vmatmul.f32.gmra.mxu0 %v938
      %v1146 = vpop.f32.mrf.mxu0
      %v1147 = vadd.f32 0.0, %v1146
      %1148 = vmatmul.f32.gmra.mxu0 %v941
      %v1149 = vpop.f32.mrf.mxu0
      %v1150 = vadd.f32 0.0, %v1149
      %1151 = vmatmul.f32.gmra.mxu0 %v944
      %v1152 = vpop.f32.mrf.mxu0
      %v1153 = vadd.f32 0.0, %v1152
      %1154 = vmatmul.f32.gmra.mxu0 %v947
      %v1155 = vpop.f32.mrf.mxu0
      %v1156 = vadd.f32 0.0, %v1155
      %1157 = vmatmul.f32.gmra.mxu0 %v950
      %v1158 = vpop.f32.mrf.mxu0
      %v1159 = vadd.f32 0.0, %v1158
      %1160 = vmatmul.f32.gmra.mxu0 %v953
      %v1161 = vpop.f32.mrf.mxu0
      %v1162 = vadd.f32 0.0, %v1161
      %1163 = vmatmul.f32.gmra.mxu0 %v956
      %v1164 = vpop.f32.mrf.mxu0
      %v1165 = vadd.f32 0.0, %v1164
      %1166 = vmatmul.f32.gmra.mxu0 %v959
      %v1167 = vpop.f32.mrf.mxu0
      %v1168 = vadd.f32 0.0, %v1167
      %1169 = vmatmul.f32.gmra.mxu0 %v962
      %v1170 = vpop.f32.mrf.mxu0
      %v1171 = vadd.f32 0.0, %v1170
      %1172 = vmatmul.f32.gmra.mxu0 %v965
      %v1173 = vpop.f32.mrf.mxu0
      %v1174 = vadd.f32 0.0, %v1173
      %1175 = vmatmul.f32.gmra.mxu0 %v968
      %v1176 = vpop.f32.mrf.mxu0
      %v1177 = vadd.f32 0.0, %v1176
      %1178 = vmatmul.f32.gmra.mxu0 %v971
      %v1179 = vpop.f32.mrf.mxu0
      %v1180 = vadd.f32 0.0, %v1179
      %1181 = vmatmul.f32.gmra.mxu0 %v974
      %v1182 = vpop.f32.mrf.mxu0
      %v1183 = vadd.f32 0.0, %v1182
      %1184 = vmatmul.f32.gmra.mxu0 %v977
      %v1185 = vpop.f32.mrf.mxu0
      %v1186 = vadd.f32 0.0, %v1185
      %1187 = vmatmul.f32.gmra.mxu0 %v980
      %v1188 = vpop.f32.mrf.mxu0
      %v1189 = vadd.f32 0.0, %v1188
      %1190 = vmatmul.f32.gmra.mxu0 %v983
      %v1191 = vpop.f32.mrf.mxu0
      %v1192 = vadd.f32 0.0, %v1191
      %1193 = vmatmul.f32.gmra.mxu0 %v986
      %v1194 = vpop.f32.mrf.mxu0
      %v1195 = vadd.f32 0.0, %v1194
      %1196 = vmatmul.f32.gmra.mxu0 %v989
      %v1197 = vpop.f32.mrf.mxu0
      %v1198 = vadd.f32 0.0, %v1197
      %1199 = vmatmul.f32.gmra.mxu0 %v992
      %v1200 = vpop.f32.mrf.mxu0
      %v1201 = vadd.f32 0.0, %v1200
      %1202 = vmatmul.f32.gmra.mxu0 %v995
      %v1203 = vpop.f32.mrf.mxu0
      %v1204 = vadd.f32 0.0, %v1203
      %1205 = vmatmul.f32.gmra.mxu0 %v998
      %v1206 = vpop.f32.mrf.mxu0
      %v1207 = vadd.f32 0.0, %v1206
      %1208 = vmatmul.f32.gmra.mxu0 %v1001
      %v1209 = vpop.f32.mrf.mxu0
      %v1210 = vadd.f32 0.0, %v1209
      %1211 = vmatmul.f32.gmra.mxu0 %v1004
      %v1212 = vpop.f32.mrf.mxu0
      %v1213 = vadd.f32 0.0, %v1212
      %1214 = vmatmul.f32.gmra.mxu0 %v1007
      %v1215 = vpop.f32.mrf.mxu0
      %v1216 = vadd.f32 0.0, %v1215
      %1217 = vmatmul.f32.gmra.mxu0 %v1010
      %v1218 = vpop.f32.mrf.mxu0
      %v1219 = vadd.f32 0.0, %v1218
      %1220 = vmatmul.f32.gmra.mxu0 %v1013
      %v1221 = vpop.f32.mrf.mxu0
      %v1222 = vadd.f32 0.0, %v1221
      %1223 = vmatmul.f32.gmra.mxu0 %v1016
      %v1224 = vpop.f32.mrf.mxu0
      %v1225 = vadd.f32 0.0, %v1224
      %1226 = vmatmul.f32.gmra.mxu0 %v1019
      %v1227 = vpop.f32.mrf.mxu0
      %v1228 = vadd.f32 0.0, %v1227
      %1229 = vmatmul.f32.gmra.mxu0 %v1022
      %v1230 = vpop.f32.mrf.mxu0
      %v1231 = vadd.f32 0.0, %v1230
      %1232 = vmatmul.f32.gmra.mxu0 %v1025
      %v1233 = vpop.f32.mrf.mxu0
      %v1234 = vadd.f32 0.0, %v1233
      %1235 = vmatmul.f32.gmra.mxu0 %v1028
      %v1236 = vpop.f32.mrf.mxu0
      %v1237 = vadd.f32 0.0, %v1236
      %1238 = vmatmul.f32.gmra.mxu0 %v1031
      %v1239 = vpop.f32.mrf.mxu0
      %v1240 = vadd.f32 0.0, %v1239
      %1241 = vmatmul.f32.gmra.mxu0 %v1034
      %v1242 = vpop.f32.mrf.mxu0
      %v1243 = vadd.f32 0.0, %v1242
      %1244 = vmatmul.f32.gmra.mxu0 %v1037
      %v1245 = vpop.f32.mrf.mxu0
      %v1246 = vadd.f32 0.0, %v1245
      %1247 = vmatmul.f32.gmra.mxu0 %v1040
      %v1248 = vpop.f32.mrf.mxu0
      %v1249 = vadd.f32 0.0, %v1248
      %1250 = vmatmul.f32.gmra.mxu0 %v1043
      %v1251 = vpop.f32.mrf.mxu0
      %v1252 = vadd.f32 0.0, %v1251
      %1253 = vmatmul.f32.gmra.mxu0 %v1046
      %v1254 = vpop.f32.mrf.mxu0
      %v1255 = vadd.f32 0.0, %v1254
      %1256 = vmatmul.f32.gmra.mxu0 %v1049
      %v1257 = vpop.f32.mrf.mxu0
      %v1258 = vadd.f32 0.0, %v1257
      %1259 = vmatmul.f32.gmra.mxu0 %v1052
      %v1260 = vpop.f32.mrf.mxu0
      %v1261 = vadd.f32 0.0, %v1260
      %1262 = vmatmul.f32.gmra.mxu0 %v1055
      %v1263 = vpop.f32.mrf.mxu0
      %v1264 = vadd.f32 0.0, %v1263
      %1265 = vmatmul.f32.gmra.mxu0 %v1058
      %v1266 = vpop.f32.mrf.mxu0
      %v1267 = vadd.f32 0.0, %v1266
      %1268 = vmatmul.f32.gmra.mxu0 %v1061
      %v1269 = vpop.f32.mrf.mxu0
      %v1270 = vadd.f32 0.0, %v1269
      %1271 = vmatmul.f32.gmra.mxu0 %v1064
      %v1272 = vpop.f32.mrf.mxu0
      %v1273 = vadd.f32 0.0, %v1272
      %1274 = vmatmul.f32.gmra.mxu0 %v1067
      %v1275 = vpop.f32.mrf.mxu0
      %v1276 = vadd.f32 0.0, %v1275
      %1277 = vmatmul.f32.gmra.mxu0 %v1070
      %v1278 = vpop.f32.mrf.mxu0
      %v1279 = vadd.f32 0.0, %v1278
      %1280 = vmatmul.f32.gmra.mxu0 %v1073
      %v1281 = vpop.f32.mrf.mxu0
      %v1282 = vadd.f32 0.0, %v1281
      %1283 = vmatmul.f32.gmra.mxu0 %v1076
      %v1284 = vpop.f32.mrf.mxu0
      %v1285 = vadd.f32 0.0, %v1284
      %1286 = vmatmul.f32.gmra.mxu0 %v1079
      %v1287 = vpop.f32.mrf.mxu0
      %v1288 = vadd.f32 0.0, %v1287
      %1289 = vmatmul.f32.gmra.mxu0 %v1082
      %v1290 = vpop.f32.mrf.mxu0
      %v1291 = vadd.f32 0.0, %v1290
      %1292 = vmatmul.f32.gmra.mxu0 %v1085
      %v1293 = vpop.f32.mrf.mxu0
      %v1294 = vadd.f32 0.0, %v1293
      %1295 = vmatmul.f32.gmra.mxu0 %v1088
      %v1296 = vpop.f32.mrf.mxu0
      %v1297 = vadd.f32 0.0, %v1296
      %1298 = vmatmul.f32.gmra.mxu0 %v1091
      %v1299 = vpop.f32.mrf.mxu0
      %v1300 = vadd.f32 0.0, %v1299
      %1301 = vmatmul.f32.gmra.mxu0 %v1094
      %v1302 = vpop.f32.mrf.mxu0
      %v1303 = vadd.f32 0.0, %v1302
      %1304 = vmatmul.f32.gmra.mxu0 %v1097
      %v1305 = vpop.f32.mrf.mxu0
      %v1306 = vadd.f32 0.0, %v1305
      %1307 = vmatmul.f32.gmra.mxu0 %v1100
      %v1308 = vpop.f32.mrf.mxu0
      %v1309 = vadd.f32 0.0, %v1308
      %1310 = vdwg.mxu0
      %vm1311 = vcmp.lt.s32.totalorder %v266, 31
      %v1312 = vsel %vm1311, %v266, 31
      %vm1313 = vcmp.lt.s32.totalorder %v268, 31
      %v1314 = vsel %vm1313, %v268, 31
      %vm1315 = vcmp.lt.s32.totalorder %v270, 31
      %v1316 = vsel %vm1315, %v270, 31
      %vm1317 = vcmp.lt.s32.totalorder %v272, 31
      %v1318 = vsel %vm1317, %v272, 31
      %vm1319 = vcmp.lt.s32.totalorder %v274, 31
      %v1320 = vsel %vm1319, %v274, 31
      %vm1321 = vcmp.lt.s32.totalorder %v276, 31
      %v1322 = vsel %vm1321, %v276, 31
      %vm1323 = vcmp.lt.s32.totalorder %v278, 31
      %v1324 = vsel %vm1323, %v278, 31
      %vm1325 = vcmp.lt.s32.totalorder %v280, 31
      %v1326 = vsel %vm1325, %v280, 31
      %vm1327 = vcmp.lt.s32.totalorder %v282, 31
      %v1328 = vsel %vm1327, %v282, 31
      %vm1329 = vcmp.lt.s32.totalorder %v284, 31
      %v1330 = vsel %vm1329, %v284, 31
      %vm1331 = vcmp.lt.s32.totalorder %v286, 31
      %v1332 = vsel %vm1331, %v286, 31
      %vm1333 = vcmp.lt.s32.totalorder %v288, 31
      %v1334 = vsel %vm1333, %v288, 31
      %vm1335 = vcmp.lt.s32.totalorder %v290, 31
      %v1336 = vsel %vm1335, %v290, 31
      %vm1337 = vcmp.lt.s32.totalorder %v292, 31
      %v1338 = vsel %vm1337, %v292, 31
      %vm1339 = vcmp.lt.s32.totalorder %v294, 31
      %v1340 = vsel %vm1339, %v294, 31
      %vm1341 = vcmp.lt.s32.totalorder %v296, 31
      %v1342 = vsel %vm1341, %v296, 31
      %vm1343 = vcmp.lt.s32.totalorder %v298, 31
      %v1344 = vsel %vm1343, %v298, 31
      %vm1345 = vcmp.lt.s32.totalorder %v300, 31
      %v1346 = vsel %vm1345, %v300, 31
      %vm1347 = vcmp.lt.s32.totalorder %v302, 31
      %v1348 = vsel %vm1347, %v302, 31
      %vm1349 = vcmp.lt.s32.totalorder %v304, 31
      %v1350 = vsel %vm1349, %v304, 31
      %vm1351 = vcmp.lt.s32.totalorder %v306, 31
      %v1352 = vsel %vm1351, %v306, 31
      %vm1353 = vcmp.lt.s32.totalorder %v308, 31
      %v1354 = vsel %vm1353, %v308, 31
      %vm1355 = vcmp.lt.s32.totalorder %v310, 31
      %v1356 = vsel %vm1355, %v310, 31
      %vm1357 = vcmp.lt.s32.totalorder %v312, 31
      %v1358 = vsel %vm1357, %v312, 31
      %vm1359 = vcmp.lt.s32.totalorder %v314, 31
      %v1360 = vsel %vm1359, %v314, 31
      %vm1361 = vcmp.lt.s32.totalorder %v316, 31
      %v1362 = vsel %vm1361, %v316, 31
      %vm1363 = vcmp.lt.s32.totalorder %v318, 31
      %v1364 = vsel %vm1363, %v318, 31
      %vm1365 = vcmp.lt.s32.totalorder %v320, 31
      %v1366 = vsel %vm1365, %v320, 31
      %vm1367 = vcmp.lt.s32.totalorder %v322, 31
      %v1368 = vsel %vm1367, %v322, 31
      %vm1369 = vcmp.lt.s32.totalorder %v324, 31
      %v1370 = vsel %vm1369, %v324, 31
      %vm1371 = vcmp.lt.s32.totalorder %v326, 31
      %v1372 = vsel %vm1371, %v326, 31
      %vm1373 = vcmp.lt.s32.totalorder %v328, 31
      %v1374 = vsel %vm1373, %v328, 31
      %vm1375 = vcmp.lt.s32.totalorder %v330, 31
      %v1376 = vsel %vm1375, %v330, 31
      %vm1377 = vcmp.lt.s32.totalorder %v332, 31
      %v1378 = vsel %vm1377, %v332, 31
      %vm1379 = vcmp.lt.s32.totalorder %v334, 31
      %v1380 = vsel %vm1379, %v334, 31
      %vm1381 = vcmp.lt.s32.totalorder %v336, 31
      %v1382 = vsel %vm1381, %v336, 31
      %vm1383 = vcmp.lt.s32.totalorder %v338, 31
      %v1384 = vsel %vm1383, %v338, 31
      %vm1385 = vcmp.lt.s32.totalorder %v340, 31
      %v1386 = vsel %vm1385, %v340, 31
      %vm1387 = vcmp.lt.s32.totalorder %v342, 31
      %v1388 = vsel %vm1387, %v342, 31
      %vm1389 = vcmp.lt.s32.totalorder %v344, 31
      %v1390 = vsel %vm1389, %v344, 31
      %vm1391 = vcmp.lt.s32.totalorder %v346, 31
      %v1392 = vsel %vm1391, %v346, 31
      %vm1393 = vcmp.lt.s32.totalorder %v348, 31
      %v1394 = vsel %vm1393, %v348, 31
      %vm1395 = vcmp.lt.s32.totalorder %v350, 31
      %v1396 = vsel %vm1395, %v350, 31
      %vm1397 = vcmp.lt.s32.totalorder %v352, 31
      %v1398 = vsel %vm1397, %v352, 31
      %vm1399 = vcmp.lt.s32.totalorder %v354, 31
      %v1400 = vsel %vm1399, %v354, 31
      %vm1401 = vcmp.lt.s32.totalorder %v356, 31
      %v1402 = vsel %vm1401, %v356, 31
      %vm1403 = vcmp.lt.s32.totalorder %v358, 31
      %v1404 = vsel %vm1403, %v358, 31
      %vm1405 = vcmp.lt.s32.totalorder %v360, 31
      %v1406 = vsel %vm1405, %v360, 31
      %vm1407 = vcmp.lt.s32.totalorder %v362, 31
      %v1408 = vsel %vm1407, %v362, 31
      %vm1409 = vcmp.lt.s32.totalorder %v364, 31
      %v1410 = vsel %vm1409, %v364, 31
      %vm1411 = vcmp.lt.s32.totalorder %v366, 31
      %v1412 = vsel %vm1411, %v366, 31
      %vm1413 = vcmp.lt.s32.totalorder %v368, 31
      %v1414 = vsel %vm1413, %v368, 31
      %vm1415 = vcmp.lt.s32.totalorder %v370, 31
      %v1416 = vsel %vm1415, %v370, 31
      %vm1417 = vcmp.lt.s32.totalorder %v372, 31
      %v1418 = vsel %vm1417, %v372, 31
      %vm1419 = vcmp.lt.s32.totalorder %v374, 31
      %v1420 = vsel %vm1419, %v374, 31
      %vm1421 = vcmp.lt.s32.totalorder %v376, 31
      %v1422 = vsel %vm1421, %v376, 31
      %vm1423 = vcmp.lt.s32.totalorder %v378, 31
      %v1424 = vsel %vm1423, %v378, 31
      %vm1425 = vcmp.lt.s32.totalorder %v380, 31
      %v1426 = vsel %vm1425, %v380, 31
      %vm1427 = vcmp.lt.s32.totalorder %v382, 31
      %v1428 = vsel %vm1427, %v382, 31
      %vm1429 = vcmp.lt.s32.totalorder %v384, 31
      %v1430 = vsel %vm1429, %v384, 31
      %vm1431 = vcmp.lt.s32.totalorder %v386, 31
      %v1432 = vsel %vm1431, %v386, 31
      %vm1433 = vcmp.lt.s32.totalorder %v388, 31
      %v1434 = vsel %vm1433, %v388, 31
      %vm1435 = vcmp.lt.s32.totalorder %v390, 31
      %v1436 = vsel %vm1435, %v390, 31
      %vm1437 = vcmp.lt.s32.totalorder %v392, 31
      %v1438 = vsel %vm1437, %v392, 31
      %1439 = vset.pattern.permute.xlu0 1
      %1440 = vperm.xlu0 %1439, %v1312
      %v1441 = vpop.permute.xlu0 %1440
      %1442 = vset.pattern.permute.xlu0 1
      %1443 = vperm.xlu0 %1442, %v1314
      %v1444 = vpop.permute.xlu0 %1443
      %1445 = vset.pattern.permute.xlu0 1
      %1446 = vperm.xlu0 %1445, %v1316
      %v1447 = vpop.permute.xlu0 %1446
      %1448 = vset.pattern.permute.xlu0 1
      %1449 = vperm.xlu0 %1448, %v1318
      %v1450 = vpop.permute.xlu0 %1449
      %1451 = vset.pattern.permute.xlu0 1
      %1452 = vperm.xlu0 %1451, %v1320
      %v1453 = vpop.permute.xlu0 %1452
      %1454 = vset.pattern.permute.xlu0 1
      %1455 = vperm.xlu0 %1454, %v1322
      %v1456 = vpop.permute.xlu0 %1455
      %1457 = vset.pattern.permute.xlu0 1
      %1458 = vperm.xlu0 %1457, %v1324
      %v1459 = vpop.permute.xlu0 %1458
      %1460 = vset.pattern.permute.xlu0 1
      %1461 = vperm.xlu0 %1460, %v1326
      %v1462 = vpop.permute.xlu0 %1461
      %1463 = vset.pattern.permute.xlu0 1
      %1464 = vperm.xlu0 %1463, %v1328
      %v1465 = vpop.permute.xlu0 %1464
      %1466 = vset.pattern.permute.xlu0 1
      %1467 = vperm.xlu0 %1466, %v1330
      %v1468 = vpop.permute.xlu0 %1467
      %1469 = vset.pattern.permute.xlu0 1
      %1470 = vperm.xlu0 %1469, %v1332
      %v1471 = vpop.permute.xlu0 %1470
      %1472 = vset.pattern.permute.xlu0 1
      %1473 = vperm.xlu0 %1472, %v1334
      %v1474 = vpop.permute.xlu0 %1473
      %1475 = vset.pattern.permute.xlu0 1
      %1476 = vperm.xlu0 %1475, %v1336
      %v1477 = vpop.permute.xlu0 %1476
      %1478 = vset.pattern.permute.xlu0 1
      %1479 = vperm.xlu0 %1478, %v1338
      %v1480 = vpop.permute.xlu0 %1479
      %1481 = vset.pattern.permute.xlu0 1
      %1482 = vperm.xlu0 %1481, %v1340
      %v1483 = vpop.permute.xlu0 %1482
      %1484 = vset.pattern.permute.xlu0 1
      %1485 = vperm.xlu0 %1484, %v1342
      %v1486 = vpop.permute.xlu0 %1485
      %1487 = vset.pattern.permute.xlu0 1
      %1488 = vperm.xlu0 %1487, %v1344
      %v1489 = vpop.permute.xlu0 %1488
      %1490 = vset.pattern.permute.xlu0 1
      %1491 = vperm.xlu0 %1490, %v1346
      %v1492 = vpop.permute.xlu0 %1491
      %1493 = vset.pattern.permute.xlu0 1
      %1494 = vperm.xlu0 %1493, %v1348
      %v1495 = vpop.permute.xlu0 %1494
      %1496 = vset.pattern.permute.xlu0 1
      %1497 = vperm.xlu0 %1496, %v1350
      %v1498 = vpop.permute.xlu0 %1497
      %1499 = vset.pattern.permute.xlu0 1
      %1500 = vperm.xlu0 %1499, %v1352
      %v1501 = vpop.permute.xlu0 %1500
      %1502 = vset.pattern.permute.xlu0 1
      %1503 = vperm.xlu0 %1502, %v1354
      %v1504 = vpop.permute.xlu0 %1503
      %1505 = vset.pattern.permute.xlu0 1
      %1506 = vperm.xlu0 %1505, %v1356
      %v1507 = vpop.permute.xlu0 %1506
      %1508 = vset.pattern.permute.xlu0 1
      %1509 = vperm.xlu0 %1508, %v1358
      %v1510 = vpop.permute.xlu0 %1509
      %1511 = vset.pattern.permute.xlu0 1
      %1512 = vperm.xlu0 %1511, %v1360
      %v1513 = vpop.permute.xlu0 %1512
      %1514 = vset.pattern.permute.xlu0 1
      %1515 = vperm.xlu0 %1514, %v1362
      %v1516 = vpop.permute.xlu0 %1515
      %1517 = vset.pattern.permute.xlu0 1
      %1518 = vperm.xlu0 %1517, %v1364
      %v1519 = vpop.permute.xlu0 %1518
      %1520 = vset.pattern.permute.xlu0 1
      %1521 = vperm.xlu0 %1520, %v1366
      %v1522 = vpop.permute.xlu0 %1521
      %1523 = vset.pattern.permute.xlu0 1
      %1524 = vperm.xlu0 %1523, %v1368
      %v1525 = vpop.permute.xlu0 %1524
      %1526 = vset.pattern.permute.xlu0 1
      %1527 = vperm.xlu0 %1526, %v1370
      %v1528 = vpop.permute.xlu0 %1527
      %1529 = vset.pattern.permute.xlu0 1
      %1530 = vperm.xlu0 %1529, %v1372
      %v1531 = vpop.permute.xlu0 %1530
      %1532 = vset.pattern.permute.xlu0 1
      %1533 = vperm.xlu0 %1532, %v1374
      %v1534 = vpop.permute.xlu0 %1533
      %1535 = vset.pattern.permute.xlu0 1
      %1536 = vperm.xlu0 %1535, %v1376
      %v1537 = vpop.permute.xlu0 %1536
      %1538 = vset.pattern.permute.xlu0 1
      %1539 = vperm.xlu0 %1538, %v1378
      %v1540 = vpop.permute.xlu0 %1539
      %1541 = vset.pattern.permute.xlu0 1
      %1542 = vperm.xlu0 %1541, %v1380
      %v1543 = vpop.permute.xlu0 %1542
      %1544 = vset.pattern.permute.xlu0 1
      %1545 = vperm.xlu0 %1544, %v1382
      %v1546 = vpop.permute.xlu0 %1545
      %1547 = vset.pattern.permute.xlu0 1
      %1548 = vperm.xlu0 %1547, %v1384
      %v1549 = vpop.permute.xlu0 %1548
      %1550 = vset.pattern.permute.xlu0 1
      %1551 = vperm.xlu0 %1550, %v1386
      %v1552 = vpop.permute.xlu0 %1551
      %1553 = vset.pattern.permute.xlu0 1
      %1554 = vperm.xlu0 %1553, %v1388
      %v1555 = vpop.permute.xlu0 %1554
      %1556 = vset.pattern.permute.xlu0 1
      %1557 = vperm.xlu0 %1556, %v1390
      %v1558 = vpop.permute.xlu0 %1557
      %1559 = vset.pattern.permute.xlu0 1
      %1560 = vperm.xlu0 %1559, %v1392
      %v1561 = vpop.permute.xlu0 %1560
      %1562 = vset.pattern.permute.xlu0 1
      %1563 = vperm.xlu0 %1562, %v1394
      %v1564 = vpop.permute.xlu0 %1563
      %1565 = vset.pattern.permute.xlu0 1
      %1566 = vperm.xlu0 %1565, %v1396
      %v1567 = vpop.permute.xlu0 %1566
      %1568 = vset.pattern.permute.xlu0 1
      %1569 = vperm.xlu0 %1568, %v1398
      %v1570 = vpop.permute.xlu0 %1569
      %1571 = vset.pattern.permute.xlu0 1
      %1572 = vperm.xlu0 %1571, %v1400
      %v1573 = vpop.permute.xlu0 %1572
      %1574 = vset.pattern.permute.xlu0 1
      %1575 = vperm.xlu0 %1574, %v1402
      %v1576 = vpop.permute.xlu0 %1575
      %1577 = vset.pattern.permute.xlu0 1
      %1578 = vperm.xlu0 %1577, %v1404
      %v1579 = vpop.permute.xlu0 %1578
      %1580 = vset.pattern.permute.xlu0 1
      %1581 = vperm.xlu0 %1580, %v1406
      %v1582 = vpop.permute.xlu0 %1581
      %1583 = vset.pattern.permute.xlu0 1
      %1584 = vperm.xlu0 %1583, %v1408
      %v1585 = vpop.permute.xlu0 %1584
      %1586 = vset.pattern.permute.xlu0 1
      %1587 = vperm.xlu0 %1586, %v1410
      %v1588 = vpop.permute.xlu0 %1587
      %1589 = vset.pattern.permute.xlu0 1
      %1590 = vperm.xlu0 %1589, %v1412
      %v1591 = vpop.permute.xlu0 %1590
      %1592 = vset.pattern.permute.xlu0 1
      %1593 = vperm.xlu0 %1592, %v1414
      %v1594 = vpop.permute.xlu0 %1593
      %1595 = vset.pattern.permute.xlu0 1
      %1596 = vperm.xlu0 %1595, %v1416
      %v1597 = vpop.permute.xlu0 %1596
      %1598 = vset.pattern.permute.xlu0 1
      %1599 = vperm.xlu0 %1598, %v1418
      %v1600 = vpop.permute.xlu0 %1599
      %1601 = vset.pattern.permute.xlu0 1
      %1602 = vperm.xlu0 %1601, %v1420
      %v1603 = vpop.permute.xlu0 %1602
      %1604 = vset.pattern.permute.xlu0 1
      %1605 = vperm.xlu0 %1604, %v1422
      %v1606 = vpop.permute.xlu0 %1605
      %1607 = vset.pattern.permute.xlu0 1
      %1608 = vperm.xlu0 %1607, %v1424
      %v1609 = vpop.permute.xlu0 %1608
      %1610 = vset.pattern.permute.xlu0 1
      %1611 = vperm.xlu0 %1610, %v1426
      %v1612 = vpop.permute.xlu0 %1611
      %1613 = vset.pattern.permute.xlu0 1
      %1614 = vperm.xlu0 %1613, %v1428
      %v1615 = vpop.permute.xlu0 %1614
      %1616 = vset.pattern.permute.xlu0 1
      %1617 = vperm.xlu0 %1616, %v1430
      %v1618 = vpop.permute.xlu0 %1617
      %1619 = vset.pattern.permute.xlu0 1
      %1620 = vperm.xlu0 %1619, %v1432
      %v1621 = vpop.permute.xlu0 %1620
      %1622 = vset.pattern.permute.xlu0 1
      %1623 = vperm.xlu0 %1622, %v1434
      %v1624 = vpop.permute.xlu0 %1623
      %1625 = vset.pattern.permute.xlu0 1
      %1626 = vperm.xlu0 %1625, %v1436
      %v1627 = vpop.permute.xlu0 %1626
      %1628 = vset.pattern.permute.xlu0 1
      %1629 = vperm.xlu0 %1628, %v1438
      %v1630 = vpop.permute.xlu0 %1629
      %vm1631 = vcmp.eq.s32.totalorder %v1441, %v522
      %vm1632 = vcmp.eq.s32.totalorder %v1444, %v522
      %vm1633 = vcmp.eq.s32.totalorder %v1447, %v522
      %vm1634 = vcmp.eq.s32.totalorder %v1450, %v522
      %vm1635 = vcmp.eq.s32.totalorder %v1453, %v522
      %vm1636 = vcmp.eq.s32.totalorder %v1456, %v522
      %vm1637 = vcmp.eq.s32.totalorder %v1459, %v522
      %vm1638 = vcmp.eq.s32.totalorder %v1462, %v522
      %vm1639 = vcmp.eq.s32.totalorder %v1465, %v522
      %vm1640 = vcmp.eq.s32.totalorder %v1468, %v522
      %vm1641 = vcmp.eq.s32.totalorder %v1471, %v522
      %vm1642 = vcmp.eq.s32.totalorder %v1474, %v522
      %vm1643 = vcmp.eq.s32.totalorder %v1477, %v522
      %vm1644 = vcmp.eq.s32.totalorder %v1480, %v522
      %vm1645 = vcmp.eq.s32.totalorder %v1483, %v522
      %vm1646 = vcmp.eq.s32.totalorder %v1486, %v522
      %vm1647 = vcmp.eq.s32.totalorder %v1489, %v522
      %vm1648 = vcmp.eq.s32.totalorder %v1492, %v522
      %vm1649 = vcmp.eq.s32.totalorder %v1495, %v522
      %vm1650 = vcmp.eq.s32.totalorder %v1498, %v522
      %vm1651 = vcmp.eq.s32.totalorder %v1501, %v522
      %vm1652 = vcmp.eq.s32.totalorder %v1504, %v522
      %vm1653 = vcmp.eq.s32.totalorder %v1507, %v522
      %vm1654 = vcmp.eq.s32.totalorder %v1510, %v522
      %vm1655 = vcmp.eq.s32.totalorder %v1513, %v522
      %vm1656 = vcmp.eq.s32.totalorder %v1516, %v522
      %vm1657 = vcmp.eq.s32.totalorder %v1519, %v522
      %vm1658 = vcmp.eq.s32.totalorder %v1522, %v522
      %vm1659 = vcmp.eq.s32.totalorder %v1525, %v522
      %vm1660 = vcmp.eq.s32.totalorder %v1528, %v522
      %vm1661 = vcmp.eq.s32.totalorder %v1531, %v522
      %vm1662 = vcmp.eq.s32.totalorder %v1534, %v522
      %vm1663 = vcmp.eq.s32.totalorder %v1537, %v522
      %vm1664 = vcmp.eq.s32.totalorder %v1540, %v522
      %vm1665 = vcmp.eq.s32.totalorder %v1543, %v522
      %vm1666 = vcmp.eq.s32.totalorder %v1546, %v522
      %vm1667 = vcmp.eq.s32.totalorder %v1549, %v522
      %vm1668 = vcmp.eq.s32.totalorder %v1552, %v522
      %vm1669 = vcmp.eq.s32.totalorder %v1555, %v522
      %vm1670 = vcmp.eq.s32.totalorder %v1558, %v522
      %vm1671 = vcmp.eq.s32.totalorder %v1561, %v522
      %vm1672 = vcmp.eq.s32.totalorder %v1564, %v522
      %vm1673 = vcmp.eq.s32.totalorder %v1567, %v522
      %vm1674 = vcmp.eq.s32.totalorder %v1570, %v522
      %vm1675 = vcmp.eq.s32.totalorder %v1573, %v522
      %vm1676 = vcmp.eq.s32.totalorder %v1576, %v522
      %vm1677 = vcmp.eq.s32.totalorder %v1579, %v522
      %vm1678 = vcmp.eq.s32.totalorder %v1582, %v522
      %vm1679 = vcmp.eq.s32.totalorder %v1585, %v522
      %vm1680 = vcmp.eq.s32.totalorder %v1588, %v522
      %vm1681 = vcmp.eq.s32.totalorder %v1591, %v522
      %vm1682 = vcmp.eq.s32.totalorder %v1594, %v522
      %vm1683 = vcmp.eq.s32.totalorder %v1597, %v522
      %vm1684 = vcmp.eq.s32.totalorder %v1600, %v522
      %vm1685 = vcmp.eq.s32.totalorder %v1603, %v522
      %vm1686 = vcmp.eq.s32.totalorder %v1606, %v522
      %vm1687 = vcmp.eq.s32.totalorder %v1609, %v522
      %vm1688 = vcmp.eq.s32.totalorder %v1612, %v522
      %vm1689 = vcmp.eq.s32.totalorder %v1615, %v522
      %vm1690 = vcmp.eq.s32.totalorder %v1618, %v522
      %vm1691 = vcmp.eq.s32.totalorder %v1621, %v522
      %vm1692 = vcmp.eq.s32.totalorder %v1624, %v522
      %vm1693 = vcmp.eq.s32.totalorder %v1627, %v522
      %vm1694 = vcmp.eq.s32.totalorder %v1630, %v522
      %v1695 = vsel %vm1631, 1, 0
      %v1696 = vsel %vm1632, 1, 0
      %v1697 = vsel %vm1633, 1, 0
      %v1698 = vsel %vm1634, 1, 0
      %v1699 = vsel %vm1635, 1, 0
      %v1700 = vsel %vm1636, 1, 0
      %v1701 = vsel %vm1637, 1, 0
      %v1702 = vsel %vm1638, 1, 0
      %v1703 = vsel %vm1639, 1, 0
      %v1704 = vsel %vm1640, 1, 0
      %v1705 = vsel %vm1641, 1, 0
      %v1706 = vsel %vm1642, 1, 0
      %v1707 = vsel %vm1643, 1, 0
      %v1708 = vsel %vm1644, 1, 0
      %v1709 = vsel %vm1645, 1, 0
      %v1710 = vsel %vm1646, 1, 0
      %v1711 = vsel %vm1647, 1, 0
      %v1712 = vsel %vm1648, 1, 0
      %v1713 = vsel %vm1649, 1, 0
      %v1714 = vsel %vm1650, 1, 0
      %v1715 = vsel %vm1651, 1, 0
      %v1716 = vsel %vm1652, 1, 0
      %v1717 = vsel %vm1653, 1, 0
      %v1718 = vsel %vm1654, 1, 0
      %v1719 = vsel %vm1655, 1, 0
      %v1720 = vsel %vm1656, 1, 0
      %v1721 = vsel %vm1657, 1, 0
      %v1722 = vsel %vm1658, 1, 0
      %v1723 = vsel %vm1659, 1, 0
      %v1724 = vsel %vm1660, 1, 0
      %v1725 = vsel %vm1661, 1, 0
      %v1726 = vsel %vm1662, 1, 0
      %v1727 = vsel %vm1663, 1, 0
      %v1728 = vsel %vm1664, 1, 0
      %v1729 = vsel %vm1665, 1, 0
      %v1730 = vsel %vm1666, 1, 0
      %v1731 = vsel %vm1667, 1, 0
      %v1732 = vsel %vm1668, 1, 0
      %v1733 = vsel %vm1669, 1, 0
      %v1734 = vsel %vm1670, 1, 0
      %v1735 = vsel %vm1671, 1, 0
      %v1736 = vsel %vm1672, 1, 0
      %v1737 = vsel %vm1673, 1, 0
      %v1738 = vsel %vm1674, 1, 0
      %v1739 = vsel %vm1675, 1, 0
      %v1740 = vsel %vm1676, 1, 0
      %v1741 = vsel %vm1677, 1, 0
      %v1742 = vsel %vm1678, 1, 0
      %v1743 = vsel %vm1679, 1, 0
      %v1744 = vsel %vm1680, 1, 0
      %v1745 = vsel %vm1681, 1, 0
      %v1746 = vsel %vm1682, 1, 0
      %v1747 = vsel %vm1683, 1, 0
      %v1748 = vsel %vm1684, 1, 0
      %v1749 = vsel %vm1685, 1, 0
      %v1750 = vsel %vm1686, 1, 0
      %v1751 = vsel %vm1687, 1, 0
      %v1752 = vsel %vm1688, 1, 0
      %v1753 = vsel %vm1689, 1, 0
      %v1754 = vsel %vm1690, 1, 0
      %v1755 = vsel %vm1691, 1, 0
      %v1756 = vsel %vm1692, 1, 0
      %v1757 = vsel %vm1693, 1, 0
      %v1758 = vsel %vm1694, 1, 0
      %v1759 = vcvt.s32.f32 %v1695
      %v1760 = vcvt.s32.f32 %v1696
      %v1761 = vcvt.s32.f32 %v1697
      %v1762 = vcvt.s32.f32 %v1698
      %v1763 = vcvt.s32.f32 %v1699
      %v1764 = vcvt.s32.f32 %v1700
      %v1765 = vcvt.s32.f32 %v1701
      %v1766 = vcvt.s32.f32 %v1702
      %v1767 = vcvt.s32.f32 %v1703
      %v1768 = vcvt.s32.f32 %v1704
      %v1769 = vcvt.s32.f32 %v1705
      %v1770 = vcvt.s32.f32 %v1706
      %v1771 = vcvt.s32.f32 %v1707
      %v1772 = vcvt.s32.f32 %v1708
      %v1773 = vcvt.s32.f32 %v1709
      %v1774 = vcvt.s32.f32 %v1710
      %v1775 = vcvt.s32.f32 %v1711
      %v1776 = vcvt.s32.f32 %v1712
      %v1777 = vcvt.s32.f32 %v1713
      %v1778 = vcvt.s32.f32 %v1714
      %v1779 = vcvt.s32.f32 %v1715
      %v1780 = vcvt.s32.f32 %v1716
      %v1781 = vcvt.s32.f32 %v1717
      %v1782 = vcvt.s32.f32 %v1718
      %v1783 = vcvt.s32.f32 %v1719
      %v1784 = vcvt.s32.f32 %v1720
      %v1785 = vcvt.s32.f32 %v1721
      %v1786 = vcvt.s32.f32 %v1722
      %v1787 = vcvt.s32.f32 %v1723
      %v1788 = vcvt.s32.f32 %v1724
      %v1789 = vcvt.s32.f32 %v1725
      %v1790 = vcvt.s32.f32 %v1726
      %v1791 = vcvt.s32.f32 %v1727
      %v1792 = vcvt.s32.f32 %v1728
      %v1793 = vcvt.s32.f32 %v1729
      %v1794 = vcvt.s32.f32 %v1730
      %v1795 = vcvt.s32.f32 %v1731
      %v1796 = vcvt.s32.f32 %v1732
      %v1797 = vcvt.s32.f32 %v1733
      %v1798 = vcvt.s32.f32 %v1734
      %v1799 = vcvt.s32.f32 %v1735
      %v1800 = vcvt.s32.f32 %v1736
      %v1801 = vcvt.s32.f32 %v1737
      %v1802 = vcvt.s32.f32 %v1738
      %v1803 = vcvt.s32.f32 %v1739
      %v1804 = vcvt.s32.f32 %v1740
      %v1805 = vcvt.s32.f32 %v1741
      %v1806 = vcvt.s32.f32 %v1742
      %v1807 = vcvt.s32.f32 %v1743
      %v1808 = vcvt.s32.f32 %v1744
      %v1809 = vcvt.s32.f32 %v1745
      %v1810 = vcvt.s32.f32 %v1746
      %v1811 = vcvt.s32.f32 %v1747
      %v1812 = vcvt.s32.f32 %v1748
      %v1813 = vcvt.s32.f32 %v1749
      %v1814 = vcvt.s32.f32 %v1750
      %v1815 = vcvt.s32.f32 %v1751
      %v1816 = vcvt.s32.f32 %v1752
      %v1817 = vcvt.s32.f32 %v1753
      %v1818 = vcvt.s32.f32 %v1754
      %v1819 = vcvt.s32.f32 %v1755
      %v1820 = vcvt.s32.f32 %v1756
      %v1821 = vcvt.s32.f32 %v1757
      %v1822 = vcvt.s32.f32 %v1758
      %v1823 = vld [vmem:[%s2] sm:$0xff]
      %v1824 = vld [vmem:[%s2 + $0x8] sm:$0xff]
      %v1825 = vld [vmem:[%s2 + $0x10] sm:$0xff]
      %v1826 = vld [vmem:[%s2 + $0x18] sm:$0xff]
      %vm1827 = vcmask 261120
      %v1829 = vsel %vm1827, %v1759, 0
      %v1832 = vsel %vm1827, %v1760, 0
      %v1835 = vsel %vm1827, %v1761, 0
      %v1838 = vsel %vm1827, %v1762, 0
      %v1841 = vsel %vm1827, %v1763, 0
      %v1844 = vsel %vm1827, %v1764, 0
      %v1847 = vsel %vm1827, %v1765, 0
      %v1850 = vsel %vm1827, %v1766, 0
      %v1853 = vsel %vm1827, %v1767, 0
      %v1856 = vsel %vm1827, %v1768, 0
      %v1859 = vsel %vm1827, %v1769, 0
      %v1862 = vsel %vm1827, %v1770, 0
      %v1865 = vsel %vm1827, %v1771, 0
      %v1868 = vsel %vm1827, %v1772, 0
      %v1871 = vsel %vm1827, %v1773, 0
      %v1874 = vsel %vm1827, %v1774, 0
      %v1877 = vsel %vm1827, %v1775, 0
      %v1880 = vsel %vm1827, %v1776, 0
      %v1883 = vsel %vm1827, %v1777, 0
      %v1886 = vsel %vm1827, %v1778, 0
      %v1889 = vsel %vm1827, %v1779, 0
      %v1892 = vsel %vm1827, %v1780, 0
      %v1895 = vsel %vm1827, %v1781, 0
      %v1898 = vsel %vm1827, %v1782, 0
      %v1901 = vsel %vm1827, %v1783, 0
      %v1904 = vsel %vm1827, %v1784, 0
      %v1907 = vsel %vm1827, %v1785, 0
      %v1910 = vsel %vm1827, %v1786, 0
      %v1913 = vsel %vm1827, %v1787, 0
      %v1916 = vsel %vm1827, %v1788, 0
      %v1919 = vsel %vm1827, %v1789, 0
      %v1922 = vsel %vm1827, %v1790, 0
      %v1925 = vsel %vm1827, %v1791, 0
      %v1928 = vsel %vm1827, %v1792, 0
      %v1931 = vsel %vm1827, %v1793, 0
      %v1934 = vsel %vm1827, %v1794, 0
      %v1937 = vsel %vm1827, %v1795, 0
      %v1940 = vsel %vm1827, %v1796, 0
      %v1943 = vsel %vm1827, %v1797, 0
      %v1946 = vsel %vm1827, %v1798, 0
      %v1949 = vsel %vm1827, %v1799, 0
      %v1952 = vsel %vm1827, %v1800, 0
      %v1955 = vsel %vm1827, %v1801, 0
      %v1958 = vsel %vm1827, %v1802, 0
      %v1961 = vsel %vm1827, %v1803, 0
      %v1964 = vsel %vm1827, %v1804, 0
      %v1967 = vsel %vm1827, %v1805, 0
      %v1970 = vsel %vm1827, %v1806, 0
      %v1973 = vsel %vm1827, %v1807, 0
      %v1976 = vsel %vm1827, %v1808, 0
      %v1979 = vsel %vm1827, %v1809, 0
      %v1982 = vsel %vm1827, %v1810, 0
      %v1985 = vsel %vm1827, %v1811, 0
      %v1988 = vsel %vm1827, %v1812, 0
      %v1991 = vsel %vm1827, %v1813, 0
      %v1994 = vsel %vm1827, %v1814, 0
      %v1997 = vsel %vm1827, %v1815, 0
      %v2000 = vsel %vm1827, %v1816, 0
      %v2003 = vsel %vm1827, %v1817, 0
      %v2006 = vsel %vm1827, %v1818, 0
      %v2009 = vsel %vm1827, %v1819, 0
      %v2012 = vsel %vm1827, %v1820, 0
      %v2015 = vsel %vm1827, %v1821, 0
      %v2018 = vsel %vm1827, %v1822, 0
      %2020 = vmatpush.msra.mxu0 0.0
      %2021 = vmatpush.msra.mxu0 0.0
      %2022 = vmatpush.msra.mxu0 0.0
      %2023 = vmatpush.msra.mxu0 0.0
      %2024 = vmatpush.msra.mxu0 0.0
      %2025 = vmatpush.msra.mxu0 0.0
      %2026 = vmatpush.msra.mxu0 0.0
      %2027 = vmatpush.msra.mxu0 0.0
      %2028 = vmatpush.msra.mxu0 0.0
      %2029 = vmatpush.msra.mxu0 0.0
      %2030 = vmatpush.msra.mxu0 0.0
      %2031 = vmatpush.msra.mxu0 0.0
      %2032 = vmatpush.msra.mxu0 %v1826
      %2033 = vmatpush.msra.mxu0 %v1825
      %2034 = vmatpush.msra.mxu0 %v1824
      %2035 = vmatpush.msra.mxu0 %v1823
      %2036 = vmatmul.f32.gmra.mxu0 %v1829
      %v2037 = vpop.f32.mrf.mxu0
      %v2038 = vadd.f32 0.0, %v2037
      %2039 = vmatmul.f32.gmra.mxu0 %v1832
      %v2040 = vpop.f32.mrf.mxu0
      %v2041 = vadd.f32 0.0, %v2040
      %2042 = vmatmul.f32.gmra.mxu0 %v1835
      %v2043 = vpop.f32.mrf.mxu0
      %v2044 = vadd.f32 0.0, %v2043
      %2045 = vmatmul.f32.gmra.mxu0 %v1838
      %v2046 = vpop.f32.mrf.mxu0
      %v2047 = vadd.f32 0.0, %v2046
      %2048 = vmatmul.f32.gmra.mxu0 %v1841
      %v2049 = vpop.f32.mrf.mxu0
      %v2050 = vadd.f32 0.0, %v2049
      %2051 = vmatmul.f32.gmra.mxu0 %v1844
      %v2052 = vpop.f32.mrf.mxu0
      %v2053 = vadd.f32 0.0, %v2052
      %2054 = vmatmul.f32.gmra.mxu0 %v1847
      %v2055 = vpop.f32.mrf.mxu0
      %v2056 = vadd.f32 0.0, %v2055
      %2057 = vmatmul.f32.gmra.mxu0 %v1850
      %v2058 = vpop.f32.mrf.mxu0
      %v2059 = vadd.f32 0.0, %v2058
      %2060 = vmatmul.f32.gmra.mxu0 %v1853
      %v2061 = vpop.f32.mrf.mxu0
      %v2062 = vadd.f32 0.0, %v2061
      %2063 = vmatmul.f32.gmra.mxu0 %v1856
      %v2064 = vpop.f32.mrf.mxu0
      %v2065 = vadd.f32 0.0, %v2064
      %2066 = vmatmul.f32.gmra.mxu0 %v1859
      %v2067 = vpop.f32.mrf.mxu0
      %v2068 = vadd.f32 0.0, %v2067
      %2069 = vmatmul.f32.gmra.mxu0 %v1862
      %v2070 = vpop.f32.mrf.mxu0
      %v2071 = vadd.f32 0.0, %v2070
      %2072 = vmatmul.f32.gmra.mxu0 %v1865
      %v2073 = vpop.f32.mrf.mxu0
      %v2074 = vadd.f32 0.0, %v2073
      %2075 = vmatmul.f32.gmra.mxu0 %v1868
      %v2076 = vpop.f32.mrf.mxu0
      %v2077 = vadd.f32 0.0, %v2076
      %2078 = vmatmul.f32.gmra.mxu0 %v1871
      %v2079 = vpop.f32.mrf.mxu0
      %v2080 = vadd.f32 0.0, %v2079
      %2081 = vmatmul.f32.gmra.mxu0 %v1874
      %v2082 = vpop.f32.mrf.mxu0
      %v2083 = vadd.f32 0.0, %v2082
      %2084 = vmatmul.f32.gmra.mxu0 %v1877
      %v2085 = vpop.f32.mrf.mxu0
      %v2086 = vadd.f32 0.0, %v2085
      %2087 = vmatmul.f32.gmra.mxu0 %v1880
      %v2088 = vpop.f32.mrf.mxu0
      %v2089 = vadd.f32 0.0, %v2088
      %2090 = vmatmul.f32.gmra.mxu0 %v1883
      %v2091 = vpop.f32.mrf.mxu0
      %v2092 = vadd.f32 0.0, %v2091
      %2093 = vmatmul.f32.gmra.mxu0 %v1886
      %v2094 = vpop.f32.mrf.mxu0
      %v2095 = vadd.f32 0.0, %v2094
      %2096 = vmatmul.f32.gmra.mxu0 %v1889
      %v2097 = vpop.f32.mrf.mxu0
      %v2098 = vadd.f32 0.0, %v2097
      %2099 = vmatmul.f32.gmra.mxu0 %v1892
      %v2100 = vpop.f32.mrf.mxu0
      %v2101 = vadd.f32 0.0, %v2100
      %2102 = vmatmul.f32.gmra.mxu0 %v1895
      %v2103 = vpop.f32.mrf.mxu0
      %v2104 = vadd.f32 0.0, %v2103
      %2105 = vmatmul.f32.gmra.mxu0 %v1898
      %v2106 = vpop.f32.mrf.mxu0
      %v2107 = vadd.f32 0.0, %v2106
      %2108 = vmatmul.f32.gmra.mxu0 %v1901
      %v2109 = vpop.f32.mrf.mxu0
      %v2110 = vadd.f32 0.0, %v2109
      %2111 = vmatmul.f32.gmra.mxu0 %v1904
      %v2112 = vpop.f32.mrf.mxu0
      %v2113 = vadd.f32 0.0, %v2112
      %2114 = vmatmul.f32.gmra.mxu0 %v1907
      %v2115 = vpop.f32.mrf.mxu0
      %v2116 = vadd.f32 0.0, %v2115
      %2117 = vmatmul.f32.gmra.mxu0 %v1910
      %v2118 = vpop.f32.mrf.mxu0
      %v2119 = vadd.f32 0.0, %v2118
      %2120 = vmatmul.f32.gmra.mxu0 %v1913
      %v2121 = vpop.f32.mrf.mxu0
      %v2122 = vadd.f32 0.0, %v2121
      %2123 = vmatmul.f32.gmra.mxu0 %v1916
      %v2124 = vpop.f32.mrf.mxu0
      %v2125 = vadd.f32 0.0, %v2124
      %2126 = vmatmul.f32.gmra.mxu0 %v1919
      %v2127 = vpop.f32.mrf.mxu0
      %v2128 = vadd.f32 0.0, %v2127
      %2129 = vmatmul.f32.gmra.mxu0 %v1922
      %v2130 = vpop.f32.mrf.mxu0
      %v2131 = vadd.f32 0.0, %v2130
      %2132 = vmatmul.f32.gmra.mxu0 %v1925
      %v2133 = vpop.f32.mrf.mxu0
      %v2134 = vadd.f32 0.0, %v2133
      %2135 = vmatmul.f32.gmra.mxu0 %v1928
      %v2136 = vpop.f32.mrf.mxu0
      %v2137 = vadd.f32 0.0, %v2136
      %2138 = vmatmul.f32.gmra.mxu0 %v1931
      %v2139 = vpop.f32.mrf.mxu0
      %v2140 = vadd.f32 0.0, %v2139
      %2141 = vmatmul.f32.gmra.mxu0 %v1934
      %v2142 = vpop.f32.mrf.mxu0
      %v2143 = vadd.f32 0.0, %v2142
      %2144 = vmatmul.f32.gmra.mxu0 %v1937
      %v2145 = vpop.f32.mrf.mxu0
      %v2146 = vadd.f32 0.0, %v2145
      %2147 = vmatmul.f32.gmra.mxu0 %v1940
      %v2148 = vpop.f32.mrf.mxu0
      %v2149 = vadd.f32 0.0, %v2148
      %2150 = vmatmul.f32.gmra.mxu0 %v1943
      %v2151 = vpop.f32.mrf.mxu0
      %v2152 = vadd.f32 0.0, %v2151
      %2153 = vmatmul.f32.gmra.mxu0 %v1946
      %v2154 = vpop.f32.mrf.mxu0
      %v2155 = vadd.f32 0.0, %v2154
      %2156 = vmatmul.f32.gmra.mxu0 %v1949
      %v2157 = vpop.f32.mrf.mxu0
      %v2158 = vadd.f32 0.0, %v2157
      %2159 = vmatmul.f32.gmra.mxu0 %v1952
      %v2160 = vpop.f32.mrf.mxu0
      %v2161 = vadd.f32 0.0, %v2160
      %2162 = vmatmul.f32.gmra.mxu0 %v1955
      %v2163 = vpop.f32.mrf.mxu0
      %v2164 = vadd.f32 0.0, %v2163
      %2165 = vmatmul.f32.gmra.mxu0 %v1958
      %v2166 = vpop.f32.mrf.mxu0
      %v2167 = vadd.f32 0.0, %v2166
      %2168 = vmatmul.f32.gmra.mxu0 %v1961
      %v2169 = vpop.f32.mrf.mxu0
      %v2170 = vadd.f32 0.0, %v2169
      %2171 = vmatmul.f32.gmra.mxu0 %v1964
      %v2172 = vpop.f32.mrf.mxu0
      %v2173 = vadd.f32 0.0, %v2172
      %2174 = vmatmul.f32.gmra.mxu0 %v1967
      %v2175 = vpop.f32.mrf.mxu0
      %v2176 = vadd.f32 0.0, %v2175
      %2177 = vmatmul.f32.gmra.mxu0 %v1970
      %v2178 = vpop.f32.mrf.mxu0
      %v2179 = vadd.f32 0.0, %v2178
      %2180 = vmatmul.f32.gmra.mxu0 %v1973
      %v2181 = vpop.f32.mrf.mxu0
      %v2182 = vadd.f32 0.0, %v2181
      %2183 = vmatmul.f32.gmra.mxu0 %v1976
      %v2184 = vpop.f32.mrf.mxu0
      %v2185 = vadd.f32 0.0, %v2184
      %2186 = vmatmul.f32.gmra.mxu0 %v1979
      %v2187 = vpop.f32.mrf.mxu0
      %v2188 = vadd.f32 0.0, %v2187
      %2189 = vmatmul.f32.gmra.mxu0 %v1982
      %v2190 = vpop.f32.mrf.mxu0
      %v2191 = vadd.f32 0.0, %v2190
      %2192 = vmatmul.f32.gmra.mxu0 %v1985
      %v2193 = vpop.f32.mrf.mxu0
      %v2194 = vadd.f32 0.0, %v2193
      %2195 = vmatmul.f32.gmra.mxu0 %v1988
      %v2196 = vpop.f32.mrf.mxu0
      %v2197 = vadd.f32 0.0, %v2196
      %2198 = vmatmul.f32.gmra.mxu0 %v1991
      %v2199 = vpop.f32.mrf.mxu0
      %v2200 = vadd.f32 0.0, %v2199
      %2201 = vmatmul.f32.gmra.mxu0 %v1994
      %v2202 = vpop.f32.mrf.mxu0
      %v2203 = vadd.f32 0.0, %v2202
      %2204 = vmatmul.f32.gmra.mxu0 %v1997
      %v2205 = vpop.f32.mrf.mxu0
      %v2206 = vadd.f32 0.0, %v2205
      %2207 = vmatmul.f32.gmra.mxu0 %v2000
      %v2208 = vpop.f32.mrf.mxu0
      %v2209 = vadd.f32 0.0, %v2208
      %2210 = vmatmul.f32.gmra.mxu0 %v2003
      %v2211 = vpop.f32.mrf.mxu0
      %v2212 = vadd.f32 0.0, %v2211
      %2213 = vmatmul.f32.gmra.mxu0 %v2006
      %v2214 = vpop.f32.mrf.mxu0
      %v2215 = vadd.f32 0.0, %v2214
      %2216 = vmatmul.f32.gmra.mxu0 %v2009
      %v2217 = vpop.f32.mrf.mxu0
      %v2218 = vadd.f32 0.0, %v2217
      %2219 = vmatmul.f32.gmra.mxu0 %v2012
      %v2220 = vpop.f32.mrf.mxu0
      %v2221 = vadd.f32 0.0, %v2220
      %2222 = vmatmul.f32.gmra.mxu0 %v2015
      %v2223 = vpop.f32.mrf.mxu0
      %v2224 = vadd.f32 0.0, %v2223
      %2225 = vmatmul.f32.gmra.mxu0 %v2018
      %v2226 = vpop.f32.mrf.mxu0
      %v2227 = vadd.f32 0.0, %v2226
      %2228 = vdwg.mxu0
      %vm2229 = vcmp.lt.s32.totalorder %v266, 7
      %v2230 = vsel %vm2229, %v266, 7
      %vm2231 = vcmp.lt.s32.totalorder %v268, 7
      %v2232 = vsel %vm2231, %v268, 7
      %vm2233 = vcmp.lt.s32.totalorder %v270, 7
      %v2234 = vsel %vm2233, %v270, 7
      %vm2235 = vcmp.lt.s32.totalorder %v272, 7
      %v2236 = vsel %vm2235, %v272, 7
      %vm2237 = vcmp.lt.s32.totalorder %v274, 7
      %v2238 = vsel %vm2237, %v274, 7
      %vm2239 = vcmp.lt.s32.totalorder %v276, 7
      %v2240 = vsel %vm2239, %v276, 7
      %vm2241 = vcmp.lt.s32.totalorder %v278, 7
      %v2242 = vsel %vm2241, %v278, 7
      %vm2243 = vcmp.lt.s32.totalorder %v280, 7
      %v2244 = vsel %vm2243, %v280, 7
      %vm2245 = vcmp.lt.s32.totalorder %v282, 7
      %v2246 = vsel %vm2245, %v282, 7
      %vm2247 = vcmp.lt.s32.totalorder %v284, 7
      %v2248 = vsel %vm2247, %v284, 7
      %vm2249 = vcmp.lt.s32.totalorder %v286, 7
      %v2250 = vsel %vm2249, %v286, 7
      %vm2251 = vcmp.lt.s32.totalorder %v288, 7
      %v2252 = vsel %vm2251, %v288, 7
      %vm2253 = vcmp.lt.s32.totalorder %v290, 7
      %v2254 = vsel %vm2253, %v290, 7
      %vm2255 = vcmp.lt.s32.totalorder %v292, 7
      %v2256 = vsel %vm2255, %v292, 7
      %vm2257 = vcmp.lt.s32.totalorder %v294, 7
      %v2258 = vsel %vm2257, %v294, 7
      %vm2259 = vcmp.lt.s32.totalorder %v296, 7
      %v2260 = vsel %vm2259, %v296, 7
      %vm2261 = vcmp.lt.s32.totalorder %v298, 7
      %v2262 = vsel %vm2261, %v298, 7
      %vm2263 = vcmp.lt.s32.totalorder %v300, 7
      %v2264 = vsel %vm2263, %v300, 7
      %vm2265 = vcmp.lt.s32.totalorder %v302, 7
      %v2266 = vsel %vm2265, %v302, 7
      %vm2267 = vcmp.lt.s32.totalorder %v304, 7
      %v2268 = vsel %vm2267, %v304, 7
      %vm2269 = vcmp.lt.s32.totalorder %v306, 7
      %v2270 = vsel %vm2269, %v306, 7
      %vm2271 = vcmp.lt.s32.totalorder %v308, 7
      %v2272 = vsel %vm2271, %v308, 7
      %vm2273 = vcmp.lt.s32.totalorder %v310, 7
      %v2274 = vsel %vm2273, %v310, 7
      %vm2275 = vcmp.lt.s32.totalorder %v312, 7
      %v2276 = vsel %vm2275, %v312, 7
      %vm2277 = vcmp.lt.s32.totalorder %v314, 7
      %v2278 = vsel %vm2277, %v314, 7
      %vm2279 = vcmp.lt.s32.totalorder %v316, 7
      %v2280 = vsel %vm2279, %v316, 7
      %vm2281 = vcmp.lt.s32.totalorder %v318, 7
      %v2282 = vsel %vm2281, %v318, 7
      %vm2283 = vcmp.lt.s32.totalorder %v320, 7
      %v2284 = vsel %vm2283, %v320, 7
      %vm2285 = vcmp.lt.s32.totalorder %v322, 7
      %v2286 = vsel %vm2285, %v322, 7
      %vm2287 = vcmp.lt.s32.totalorder %v324, 7
      %v2288 = vsel %vm2287, %v324, 7
      %vm2289 = vcmp.lt.s32.totalorder %v326, 7
      %v2290 = vsel %vm2289, %v326, 7
      %vm2291 = vcmp.lt.s32.totalorder %v328, 7
      %v2292 = vsel %vm2291, %v328, 7
      %vm2293 = vcmp.lt.s32.totalorder %v330, 7
      %v2294 = vsel %vm2293, %v330, 7
      %vm2295 = vcmp.lt.s32.totalorder %v332, 7
      %v2296 = vsel %vm2295, %v332, 7
      %vm2297 = vcmp.lt.s32.totalorder %v334, 7
      %v2298 = vsel %vm2297, %v334, 7
      %vm2299 = vcmp.lt.s32.totalorder %v336, 7
      %v2300 = vsel %vm2299, %v336, 7
      %vm2301 = vcmp.lt.s32.totalorder %v338, 7
      %v2302 = vsel %vm2301, %v338, 7
      %vm2303 = vcmp.lt.s32.totalorder %v340, 7
      %v2304 = vsel %vm2303, %v340, 7
      %vm2305 = vcmp.lt.s32.totalorder %v342, 7
      %v2306 = vsel %vm2305, %v342, 7
      %vm2307 = vcmp.lt.s32.totalorder %v344, 7
      %v2308 = vsel %vm2307, %v344, 7
      %vm2309 = vcmp.lt.s32.totalorder %v346, 7
      %v2310 = vsel %vm2309, %v346, 7
      %vm2311 = vcmp.lt.s32.totalorder %v348, 7
      %v2312 = vsel %vm2311, %v348, 7
      %vm2313 = vcmp.lt.s32.totalorder %v350, 7
      %v2314 = vsel %vm2313, %v350, 7
      %vm2315 = vcmp.lt.s32.totalorder %v352, 7
      %v2316 = vsel %vm2315, %v352, 7
      %vm2317 = vcmp.lt.s32.totalorder %v354, 7
      %v2318 = vsel %vm2317, %v354, 7
      %vm2319 = vcmp.lt.s32.totalorder %v356, 7
      %v2320 = vsel %vm2319, %v356, 7
      %vm2321 = vcmp.lt.s32.totalorder %v358, 7
      %v2322 = vsel %vm2321, %v358, 7
      %vm2323 = vcmp.lt.s32.totalorder %v360, 7
      %v2324 = vsel %vm2323, %v360, 7
      %vm2325 = vcmp.lt.s32.totalorder %v362, 7
      %v2326 = vsel %vm2325, %v362, 7
      %vm2327 = vcmp.lt.s32.totalorder %v364, 7
      %v2328 = vsel %vm2327, %v364, 7
      %vm2329 = vcmp.lt.s32.totalorder %v366, 7
      %v2330 = vsel %vm2329, %v366, 7
      %vm2331 = vcmp.lt.s32.totalorder %v368, 7
      %v2332 = vsel %vm2331, %v368, 7
      %vm2333 = vcmp.lt.s32.totalorder %v370, 7
      %v2334 = vsel %vm2333, %v370, 7
      %vm2335 = vcmp.lt.s32.totalorder %v372, 7
      %v2336 = vsel %vm2335, %v372, 7
      %vm2337 = vcmp.lt.s32.totalorder %v374, 7
      %v2338 = vsel %vm2337, %v374, 7
      %vm2339 = vcmp.lt.s32.totalorder %v376, 7
      %v2340 = vsel %vm2339, %v376, 7
      %vm2341 = vcmp.lt.s32.totalorder %v378, 7
      %v2342 = vsel %vm2341, %v378, 7
      %vm2343 = vcmp.lt.s32.totalorder %v380, 7
      %v2344 = vsel %vm2343, %v380, 7
      %vm2345 = vcmp.lt.s32.totalorder %v382, 7
      %v2346 = vsel %vm2345, %v382, 7
      %vm2347 = vcmp.lt.s32.totalorder %v384, 7
      %v2348 = vsel %vm2347, %v384, 7
      %vm2349 = vcmp.lt.s32.totalorder %v386, 7
      %v2350 = vsel %vm2349, %v386, 7
      %vm2351 = vcmp.lt.s32.totalorder %v388, 7
      %v2352 = vsel %vm2351, %v388, 7
      %vm2353 = vcmp.lt.s32.totalorder %v390, 7
      %v2354 = vsel %vm2353, %v390, 7
      %vm2355 = vcmp.lt.s32.totalorder %v392, 7
      %v2356 = vsel %vm2355, %v392, 7
      %2357 = vset.pattern.permute.xlu0 2
      %2358 = vperm.xlu0 %2357, %v2230
      %v2359 = vpop.permute.xlu0 %2358
      %2360 = vset.pattern.permute.xlu0 2
      %2361 = vperm.xlu0 %2360, %v2232
      %v2362 = vpop.permute.xlu0 %2361
      %2363 = vset.pattern.permute.xlu0 2
      %2364 = vperm.xlu0 %2363, %v2234
      %v2365 = vpop.permute.xlu0 %2364
      %2366 = vset.pattern.permute.xlu0 2
      %2367 = vperm.xlu0 %2366, %v2236
      %v2368 = vpop.permute.xlu0 %2367
      %2369 = vset.pattern.permute.xlu0 2
      %2370 = vperm.xlu0 %2369, %v2238
      %v2371 = vpop.permute.xlu0 %2370
      %2372 = vset.pattern.permute.xlu0 2
      %2373 = vperm.xlu0 %2372, %v2240
      %v2374 = vpop.permute.xlu0 %2373
      %2375 = vset.pattern.permute.xlu0 2
      %2376 = vperm.xlu0 %2375, %v2242
      %v2377 = vpop.permute.xlu0 %2376
      %2378 = vset.pattern.permute.xlu0 2
      %2379 = vperm.xlu0 %2378, %v2244
      %v2380 = vpop.permute.xlu0 %2379
      %2381 = vset.pattern.permute.xlu0 2
      %2382 = vperm.xlu0 %2381, %v2246
      %v2383 = vpop.permute.xlu0 %2382
      %2384 = vset.pattern.permute.xlu0 2
      %2385 = vperm.xlu0 %2384, %v2248
      %v2386 = vpop.permute.xlu0 %2385
      %2387 = vset.pattern.permute.xlu0 2
      %2388 = vperm.xlu0 %2387, %v2250
      %v2389 = vpop.permute.xlu0 %2388
      %2390 = vset.pattern.permute.xlu0 2
      %2391 = vperm.xlu0 %2390, %v2252
      %v2392 = vpop.permute.xlu0 %2391
      %2393 = vset.pattern.permute.xlu0 2
      %2394 = vperm.xlu0 %2393, %v2254
      %v2395 = vpop.permute.xlu0 %2394
      %2396 = vset.pattern.permute.xlu0 2
      %2397 = vperm.xlu0 %2396, %v2256
      %v2398 = vpop.permute.xlu0 %2397
      %2399 = vset.pattern.permute.xlu0 2
      %2400 = vperm.xlu0 %2399, %v2258
      %v2401 = vpop.permute.xlu0 %2400
      %2402 = vset.pattern.permute.xlu0 2
      %2403 = vperm.xlu0 %2402, %v2260
      %v2404 = vpop.permute.xlu0 %2403
      %2405 = vset.pattern.permute.xlu0 2
      %2406 = vperm.xlu0 %2405, %v2262
      %v2407 = vpop.permute.xlu0 %2406
      %2408 = vset.pattern.permute.xlu0 2
      %2409 = vperm.xlu0 %2408, %v2264
      %v2410 = vpop.permute.xlu0 %2409
      %2411 = vset.pattern.permute.xlu0 2
      %2412 = vperm.xlu0 %2411, %v2266
      %v2413 = vpop.permute.xlu0 %2412
      %2414 = vset.pattern.permute.xlu0 2
      %2415 = vperm.xlu0 %2414, %v2268
      %v2416 = vpop.permute.xlu0 %2415
      %2417 = vset.pattern.permute.xlu0 2
      %2418 = vperm.xlu0 %2417, %v2270
      %v2419 = vpop.permute.xlu0 %2418
      %2420 = vset.pattern.permute.xlu0 2
      %2421 = vperm.xlu0 %2420, %v2272
      %v2422 = vpop.permute.xlu0 %2421
      %2423 = vset.pattern.permute.xlu0 2
      %2424 = vperm.xlu0 %2423, %v2274
      %v2425 = vpop.permute.xlu0 %2424
      %2426 = vset.pattern.permute.xlu0 2
      %2427 = vperm.xlu0 %2426, %v2276
      %v2428 = vpop.permute.xlu0 %2427
      %2429 = vset.pattern.permute.xlu0 2
      %2430 = vperm.xlu0 %2429, %v2278
      %v2431 = vpop.permute.xlu0 %2430
      %2432 = vset.pattern.permute.xlu0 2
      %2433 = vperm.xlu0 %2432, %v2280
      %v2434 = vpop.permute.xlu0 %2433
      %2435 = vset.pattern.permute.xlu0 2
      %2436 = vperm.xlu0 %2435, %v2282
      %v2437 = vpop.permute.xlu0 %2436
      %2438 = vset.pattern.permute.xlu0 2
      %2439 = vperm.xlu0 %2438, %v2284
      %v2440 = vpop.permute.xlu0 %2439
      %2441 = vset.pattern.permute.xlu0 2
      %2442 = vperm.xlu0 %2441, %v2286
      %v2443 = vpop.permute.xlu0 %2442
      %2444 = vset.pattern.permute.xlu0 2
      %2445 = vperm.xlu0 %2444, %v2288
      %v2446 = vpop.permute.xlu0 %2445
      %2447 = vset.pattern.permute.xlu0 2
      %2448 = vperm.xlu0 %2447, %v2290
      %v2449 = vpop.permute.xlu0 %2448
      %2450 = vset.pattern.permute.xlu0 2
      %2451 = vperm.xlu0 %2450, %v2292
      %v2452 = vpop.permute.xlu0 %2451
      %2453 = vset.pattern.permute.xlu0 2
      %2454 = vperm.xlu0 %2453, %v2294
      %v2455 = vpop.permute.xlu0 %2454
      %2456 = vset.pattern.permute.xlu0 2
      %2457 = vperm.xlu0 %2456, %v2296
      %v2458 = vpop.permute.xlu0 %2457
      %2459 = vset.pattern.permute.xlu0 2
      %2460 = vperm.xlu0 %2459, %v2298
      %v2461 = vpop.permute.xlu0 %2460
      %2462 = vset.pattern.permute.xlu0 2
      %2463 = vperm.xlu0 %2462, %v2300
      %v2464 = vpop.permute.xlu0 %2463
      %2465 = vset.pattern.permute.xlu0 2
      %2466 = vperm.xlu0 %2465, %v2302
      %v2467 = vpop.permute.xlu0 %2466
      %2468 = vset.pattern.permute.xlu0 2
      %2469 = vperm.xlu0 %2468, %v2304
      %v2470 = vpop.permute.xlu0 %2469
      %2471 = vset.pattern.permute.xlu0 2
      %2472 = vperm.xlu0 %2471, %v2306
      %v2473 = vpop.permute.xlu0 %2472
      %2474 = vset.pattern.permute.xlu0 2
      %2475 = vperm.xlu0 %2474, %v2308
      %v2476 = vpop.permute.xlu0 %2475
      %2477 = vset.pattern.permute.xlu0 2
      %2478 = vperm.xlu0 %2477, %v2310
      %v2479 = vpop.permute.xlu0 %2478
      %2480 = vset.pattern.permute.xlu0 2
      %2481 = vperm.xlu0 %2480, %v2312
      %v2482 = vpop.permute.xlu0 %2481
      %2483 = vset.pattern.permute.xlu0 2
      %2484 = vperm.xlu0 %2483, %v2314
      %v2485 = vpop.permute.xlu0 %2484
      %2486 = vset.pattern.permute.xlu0 2
      %2487 = vperm.xlu0 %2486, %v2316
      %v2488 = vpop.permute.xlu0 %2487
      %2489 = vset.pattern.permute.xlu0 2
      %2490 = vperm.xlu0 %2489, %v2318
      %v2491 = vpop.permute.xlu0 %2490
      %2492 = vset.pattern.permute.xlu0 2
      %2493 = vperm.xlu0 %2492, %v2320
      %v2494 = vpop.permute.xlu0 %2493
      %2495 = vset.pattern.permute.xlu0 2
      %2496 = vperm.xlu0 %2495, %v2322
      %v2497 = vpop.permute.xlu0 %2496
      %2498 = vset.pattern.permute.xlu0 2
      %2499 = vperm.xlu0 %2498, %v2324
      %v2500 = vpop.permute.xlu0 %2499
      %2501 = vset.pattern.permute.xlu0 2
      %2502 = vperm.xlu0 %2501, %v2326
      %v2503 = vpop.permute.xlu0 %2502
      %2504 = vset.pattern.permute.xlu0 2
      %2505 = vperm.xlu0 %2504, %v2328
      %v2506 = vpop.permute.xlu0 %2505
      %2507 = vset.pattern.permute.xlu0 2
      %2508 = vperm.xlu0 %2507, %v2330
      %v2509 = vpop.permute.xlu0 %2508
      %2510 = vset.pattern.permute.xlu0 2
      %2511 = vperm.xlu0 %2510, %v2332
      %v2512 = vpop.permute.xlu0 %2511
      %2513 = vset.pattern.permute.xlu0 2
      %2514 = vperm.xlu0 %2513, %v2334
      %v2515 = vpop.permute.xlu0 %2514
      %2516 = vset.pattern.permute.xlu0 2
      %2517 = vperm.xlu0 %2516, %v2336
      %v2518 = vpop.permute.xlu0 %2517
      %2519 = vset.pattern.permute.xlu0 2
      %2520 = vperm.xlu0 %2519, %v2338
      %v2521 = vpop.permute.xlu0 %2520
      %2522 = vset.pattern.permute.xlu0 2
      %2523 = vperm.xlu0 %2522, %v2340
      %v2524 = vpop.permute.xlu0 %2523
      %2525 = vset.pattern.permute.xlu0 2
      %2526 = vperm.xlu0 %2525, %v2342
      %v2527 = vpop.permute.xlu0 %2526
      %2528 = vset.pattern.permute.xlu0 2
      %2529 = vperm.xlu0 %2528, %v2344
      %v2530 = vpop.permute.xlu0 %2529
      %2531 = vset.pattern.permute.xlu0 2
      %2532 = vperm.xlu0 %2531, %v2346
      %v2533 = vpop.permute.xlu0 %2532
      %2534 = vset.pattern.permute.xlu0 2
      %2535 = vperm.xlu0 %2534, %v2348
      %v2536 = vpop.permute.xlu0 %2535
      %2537 = vset.pattern.permute.xlu0 2
      %2538 = vperm.xlu0 %2537, %v2350
      %v2539 = vpop.permute.xlu0 %2538
      %2540 = vset.pattern.permute.xlu0 2
      %2541 = vperm.xlu0 %2540, %v2352
      %v2542 = vpop.permute.xlu0 %2541
      %2543 = vset.pattern.permute.xlu0 2
      %2544 = vperm.xlu0 %2543, %v2354
      %v2545 = vpop.permute.xlu0 %2544
      %2546 = vset.pattern.permute.xlu0 2
      %2547 = vperm.xlu0 %2546, %v2356
      %v2548 = vpop.permute.xlu0 %2547
      %vm2549 = vcmp.eq.s32.totalorder %v2359, %v522
      %vm2550 = vcmp.eq.s32.totalorder %v2362, %v522
      %vm2551 = vcmp.eq.s32.totalorder %v2365, %v522
      %vm2552 = vcmp.eq.s32.totalorder %v2368, %v522
      %vm2553 = vcmp.eq.s32.totalorder %v2371, %v522
      %vm2554 = vcmp.eq.s32.totalorder %v2374, %v522
      %vm2555 = vcmp.eq.s32.totalorder %v2377, %v522
      %vm2556 = vcmp.eq.s32.totalorder %v2380, %v522
      %vm2557 = vcmp.eq.s32.totalorder %v2383, %v522
      %vm2558 = vcmp.eq.s32.totalorder %v2386, %v522
      %vm2559 = vcmp.eq.s32.totalorder %v2389, %v522
      %vm2560 = vcmp.eq.s32.totalorder %v2392, %v522
      %vm2561 = vcmp.eq.s32.totalorder %v2395, %v522
      %vm2562 = vcmp.eq.s32.totalorder %v2398, %v522
      %vm2563 = vcmp.eq.s32.totalorder %v2401, %v522
      %vm2564 = vcmp.eq.s32.totalorder %v2404, %v522
      %vm2565 = vcmp.eq.s32.totalorder %v2407, %v522
      %vm2566 = vcmp.eq.s32.totalorder %v2410, %v522
      %vm2567 = vcmp.eq.s32.totalorder %v2413, %v522
      %vm2568 = vcmp.eq.s32.totalorder %v2416, %v522
      %vm2569 = vcmp.eq.s32.totalorder %v2419, %v522
      %vm2570 = vcmp.eq.s32.totalorder %v2422, %v522
      %vm2571 = vcmp.eq.s32.totalorder %v2425, %v522
      %vm2572 = vcmp.eq.s32.totalorder %v2428, %v522
      %vm2573 = vcmp.eq.s32.totalorder %v2431, %v522
      %vm2574 = vcmp.eq.s32.totalorder %v2434, %v522
      %vm2575 = vcmp.eq.s32.totalorder %v2437, %v522
      %vm2576 = vcmp.eq.s32.totalorder %v2440, %v522
      %vm2577 = vcmp.eq.s32.totalorder %v2443, %v522
      %vm2578 = vcmp.eq.s32.totalorder %v2446, %v522
      %vm2579 = vcmp.eq.s32.totalorder %v2449, %v522
      %vm2580 = vcmp.eq.s32.totalorder %v2452, %v522
      %vm2581 = vcmp.eq.s32.totalorder %v2455, %v522
      %vm2582 = vcmp.eq.s32.totalorder %v2458, %v522
      %vm2583 = vcmp.eq.s32.totalorder %v2461, %v522
      %vm2584 = vcmp.eq.s32.totalorder %v2464, %v522
      %vm2585 = vcmp.eq.s32.totalorder %v2467, %v522
      %vm2586 = vcmp.eq.s32.totalorder %v2470, %v522
      %vm2587 = vcmp.eq.s32.totalorder %v2473, %v522
      %vm2588 = vcmp.eq.s32.totalorder %v2476, %v522
      %vm2589 = vcmp.eq.s32.totalorder %v2479, %v522
      %vm2590 = vcmp.eq.s32.totalorder %v2482, %v522
      %vm2591 = vcmp.eq.s32.totalorder %v2485, %v522
      %vm2592 = vcmp.eq.s32.totalorder %v2488, %v522
      %vm2593 = vcmp.eq.s32.totalorder %v2491, %v522
      %vm2594 = vcmp.eq.s32.totalorder %v2494, %v522
      %vm2595 = vcmp.eq.s32.totalorder %v2497, %v522
      %vm2596 = vcmp.eq.s32.totalorder %v2500, %v522
      %vm2597 = vcmp.eq.s32.totalorder %v2503, %v522
      %vm2598 = vcmp.eq.s32.totalorder %v2506, %v522
      %vm2599 = vcmp.eq.s32.totalorder %v2509, %v522
      %vm2600 = vcmp.eq.s32.totalorder %v2512, %v522
      %vm2601 = vcmp.eq.s32.totalorder %v2515, %v522
      %vm2602 = vcmp.eq.s32.totalorder %v2518, %v522
      %vm2603 = vcmp.eq.s32.totalorder %v2521, %v522
      %vm2604 = vcmp.eq.s32.totalorder %v2524, %v522
      %vm2605 = vcmp.eq.s32.totalorder %v2527, %v522
      %vm2606 = vcmp.eq.s32.totalorder %v2530, %v522
      %vm2607 = vcmp.eq.s32.totalorder %v2533, %v522
      %vm2608 = vcmp.eq.s32.totalorder %v2536, %v522
      %vm2609 = vcmp.eq.s32.totalorder %v2539, %v522
      %vm2610 = vcmp.eq.s32.totalorder %v2542, %v522
      %vm2611 = vcmp.eq.s32.totalorder %v2545, %v522
      %vm2612 = vcmp.eq.s32.totalorder %v2548, %v522
      %v2613 = vsel %vm2549, 1, 0
      %v2614 = vsel %vm2550, 1, 0
      %v2615 = vsel %vm2551, 1, 0
      %v2616 = vsel %vm2552, 1, 0
      %v2617 = vsel %vm2553, 1, 0
      %v2618 = vsel %vm2554, 1, 0
      %v2619 = vsel %vm2555, 1, 0
      %v2620 = vsel %vm2556, 1, 0
      %v2621 = vsel %vm2557, 1, 0
      %v2622 = vsel %vm2558, 1, 0
      %v2623 = vsel %vm2559, 1, 0
      %v2624 = vsel %vm2560, 1, 0
      %v2625 = vsel %vm2561, 1, 0
      %v2626 = vsel %vm2562, 1, 0
      %v2627 = vsel %vm2563, 1, 0
      %v2628 = vsel %vm2564, 1, 0
      %v2629 = vsel %vm2565, 1, 0
      %v2630 = vsel %vm2566, 1, 0
      %v2631 = vsel %vm2567, 1, 0
      %v2632 = vsel %vm2568, 1, 0
      %v2633 = vsel %vm2569, 1, 0
      %v2634 = vsel %vm2570, 1, 0
      %v2635 = vsel %vm2571, 1, 0
      %v2636 = vsel %vm2572, 1, 0
      %v2637 = vsel %vm2573, 1, 0
      %v2638 = vsel %vm2574, 1, 0
      %v2639 = vsel %vm2575, 1, 0
      %v2640 = vsel %vm2576, 1, 0
      %v2641 = vsel %vm2577, 1, 0
      %v2642 = vsel %vm2578, 1, 0
      %v2643 = vsel %vm2579, 1, 0
      %v2644 = vsel %vm2580, 1, 0
      %v2645 = vsel %vm2581, 1, 0
      %v2646 = vsel %vm2582, 1, 0
      %v2647 = vsel %vm2583, 1, 0
      %v2648 = vsel %vm2584, 1, 0
      %v2649 = vsel %vm2585, 1, 0
      %v2650 = vsel %vm2586, 1, 0
      %v2651 = vsel %vm2587, 1, 0
      %v2652 = vsel %vm2588, 1, 0
      %v2653 = vsel %vm2589, 1, 0
      %v2654 = vsel %vm2590, 1, 0
      %v2655 = vsel %vm2591, 1, 0
      %v2656 = vsel %vm2592, 1, 0
      %v2657 = vsel %vm2593, 1, 0
      %v2658 = vsel %vm2594, 1, 0
      %v2659 = vsel %vm2595, 1, 0
      %v2660 = vsel %vm2596, 1, 0
      %v2661 = vsel %vm2597, 1, 0
      %v2662 = vsel %vm2598, 1, 0
      %v2663 = vsel %vm2599, 1, 0
      %v2664 = vsel %vm2600, 1, 0
      %v2665 = vsel %vm2601, 1, 0
      %v2666 = vsel %vm2602, 1, 0
      %v2667 = vsel %vm2603, 1, 0
      %v2668 = vsel %vm2604, 1, 0
      %v2669 = vsel %vm2605, 1, 0
      %v2670 = vsel %vm2606, 1, 0
      %v2671 = vsel %vm2607, 1, 0
      %v2672 = vsel %vm2608, 1, 0
      %v2673 = vsel %vm2609, 1, 0
      %v2674 = vsel %vm2610, 1, 0
      %v2675 = vsel %vm2611, 1, 0
      %v2676 = vsel %vm2612, 1, 0
      %v2677 = vcvt.s32.f32 %v2613
      %v2678 = vcvt.s32.f32 %v2614
      %v2679 = vcvt.s32.f32 %v2615
      %v2680 = vcvt.s32.f32 %v2616
      %v2681 = vcvt.s32.f32 %v2617
      %v2682 = vcvt.s32.f32 %v2618
      %v2683 = vcvt.s32.f32 %v2619
      %v2684 = vcvt.s32.f32 %v2620
      %v2685 = vcvt.s32.f32 %v2621
      %v2686 = vcvt.s32.f32 %v2622
      %v2687 = vcvt.s32.f32 %v2623
      %v2688 = vcvt.s32.f32 %v2624
      %v2689 = vcvt.s32.f32 %v2625
      %v2690 = vcvt.s32.f32 %v2626
      %v2691 = vcvt.s32.f32 %v2627
      %v2692 = vcvt.s32.f32 %v2628
      %v2693 = vcvt.s32.f32 %v2629
      %v2694 = vcvt.s32.f32 %v2630
      %v2695 = vcvt.s32.f32 %v2631
      %v2696 = vcvt.s32.f32 %v2632
      %v2697 = vcvt.s32.f32 %v2633
      %v2698 = vcvt.s32.f32 %v2634
      %v2699 = vcvt.s32.f32 %v2635
      %v2700 = vcvt.s32.f32 %v2636
      %v2701 = vcvt.s32.f32 %v2637
      %v2702 = vcvt.s32.f32 %v2638
      %v2703 = vcvt.s32.f32 %v2639
      %v2704 = vcvt.s32.f32 %v2640
      %v2705 = vcvt.s32.f32 %v2641
      %v2706 = vcvt.s32.f32 %v2642
      %v2707 = vcvt.s32.f32 %v2643
      %v2708 = vcvt.s32.f32 %v2644
      %v2709 = vcvt.s32.f32 %v2645
      %v2710 = vcvt.s32.f32 %v2646
      %v2711 = vcvt.s32.f32 %v2647
      %v2712 = vcvt.s32.f32 %v2648
      %v2713 = vcvt.s32.f32 %v2649
      %v2714 = vcvt.s32.f32 %v2650
      %v2715 = vcvt.s32.f32 %v2651
      %v2716 = vcvt.s32.f32 %v2652
      %v2717 = vcvt.s32.f32 %v2653
      %v2718 = vcvt.s32.f32 %v2654
      %v2719 = vcvt.s32.f32 %v2655
      %v2720 = vcvt.s32.f32 %v2656
      %v2721 = vcvt.s32.f32 %v2657
      %v2722 = vcvt.s32.f32 %v2658
      %v2723 = vcvt.s32.f32 %v2659
      %v2724 = vcvt.s32.f32 %v2660
      %v2725 = vcvt.s32.f32 %v2661
      %v2726 = vcvt.s32.f32 %v2662
      %v2727 = vcvt.s32.f32 %v2663
      %v2728 = vcvt.s32.f32 %v2664
      %v2729 = vcvt.s32.f32 %v2665
      %v2730 = vcvt.s32.f32 %v2666
      %v2731 = vcvt.s32.f32 %v2667
      %v2732 = vcvt.s32.f32 %v2668
      %v2733 = vcvt.s32.f32 %v2669
      %v2734 = vcvt.s32.f32 %v2670
      %v2735 = vcvt.s32.f32 %v2671
      %v2736 = vcvt.s32.f32 %v2672
      %v2737 = vcvt.s32.f32 %v2673
      %v2738 = vcvt.s32.f32 %v2674
      %v2739 = vcvt.s32.f32 %v2675
      %v2740 = vcvt.s32.f32 %v2676
      %v2741 = vld [vmem:[%s3] sm:$0xff]
      %vm2742 = vcmask 64512
      %v2744 = vsel %vm2742, %v2677, 0
      %v2747 = vsel %vm2742, %v2678, 0
      %v2750 = vsel %vm2742, %v2679, 0
      %v2753 = vsel %vm2742, %v2680, 0
      %v2756 = vsel %vm2742, %v2681, 0
      %v2759 = vsel %vm2742, %v2682, 0
      %v2762 = vsel %vm2742, %v2683, 0
      %v2765 = vsel %vm2742, %v2684, 0
      %v2768 = vsel %vm2742, %v2685, 0
      %v2771 = vsel %vm2742, %v2686, 0
      %v2774 = vsel %vm2742, %v2687, 0
      %v2777 = vsel %vm2742, %v2688, 0
      %v2780 = vsel %vm2742, %v2689, 0
      %v2783 = vsel %vm2742, %v2690, 0
      %v2786 = vsel %vm2742, %v2691, 0
      %v2789 = vsel %vm2742, %v2692, 0
      %v2792 = vsel %vm2742, %v2693, 0
      %v2795 = vsel %vm2742, %v2694, 0
      %v2798 = vsel %vm2742, %v2695, 0
      %v2801 = vsel %vm2742, %v2696, 0
      %v2804 = vsel %vm2742, %v2697, 0
      %v2807 = vsel %vm2742, %v2698, 0
      %v2810 = vsel %vm2742, %v2699, 0
      %v2813 = vsel %vm2742, %v2700, 0
      %v2816 = vsel %vm2742, %v2701, 0
      %v2819 = vsel %vm2742, %v2702, 0
      %v2822 = vsel %vm2742, %v2703, 0
      %v2825 = vsel %vm2742, %v2704, 0
      %v2828 = vsel %vm2742, %v2705, 0
      %v2831 = vsel %vm2742, %v2706, 0
      %v2834 = vsel %vm2742, %v2707, 0
      %v2837 = vsel %vm2742, %v2708, 0
      %v2840 = vsel %vm2742, %v2709, 0
      %v2843 = vsel %vm2742, %v2710, 0
      %v2846 = vsel %vm2742, %v2711, 0
      %v2849 = vsel %vm2742, %v2712, 0
      %v2852 = vsel %vm2742, %v2713, 0
      %v2855 = vsel %vm2742, %v2714, 0
      %v2858 = vsel %vm2742, %v2715, 0
      %v2861 = vsel %vm2742, %v2716, 0
      %v2864 = vsel %vm2742, %v2717, 0
      %v2867 = vsel %vm2742, %v2718, 0
      %v2870 = vsel %vm2742, %v2719, 0
      %v2873 = vsel %vm2742, %v2720, 0
      %v2876 = vsel %vm2742, %v2721, 0
      %v2879 = vsel %vm2742, %v2722, 0
      %v2882 = vsel %vm2742, %v2723, 0
      %v2885 = vsel %vm2742, %v2724, 0
      %v2888 = vsel %vm2742, %v2725, 0
      %v2891 = vsel %vm2742, %v2726, 0
      %v2894 = vsel %vm2742, %v2727, 0
      %v2897 = vsel %vm2742, %v2728, 0
      %v2900 = vsel %vm2742, %v2729, 0
      %v2903 = vsel %vm2742, %v2730, 0
      %v2906 = vsel %vm2742, %v2731, 0
      %v2909 = vsel %vm2742, %v2732, 0
      %v2912 = vsel %vm2742, %v2733, 0
      %v2915 = vsel %vm2742, %v2734, 0
      %v2918 = vsel %vm2742, %v2735, 0
      %v2921 = vsel %vm2742, %v2736, 0
      %v2924 = vsel %vm2742, %v2737, 0
      %v2927 = vsel %vm2742, %v2738, 0
      %v2930 = vsel %vm2742, %v2739, 0
      %v2933 = vsel %vm2742, %v2740, 0
      %2935 = vmatpush.msra.mxu0 0.0
      %2936 = vmatpush.msra.mxu0 0.0
      %2937 = vmatpush.msra.mxu0 0.0
      %2938 = vmatpush.msra.mxu0 0.0
      %2939 = vmatpush.msra.mxu0 0.0
      %2940 = vmatpush.msra.mxu0 0.0
      %2941 = vmatpush.msra.mxu0 0.0
      %2942 = vmatpush.msra.mxu0 0.0
      %2943 = vmatpush.msra.mxu0 0.0
      %2944 = vmatpush.msra.mxu0 0.0
      %2945 = vmatpush.msra.mxu0 0.0
      %2946 = vmatpush.msra.mxu0 0.0
      %2947 = vmatpush.msra.mxu0 0.0
      %2948 = vmatpush.msra.mxu0 0.0
      %2949 = vmatpush.msra.mxu0 0.0
      %2950 = vmatpush.msra.mxu0 %v2741
      %2951 = vmatmul.f32.gmra.mxu0 %v2744
      %v2952 = vpop.f32.mrf.mxu0
      %v2953 = vadd.f32 0.0, %v2952
      %2954 = vmatmul.f32.gmra.mxu0 %v2747
      %v2955 = vpop.f32.mrf.mxu0
      %v2956 = vadd.f32 0.0, %v2955
      %2957 = vmatmul.f32.gmra.mxu0 %v2750
      %v2958 = vpop.f32.mrf.mxu0
      %v2959 = vadd.f32 0.0, %v2958
      %2960 = vmatmul.f32.gmra.mxu0 %v2753
      %v2961 = vpop.f32.mrf.mxu0
      %v2962 = vadd.f32 0.0, %v2961
      %2963 = vmatmul.f32.gmra.mxu0 %v2756
      %v2964 = vpop.f32.mrf.mxu0
      %v2965 = vadd.f32 0.0, %v2964
      %2966 = vmatmul.f32.gmra.mxu0 %v2759
      %v2967 = vpop.f32.mrf.mxu0
      %v2968 = vadd.f32 0.0, %v2967
      %2969 = vmatmul.f32.gmra.mxu0 %v2762
      %v2970 = vpop.f32.mrf.mxu0
      %v2971 = vadd.f32 0.0, %v2970
      %2972 = vmatmul.f32.gmra.mxu0 %v2765
      %v2973 = vpop.f32.mrf.mxu0
      %v2974 = vadd.f32 0.0, %v2973
      %2975 = vmatmul.f32.gmra.mxu0 %v2768
      %v2976 = vpop.f32.mrf.mxu0
      %v2977 = vadd.f32 0.0, %v2976
      %2978 = vmatmul.f32.gmra.mxu0 %v2771
      %v2979 = vpop.f32.mrf.mxu0
      %v2980 = vadd.f32 0.0, %v2979
      %2981 = vmatmul.f32.gmra.mxu0 %v2774
      %v2982 = vpop.f32.mrf.mxu0
      %v2983 = vadd.f32 0.0, %v2982
      %2984 = vmatmul.f32.gmra.mxu0 %v2777
      %v2985 = vpop.f32.mrf.mxu0
      %v2986 = vadd.f32 0.0, %v2985
      %2987 = vmatmul.f32.gmra.mxu0 %v2780
      %v2988 = vpop.f32.mrf.mxu0
      %v2989 = vadd.f32 0.0, %v2988
      %2990 = vmatmul.f32.gmra.mxu0 %v2783
      %v2991 = vpop.f32.mrf.mxu0
      %v2992 = vadd.f32 0.0, %v2991
      %2993 = vmatmul.f32.gmra.mxu0 %v2786
      %v2994 = vpop.f32.mrf.mxu0
      %v2995 = vadd.f32 0.0, %v2994
      %2996 = vmatmul.f32.gmra.mxu0 %v2789
      %v2997 = vpop.f32.mrf.mxu0
      %v2998 = vadd.f32 0.0, %v2997
      %2999 = vmatmul.f32.gmra.mxu0 %v2792
      %v3000 = vpop.f32.mrf.mxu0
      %v3001 = vadd.f32 0.0, %v3000
      %3002 = vmatmul.f32.gmra.mxu0 %v2795
      %v3003 = vpop.f32.mrf.mxu0
      %v3004 = vadd.f32 0.0, %v3003
      %3005 = vmatmul.f32.gmra.mxu0 %v2798
      %v3006 = vpop.f32.mrf.mxu0
      %v3007 = vadd.f32 0.0, %v3006
      %3008 = vmatmul.f32.gmra.mxu0 %v2801
      %v3009 = vpop.f32.mrf.mxu0
      %v3010 = vadd.f32 0.0, %v3009
      %3011 = vmatmul.f32.gmra.mxu0 %v2804
      %v3012 = vpop.f32.mrf.mxu0
      %v3013 = vadd.f32 0.0, %v3012
      %3014 = vmatmul.f32.gmra.mxu0 %v2807
      %v3015 = vpop.f32.mrf.mxu0
      %v3016 = vadd.f32 0.0, %v3015
      %3017 = vmatmul.f32.gmra.mxu0 %v2810
      %v3018 = vpop.f32.mrf.mxu0
      %v3019 = vadd.f32 0.0, %v3018
      %3020 = vmatmul.f32.gmra.mxu0 %v2813
      %v3021 = vpop.f32.mrf.mxu0
      %v3022 = vadd.f32 0.0, %v3021
      %3023 = vmatmul.f32.gmra.mxu0 %v2816
      %v3024 = vpop.f32.mrf.mxu0
      %v3025 = vadd.f32 0.0, %v3024
      %3026 = vmatmul.f32.gmra.mxu0 %v2819
      %v3027 = vpop.f32.mrf.mxu0
      %v3028 = vadd.f32 0.0, %v3027
      %3029 = vmatmul.f32.gmra.mxu0 %v2822
      %v3030 = vpop.f32.mrf.mxu0
      %v3031 = vadd.f32 0.0, %v3030
      %3032 = vmatmul.f32.gmra.mxu0 %v2825
      %v3033 = vpop.f32.mrf.mxu0
      %v3034 = vadd.f32 0.0, %v3033
      %3035 = vmatmul.f32.gmra.mxu0 %v2828
      %v3036 = vpop.f32.mrf.mxu0
      %v3037 = vadd.f32 0.0, %v3036
      %3038 = vmatmul.f32.gmra.mxu0 %v2831
      %v3039 = vpop.f32.mrf.mxu0
      %v3040 = vadd.f32 0.0, %v3039
      %3041 = vmatmul.f32.gmra.mxu0 %v2834
      %v3042 = vpop.f32.mrf.mxu0
      %v3043 = vadd.f32 0.0, %v3042
      %3044 = vmatmul.f32.gmra.mxu0 %v2837
      %v3045 = vpop.f32.mrf.mxu0
      %v3046 = vadd.f32 0.0, %v3045
      %3047 = vmatmul.f32.gmra.mxu0 %v2840
      %v3048 = vpop.f32.mrf.mxu0
      %v3049 = vadd.f32 0.0, %v3048
      %3050 = vmatmul.f32.gmra.mxu0 %v2843
      %v3051 = vpop.f32.mrf.mxu0
      %v3052 = vadd.f32 0.0, %v3051
      %3053 = vmatmul.f32.gmra.mxu0 %v2846
      %v3054 = vpop.f32.mrf.mxu0
      %v3055 = vadd.f32 0.0, %v3054
      %3056 = vmatmul.f32.gmra.mxu0 %v2849
      %v3057 = vpop.f32.mrf.mxu0
      %v3058 = vadd.f32 0.0, %v3057
      %3059 = vmatmul.f32.gmra.mxu0 %v2852
      %v3060 = vpop.f32.mrf.mxu0
      %v3061 = vadd.f32 0.0, %v3060
      %3062 = vmatmul.f32.gmra.mxu0 %v2855
      %v3063 = vpop.f32.mrf.mxu0
      %v3064 = vadd.f32 0.0, %v3063
      %3065 = vmatmul.f32.gmra.mxu0 %v2858
      %v3066 = vpop.f32.mrf.mxu0
      %v3067 = vadd.f32 0.0, %v3066
      %3068 = vmatmul.f32.gmra.mxu0 %v2861
      %v3069 = vpop.f32.mrf.mxu0
      %v3070 = vadd.f32 0.0, %v3069
      %3071 = vmatmul.f32.gmra.mxu0 %v2864
      %v3072 = vpop.f32.mrf.mxu0
      %v3073 = vadd.f32 0.0, %v3072
      %3074 = vmatmul.f32.gmra.mxu0 %v2867
      %v3075 = vpop.f32.mrf.mxu0
      %v3076 = vadd.f32 0.0, %v3075
      %3077 = vmatmul.f32.gmra.mxu0 %v2870
      %v3078 = vpop.f32.mrf.mxu0
      %v3079 = vadd.f32 0.0, %v3078
      %3080 = vmatmul.f32.gmra.mxu0 %v2873
      %v3081 = vpop.f32.mrf.mxu0
      %v3082 = vadd.f32 0.0, %v3081
      %3083 = vmatmul.f32.gmra.mxu0 %v2876
      %v3084 = vpop.f32.mrf.mxu0
      %v3085 = vadd.f32 0.0, %v3084
      %3086 = vmatmul.f32.gmra.mxu0 %v2879
      %v3087 = vpop.f32.mrf.mxu0
      %v3088 = vadd.f32 0.0, %v3087
      %3089 = vmatmul.f32.gmra.mxu0 %v2882
      %v3090 = vpop.f32.mrf.mxu0
      %v3091 = vadd.f32 0.0, %v3090
      %3092 = vmatmul.f32.gmra.mxu0 %v2885
      %v3093 = vpop.f32.mrf.mxu0
      %v3094 = vadd.f32 0.0, %v3093
      %3095 = vmatmul.f32.gmra.mxu0 %v2888
      %v3096 = vpop.f32.mrf.mxu0
      %v3097 = vadd.f32 0.0, %v3096
      %3098 = vmatmul.f32.gmra.mxu0 %v2891
      %v3099 = vpop.f32.mrf.mxu0
      %v3100 = vadd.f32 0.0, %v3099
      %3101 = vmatmul.f32.gmra.mxu0 %v2894
      %v3102 = vpop.f32.mrf.mxu0
      %v3103 = vadd.f32 0.0, %v3102
      %3104 = vmatmul.f32.gmra.mxu0 %v2897
      %v3105 = vpop.f32.mrf.mxu0
      %v3106 = vadd.f32 0.0, %v3105
      %3107 = vmatmul.f32.gmra.mxu0 %v2900
      %v3108 = vpop.f32.mrf.mxu0
      %v3109 = vadd.f32 0.0, %v3108
      %3110 = vmatmul.f32.gmra.mxu0 %v2903
      %v3111 = vpop.f32.mrf.mxu0
      %v3112 = vadd.f32 0.0, %v3111
      %3113 = vmatmul.f32.gmra.mxu0 %v2906
      %v3114 = vpop.f32.mrf.mxu0
      %v3115 = vadd.f32 0.0, %v3114
      %3116 = vmatmul.f32.gmra.mxu0 %v2909
      %v3117 = vpop.f32.mrf.mxu0
      %v3118 = vadd.f32 0.0, %v3117
      %3119 = vmatmul.f32.gmra.mxu0 %v2912
      %v3120 = vpop.f32.mrf.mxu0
      %v3121 = vadd.f32 0.0, %v3120
      %3122 = vmatmul.f32.gmra.mxu0 %v2915
      %v3123 = vpop.f32.mrf.mxu0
      %v3124 = vadd.f32 0.0, %v3123
      %3125 = vmatmul.f32.gmra.mxu0 %v2918
      %v3126 = vpop.f32.mrf.mxu0
      %v3127 = vadd.f32 0.0, %v3126
      %3128 = vmatmul.f32.gmra.mxu0 %v2921
      %v3129 = vpop.f32.mrf.mxu0
      %v3130 = vadd.f32 0.0, %v3129
      %3131 = vmatmul.f32.gmra.mxu0 %v2924
      %v3132 = vpop.f32.mrf.mxu0
      %v3133 = vadd.f32 0.0, %v3132
      %3134 = vmatmul.f32.gmra.mxu0 %v2927
      %v3135 = vpop.f32.mrf.mxu0
      %v3136 = vadd.f32 0.0, %v3135
      %3137 = vmatmul.f32.gmra.mxu0 %v2930
      %v3138 = vpop.f32.mrf.mxu0
      %v3139 = vadd.f32 0.0, %v3138
      %3140 = vmatmul.f32.gmra.mxu0 %v2933
      %v3141 = vpop.f32.mrf.mxu0
      %v3142 = vadd.f32 0.0, %v3141
      %3143 = vdwg.mxu0
      %3208 = vrot.lane.b32.xlu0 %v2038, 32
      %v3209 = vpop.permute.xlu0 %3208
      %3210 = vrot.lane.b32.xlu0 %v2041, 32
      %v3211 = vpop.permute.xlu0 %3210
      %3212 = vrot.lane.b32.xlu0 %v2044, 32
      %v3213 = vpop.permute.xlu0 %3212
      %3214 = vrot.lane.b32.xlu0 %v2047, 32
      %v3215 = vpop.permute.xlu0 %3214
      %3216 = vrot.lane.b32.xlu0 %v2050, 32
      %v3217 = vpop.permute.xlu0 %3216
      %3218 = vrot.lane.b32.xlu0 %v2053, 32
      %v3219 = vpop.permute.xlu0 %3218
      %3220 = vrot.lane.b32.xlu0 %v2056, 32
      %v3221 = vpop.permute.xlu0 %3220
      %3222 = vrot.lane.b32.xlu0 %v2059, 32
      %v3223 = vpop.permute.xlu0 %3222
      %3224 = vrot.lane.b32.xlu0 %v2062, 32
      %v3225 = vpop.permute.xlu0 %3224
      %3226 = vrot.lane.b32.xlu0 %v2065, 32
      %v3227 = vpop.permute.xlu0 %3226
      %3228 = vrot.lane.b32.xlu0 %v2068, 32
      %v3229 = vpop.permute.xlu0 %3228
      %3230 = vrot.lane.b32.xlu0 %v2071, 32
      %v3231 = vpop.permute.xlu0 %3230
      %3232 = vrot.lane.b32.xlu0 %v2074, 32
      %v3233 = vpop.permute.xlu0 %3232
      %3234 = vrot.lane.b32.xlu0 %v2077, 32
      %v3235 = vpop.permute.xlu0 %3234
      %3236 = vrot.lane.b32.xlu0 %v2080, 32
      %v3237 = vpop.permute.xlu0 %3236
      %3238 = vrot.lane.b32.xlu0 %v2083, 32
      %v3239 = vpop.permute.xlu0 %3238
      %3240 = vrot.lane.b32.xlu0 %v2086, 32
      %v3241 = vpop.permute.xlu0 %3240
      %3242 = vrot.lane.b32.xlu0 %v2089, 32
      %v3243 = vpop.permute.xlu0 %3242
      %3244 = vrot.lane.b32.xlu0 %v2092, 32
      %v3245 = vpop.permute.xlu0 %3244
      %3246 = vrot.lane.b32.xlu0 %v2095, 32
      %v3247 = vpop.permute.xlu0 %3246
      %3248 = vrot.lane.b32.xlu0 %v2098, 32
      %v3249 = vpop.permute.xlu0 %3248
      %3250 = vrot.lane.b32.xlu0 %v2101, 32
      %v3251 = vpop.permute.xlu0 %3250
      %3252 = vrot.lane.b32.xlu0 %v2104, 32
      %v3253 = vpop.permute.xlu0 %3252
      %3254 = vrot.lane.b32.xlu0 %v2107, 32
      %v3255 = vpop.permute.xlu0 %3254
      %3256 = vrot.lane.b32.xlu0 %v2110, 32
      %v3257 = vpop.permute.xlu0 %3256
      %3258 = vrot.lane.b32.xlu0 %v2113, 32
      %v3259 = vpop.permute.xlu0 %3258
      %3260 = vrot.lane.b32.xlu0 %v2116, 32
      %v3261 = vpop.permute.xlu0 %3260
      %3262 = vrot.lane.b32.xlu0 %v2119, 32
      %v3263 = vpop.permute.xlu0 %3262
      %3264 = vrot.lane.b32.xlu0 %v2122, 32
      %v3265 = vpop.permute.xlu0 %3264
      %3266 = vrot.lane.b32.xlu0 %v2125, 32
      %v3267 = vpop.permute.xlu0 %3266
      %3268 = vrot.lane.b32.xlu0 %v2128, 32
      %v3269 = vpop.permute.xlu0 %3268
      %3270 = vrot.lane.b32.xlu0 %v2131, 32
      %v3271 = vpop.permute.xlu0 %3270
      %3272 = vrot.lane.b32.xlu0 %v2134, 32
      %v3273 = vpop.permute.xlu0 %3272
      %3274 = vrot.lane.b32.xlu0 %v2137, 32
      %v3275 = vpop.permute.xlu0 %3274
      %3276 = vrot.lane.b32.xlu0 %v2140, 32
      %v3277 = vpop.permute.xlu0 %3276
      %3278 = vrot.lane.b32.xlu0 %v2143, 32
      %v3279 = vpop.permute.xlu0 %3278
      %3280 = vrot.lane.b32.xlu0 %v2146, 32
      %v3281 = vpop.permute.xlu0 %3280
      %3282 = vrot.lane.b32.xlu0 %v2149, 32
      %v3283 = vpop.permute.xlu0 %3282
      %3284 = vrot.lane.b32.xlu0 %v2152, 32
      %v3285 = vpop.permute.xlu0 %3284
      %3286 = vrot.lane.b32.xlu0 %v2155, 32
      %v3287 = vpop.permute.xlu0 %3286
      %3288 = vrot.lane.b32.xlu0 %v2158, 32
      %v3289 = vpop.permute.xlu0 %3288
      %3290 = vrot.lane.b32.xlu0 %v2161, 32
      %v3291 = vpop.permute.xlu0 %3290
      %3292 = vrot.lane.b32.xlu0 %v2164, 32
      %v3293 = vpop.permute.xlu0 %3292
      %3294 = vrot.lane.b32.xlu0 %v2167, 32
      %v3295 = vpop.permute.xlu0 %3294
      %3296 = vrot.lane.b32.xlu0 %v2170, 32
      %v3297 = vpop.permute.xlu0 %3296
      %3298 = vrot.lane.b32.xlu0 %v2173, 32
      %v3299 = vpop.permute.xlu0 %3298
      %3300 = vrot.lane.b32.xlu0 %v2176, 32
      %v3301 = vpop.permute.xlu0 %3300
      %3302 = vrot.lane.b32.xlu0 %v2179, 32
      %v3303 = vpop.permute.xlu0 %3302
      %3304 = vrot.lane.b32.xlu0 %v2182, 32
      %v3305 = vpop.permute.xlu0 %3304
      %3306 = vrot.lane.b32.xlu0 %v2185, 32
      %v3307 = vpop.permute.xlu0 %3306
      %3308 = vrot.lane.b32.xlu0 %v2188, 32
      %v3309 = vpop.permute.xlu0 %3308
      %3310 = vrot.lane.b32.xlu0 %v2191, 32
      %v3311 = vpop.permute.xlu0 %3310
      %3312 = vrot.lane.b32.xlu0 %v2194, 32
      %v3313 = vpop.permute.xlu0 %3312
      %3314 = vrot.lane.b32.xlu0 %v2197, 32
      %v3315 = vpop.permute.xlu0 %3314
      %3316 = vrot.lane.b32.xlu0 %v2200, 32
      %v3317 = vpop.permute.xlu0 %3316
      %3318 = vrot.lane.b32.xlu0 %v2203, 32
      %v3319 = vpop.permute.xlu0 %3318
      %3320 = vrot.lane.b32.xlu0 %v2206, 32
      %v3321 = vpop.permute.xlu0 %3320
      %3322 = vrot.lane.b32.xlu0 %v2209, 32
      %v3323 = vpop.permute.xlu0 %3322
      %3324 = vrot.lane.b32.xlu0 %v2212, 32
      %v3325 = vpop.permute.xlu0 %3324
      %3326 = vrot.lane.b32.xlu0 %v2215, 32
      %v3327 = vpop.permute.xlu0 %3326
      %3328 = vrot.lane.b32.xlu0 %v2218, 32
      %v3329 = vpop.permute.xlu0 %3328
      %3330 = vrot.lane.b32.xlu0 %v2221, 32
      %v3331 = vpop.permute.xlu0 %3330
      %3332 = vrot.lane.b32.xlu0 %v2224, 32
      %v3333 = vpop.permute.xlu0 %3332
      %3334 = vrot.lane.b32.xlu0 %v2227, 32
      %v3335 = vpop.permute.xlu0 %3334
      %3464 = vrot.lane.b32.xlu0 %v2953, 96
      %v3465 = vpop.permute.xlu0 %3464
      %3466 = vrot.lane.b32.xlu0 %v2956, 96
      %v3467 = vpop.permute.xlu0 %3466
      %3468 = vrot.lane.b32.xlu0 %v2959, 96
      %v3469 = vpop.permute.xlu0 %3468
      %3470 = vrot.lane.b32.xlu0 %v2962, 96
      %v3471 = vpop.permute.xlu0 %3470
      %3472 = vrot.lane.b32.xlu0 %v2965, 96
      %v3473 = vpop.permute.xlu0 %3472
      %3474 = vrot.lane.b32.xlu0 %v2968, 96
      %v3475 = vpop.permute.xlu0 %3474
      %3476 = vrot.lane.b32.xlu0 %v2971, 96
      %v3477 = vpop.permute.xlu0 %3476
      %3478 = vrot.lane.b32.xlu0 %v2974, 96
      %v3479 = vpop.permute.xlu0 %3478
      %3480 = vrot.lane.b32.xlu0 %v2977, 96
      %v3481 = vpop.permute.xlu0 %3480
      %3482 = vrot.lane.b32.xlu0 %v2980, 96
      %v3483 = vpop.permute.xlu0 %3482
      %3484 = vrot.lane.b32.xlu0 %v2983, 96
      %v3485 = vpop.permute.xlu0 %3484
      %3486 = vrot.lane.b32.xlu0 %v2986, 96
      %v3487 = vpop.permute.xlu0 %3486
      %3488 = vrot.lane.b32.xlu0 %v2989, 96
      %v3489 = vpop.permute.xlu0 %3488
      %3490 = vrot.lane.b32.xlu0 %v2992, 96
      %v3491 = vpop.permute.xlu0 %3490
      %3492 = vrot.lane.b32.xlu0 %v2995, 96
      %v3493 = vpop.permute.xlu0 %3492
      %3494 = vrot.lane.b32.xlu0 %v2998, 96
      %v3495 = vpop.permute.xlu0 %3494
      %3496 = vrot.lane.b32.xlu0 %v3001, 96
      %v3497 = vpop.permute.xlu0 %3496
      %3498 = vrot.lane.b32.xlu0 %v3004, 96
      %v3499 = vpop.permute.xlu0 %3498
      %3500 = vrot.lane.b32.xlu0 %v3007, 96
      %v3501 = vpop.permute.xlu0 %3500
      %3502 = vrot.lane.b32.xlu0 %v3010, 96
      %v3503 = vpop.permute.xlu0 %3502
      %3504 = vrot.lane.b32.xlu0 %v3013, 96
      %v3505 = vpop.permute.xlu0 %3504
      %3506 = vrot.lane.b32.xlu0 %v3016, 96
      %v3507 = vpop.permute.xlu0 %3506
      %3508 = vrot.lane.b32.xlu0 %v3019, 96
      %v3509 = vpop.permute.xlu0 %3508
      %3510 = vrot.lane.b32.xlu0 %v3022, 96
      %v3511 = vpop.permute.xlu0 %3510
      %3512 = vrot.lane.b32.xlu0 %v3025, 96
      %v3513 = vpop.permute.xlu0 %3512
      %3514 = vrot.lane.b32.xlu0 %v3028, 96
      %v3515 = vpop.permute.xlu0 %3514
      %3516 = vrot.lane.b32.xlu0 %v3031, 96
      %v3517 = vpop.permute.xlu0 %3516
      %3518 = vrot.lane.b32.xlu0 %v3034, 96
      %v3519 = vpop.permute.xlu0 %3518
      %3520 = vrot.lane.b32.xlu0 %v3037, 96
      %v3521 = vpop.permute.xlu0 %3520
      %3522 = vrot.lane.b32.xlu0 %v3040, 96
      %v3523 = vpop.permute.xlu0 %3522
      %3524 = vrot.lane.b32.xlu0 %v3043, 96
      %v3525 = vpop.permute.xlu0 %3524
      %3526 = vrot.lane.b32.xlu0 %v3046, 96
      %v3527 = vpop.permute.xlu0 %3526
      %3528 = vrot.lane.b32.xlu0 %v3049, 96
      %v3529 = vpop.permute.xlu0 %3528
      %3530 = vrot.lane.b32.xlu0 %v3052, 96
      %v3531 = vpop.permute.xlu0 %3530
      %3532 = vrot.lane.b32.xlu0 %v3055, 96
      %v3533 = vpop.permute.xlu0 %3532
      %3534 = vrot.lane.b32.xlu0 %v3058, 96
      %v3535 = vpop.permute.xlu0 %3534
      %3536 = vrot.lane.b32.xlu0 %v3061, 96
      %v3537 = vpop.permute.xlu0 %3536
      %3538 = vrot.lane.b32.xlu0 %v3064, 96
      %v3539 = vpop.permute.xlu0 %3538
      %3540 = vrot.lane.b32.xlu0 %v3067, 96
      %v3541 = vpop.permute.xlu0 %3540
      %3542 = vrot.lane.b32.xlu0 %v3070, 96
      %v3543 = vpop.permute.xlu0 %3542
      %3544 = vrot.lane.b32.xlu0 %v3073, 96
      %v3545 = vpop.permute.xlu0 %3544
      %3546 = vrot.lane.b32.xlu0 %v3076, 96
      %v3547 = vpop.permute.xlu0 %3546
      %3548 = vrot.lane.b32.xlu0 %v3079, 96
      %v3549 = vpop.permute.xlu0 %3548
      %3550 = vrot.lane.b32.xlu0 %v3082, 96
      %v3551 = vpop.permute.xlu0 %3550
      %3552 = vrot.lane.b32.xlu0 %v3085, 96
      %v3553 = vpop.permute.xlu0 %3552
      %3554 = vrot.lane.b32.xlu0 %v3088, 96
      %v3555 = vpop.permute.xlu0 %3554
      %3556 = vrot.lane.b32.xlu0 %v3091, 96
      %v3557 = vpop.permute.xlu0 %3556
      %3558 = vrot.lane.b32.xlu0 %v3094, 96
      %v3559 = vpop.permute.xlu0 %3558
      %3560 = vrot.lane.b32.xlu0 %v3097, 96
      %v3561 = vpop.permute.xlu0 %3560
      %3562 = vrot.lane.b32.xlu0 %v3100, 96
      %v3563 = vpop.permute.xlu0 %3562
      %3564 = vrot.lane.b32.xlu0 %v3103, 96
      %v3565 = vpop.permute.xlu0 %3564
      %3566 = vrot.lane.b32.xlu0 %v3106, 96
      %v3567 = vpop.permute.xlu0 %3566
      %3568 = vrot.lane.b32.xlu0 %v3109, 96
      %v3569 = vpop.permute.xlu0 %3568
      %3570 = vrot.lane.b32.xlu0 %v3112, 96
      %v3571 = vpop.permute.xlu0 %3570
      %3572 = vrot.lane.b32.xlu0 %v3115, 96
      %v3573 = vpop.permute.xlu0 %3572
      %3574 = vrot.lane.b32.xlu0 %v3118, 96
      %v3575 = vpop.permute.xlu0 %3574
      %3576 = vrot.lane.b32.xlu0 %v3121, 96
      %v3577 = vpop.permute.xlu0 %3576
      %3578 = vrot.lane.b32.xlu0 %v3124, 96
      %v3579 = vpop.permute.xlu0 %3578
      %3580 = vrot.lane.b32.xlu0 %v3127, 96
      %v3581 = vpop.permute.xlu0 %3580
      %3582 = vrot.lane.b32.xlu0 %v3130, 96
      %v3583 = vpop.permute.xlu0 %3582
      %3584 = vrot.lane.b32.xlu0 %v3133, 96
      %v3585 = vpop.permute.xlu0 %3584
      %3586 = vrot.lane.b32.xlu0 %v3136, 96
      %v3587 = vpop.permute.xlu0 %3586
      %3588 = vrot.lane.b32.xlu0 %v3139, 96
      %v3589 = vpop.permute.xlu0 %3588
      %3590 = vrot.lane.b32.xlu0 %v3142, 96
      %v3591 = vpop.permute.xlu0 %3590
      %v3656 = vsel %vm1827, %v1120, %v3209
      %v3657 = vsel %vm1827, %v1123, %v3211
      %v3658 = vsel %vm1827, %v1126, %v3213
      %v3659 = vsel %vm1827, %v1129, %v3215
      %v3660 = vsel %vm1827, %v1132, %v3217
      %v3661 = vsel %vm1827, %v1135, %v3219
      %v3662 = vsel %vm1827, %v1138, %v3221
      %v3663 = vsel %vm1827, %v1141, %v3223
      %v3664 = vsel %vm1827, %v1144, %v3225
      %v3665 = vsel %vm1827, %v1147, %v3227
      %v3666 = vsel %vm1827, %v1150, %v3229
      %v3667 = vsel %vm1827, %v1153, %v3231
      %v3668 = vsel %vm1827, %v1156, %v3233
      %v3669 = vsel %vm1827, %v1159, %v3235
      %v3670 = vsel %vm1827, %v1162, %v3237
      %v3671 = vsel %vm1827, %v1165, %v3239
      %v3672 = vsel %vm1827, %v1168, %v3241
      %v3673 = vsel %vm1827, %v1171, %v3243
      %v3674 = vsel %vm1827, %v1174, %v3245
      %v3675 = vsel %vm1827, %v1177, %v3247
      %v3676 = vsel %vm1827, %v1180, %v3249
      %v3677 = vsel %vm1827, %v1183, %v3251
      %v3678 = vsel %vm1827, %v1186, %v3253
      %v3679 = vsel %vm1827, %v1189, %v3255
      %v3680 = vsel %vm1827, %v1192, %v3257
      %v3681 = vsel %vm1827, %v1195, %v3259
      %v3682 = vsel %vm1827, %v1198, %v3261
      %v3683 = vsel %vm1827, %v1201, %v3263
      %v3684 = vsel %vm1827, %v1204, %v3265
      %v3685 = vsel %vm1827, %v1207, %v3267
      %v3686 = vsel %vm1827, %v1210, %v3269
      %v3687 = vsel %vm1827, %v1213, %v3271
      %v3688 = vsel %vm1827, %v1216, %v3273
      %v3689 = vsel %vm1827, %v1219, %v3275
      %v3690 = vsel %vm1827, %v1222, %v3277
      %v3691 = vsel %vm1827, %v1225, %v3279
      %v3692 = vsel %vm1827, %v1228, %v3281
      %v3693 = vsel %vm1827, %v1231, %v3283
      %v3694 = vsel %vm1827, %v1234, %v3285
      %v3695 = vsel %vm1827, %v1237, %v3287
      %v3696 = vsel %vm1827, %v1240, %v3289
      %v3697 = vsel %vm1827, %v1243, %v3291
      %v3698 = vsel %vm1827, %v1246, %v3293
      %v3699 = vsel %vm1827, %v1249, %v3295
      %v3700 = vsel %vm1827, %v1252, %v3297
      %v3701 = vsel %vm1827, %v1255, %v3299
      %v3702 = vsel %vm1827, %v1258, %v3301
      %v3703 = vsel %vm1827, %v1261, %v3303
      %v3704 = vsel %vm1827, %v1264, %v3305
      %v3705 = vsel %vm1827, %v1267, %v3307
      %v3706 = vsel %vm1827, %v1270, %v3309
      %v3707 = vsel %vm1827, %v1273, %v3311
      %v3708 = vsel %vm1827, %v1276, %v3313
      %v3709 = vsel %vm1827, %v1279, %v3315
      %v3710 = vsel %vm1827, %v1282, %v3317
      %v3711 = vsel %vm1827, %v1285, %v3319
      %v3712 = vsel %vm1827, %v1288, %v3321
      %v3713 = vsel %vm1827, %v1291, %v3323
      %v3714 = vsel %vm1827, %v1294, %v3325
      %v3715 = vsel %vm1827, %v1297, %v3327
      %v3716 = vsel %vm1827, %v1300, %v3329
      %v3717 = vsel %vm1827, %v1303, %v3331
      %v3718 = vsel %vm1827, %v1306, %v3333
      %v3719 = vsel %vm1827, %v1309, %v3335
      %vm3720 = vcmask 785408
      %v3721 = vsel %vm3720, %v3656, %v3465
      %v3722 = vsel %vm3720, %v3657, %v3467
      %v3723 = vsel %vm3720, %v3658, %v3469
      %v3724 = vsel %vm3720, %v3659, %v3471
      %v3725 = vsel %vm3720, %v3660, %v3473
      %v3726 = vsel %vm3720, %v3661, %v3475
      %v3727 = vsel %vm3720, %v3662, %v3477
      %v3728 = vsel %vm3720, %v3663, %v3479
      %v3729 = vsel %vm3720, %v3664, %v3481
      %v3730 = vsel %vm3720, %v3665, %v3483
      %v3731 = vsel %vm3720, %v3666, %v3485
      %v3732 = vsel %vm3720, %v3667, %v3487
      %v3733 = vsel %vm3720, %v3668, %v3489
      %v3734 = vsel %vm3720, %v3669, %v3491
      %v3735 = vsel %vm3720, %v3670, %v3493
      %v3736 = vsel %vm3720, %v3671, %v3495
      %v3737 = vsel %vm3720, %v3672, %v3497
      %v3738 = vsel %vm3720, %v3673, %v3499
      %v3739 = vsel %vm3720, %v3674, %v3501
      %v3740 = vsel %vm3720, %v3675, %v3503
      %v3741 = vsel %vm3720, %v3676, %v3505
      %v3742 = vsel %vm3720, %v3677, %v3507
      %v3743 = vsel %vm3720, %v3678, %v3509
      %v3744 = vsel %vm3720, %v3679, %v3511
      %v3745 = vsel %vm3720, %v3680, %v3513
      %v3746 = vsel %vm3720, %v3681, %v3515
      %v3747 = vsel %vm3720, %v3682, %v3517
      %v3748 = vsel %vm3720, %v3683, %v3519
      %v3749 = vsel %vm3720, %v3684, %v3521
      %v3750 = vsel %vm3720, %v3685, %v3523
      %v3751 = vsel %vm3720, %v3686, %v3525
      %v3752 = vsel %vm3720, %v3687, %v3527
      %v3753 = vsel %vm3720, %v3688, %v3529
      %v3754 = vsel %vm3720, %v3689, %v3531
      %v3755 = vsel %vm3720, %v3690, %v3533
      %v3756 = vsel %vm3720, %v3691, %v3535
      %v3757 = vsel %vm3720, %v3692, %v3537
      %v3758 = vsel %vm3720, %v3693, %v3539
      %v3759 = vsel %vm3720, %v3694, %v3541
      %v3760 = vsel %vm3720, %v3695, %v3543
      %v3761 = vsel %vm3720, %v3696, %v3545
      %v3762 = vsel %vm3720, %v3697, %v3547
      %v3763 = vsel %vm3720, %v3698, %v3549
      %v3764 = vsel %vm3720, %v3699, %v3551
      %v3765 = vsel %vm3720, %v3700, %v3553
      %v3766 = vsel %vm3720, %v3701, %v3555
      %v3767 = vsel %vm3720, %v3702, %v3557
      %v3768 = vsel %vm3720, %v3703, %v3559
      %v3769 = vsel %vm3720, %v3704, %v3561
      %v3770 = vsel %vm3720, %v3705, %v3563
      %v3771 = vsel %vm3720, %v3706, %v3565
      %v3772 = vsel %vm3720, %v3707, %v3567
      %v3773 = vsel %vm3720, %v3708, %v3569
      %v3774 = vsel %vm3720, %v3709, %v3571
      %v3775 = vsel %vm3720, %v3710, %v3573
      %v3776 = vsel %vm3720, %v3711, %v3575
      %v3777 = vsel %vm3720, %v3712, %v3577
      %v3778 = vsel %vm3720, %v3713, %v3579
      %v3779 = vsel %vm3720, %v3714, %v3581
      %v3780 = vsel %vm3720, %v3715, %v3583
      %v3781 = vsel %vm3720, %v3716, %v3585
      %v3782 = vsel %vm3720, %v3717, %v3587
      %v3783 = vsel %vm3720, %v3718, %v3589
      %v3784 = vsel %vm3720, %v3719, %v3591
      %vm3785 = vcmask 916480
      %v3786 = vsel %vm3785, %v3721, 0.0
      %v3787 = vsel %vm3785, %v3722, 0.0
      %v3788 = vsel %vm3785, %v3723, 0.0
      %v3789 = vsel %vm3785, %v3724, 0.0
      %v3790 = vsel %vm3785, %v3725, 0.0
      %v3791 = vsel %vm3785, %v3726, 0.0
      %v3792 = vsel %vm3785, %v3727, 0.0
      %v3793 = vsel %vm3785, %v3728, 0.0
      %v3794 = vsel %vm3785, %v3729, 0.0
      %v3795 = vsel %vm3785, %v3730, 0.0
      %v3796 = vsel %vm3785, %v3731, 0.0
      %v3797 = vsel %vm3785, %v3732, 0.0
      %v3798 = vsel %vm3785, %v3733, 0.0
      %v3799 = vsel %vm3785, %v3734, 0.0
      %v3800 = vsel %vm3785, %v3735, 0.0
      %v3801 = vsel %vm3785, %v3736, 0.0
      %v3802 = vsel %vm3785, %v3737, 0.0
      %v3803 = vsel %vm3785, %v3738, 0.0
      %v3804 = vsel %vm3785, %v3739, 0.0
      %v3805 = vsel %vm3785, %v3740, 0.0
      %v3806 = vsel %vm3785, %v3741, 0.0
      %v3807 = vsel %vm3785, %v3742, 0.0
      %v3808 = vsel %vm3785, %v3743, 0.0
      %v3809 = vsel %vm3785, %v3744, 0.0
      %v3810 = vsel %vm3785, %v3745, 0.0
      %v3811 = vsel %vm3785, %v3746, 0.0
      %v3812 = vsel %vm3785, %v3747, 0.0
      %v3813 = vsel %vm3785, %v3748, 0.0
      %v3814 = vsel %vm3785, %v3749, 0.0
      %v3815 = vsel %vm3785, %v3750, 0.0
      %v3816 = vsel %vm3785, %v3751, 0.0
      %v3817 = vsel %vm3785, %v3752, 0.0
      %v3818 = vsel %vm3785, %v3753, 0.0
      %v3819 = vsel %vm3785, %v3754, 0.0
      %v3820 = vsel %vm3785, %v3755, 0.0
      %v3821 = vsel %vm3785, %v3756, 0.0
      %v3822 = vsel %vm3785, %v3757, 0.0
      %v3823 = vsel %vm3785, %v3758, 0.0
      %v3824 = vsel %vm3785, %v3759, 0.0
      %v3825 = vsel %vm3785, %v3760, 0.0
      %v3826 = vsel %vm3785, %v3761, 0.0
      %v3827 = vsel %vm3785, %v3762, 0.0
      %v3828 = vsel %vm3785, %v3763, 0.0
      %v3829 = vsel %vm3785, %v3764, 0.0
      %v3830 = vsel %vm3785, %v3765, 0.0
      %v3831 = vsel %vm3785, %v3766, 0.0
      %v3832 = vsel %vm3785, %v3767, 0.0
      %v3833 = vsel %vm3785, %v3768, 0.0
      %v3834 = vsel %vm3785, %v3769, 0.0
      %v3835 = vsel %vm3785, %v3770, 0.0
      %v3836 = vsel %vm3785, %v3771, 0.0
      %v3837 = vsel %vm3785, %v3772, 0.0
      %v3838 = vsel %vm3785, %v3773, 0.0
      %v3839 = vsel %vm3785, %v3774, 0.0
      %v3840 = vsel %vm3785, %v3775, 0.0
      %v3841 = vsel %vm3785, %v3776, 0.0
      %v3842 = vsel %vm3785, %v3777, 0.0
      %v3843 = vsel %vm3785, %v3778, 0.0
      %v3844 = vsel %vm3785, %v3779, 0.0
      %v3845 = vsel %vm3785, %v3780, 0.0
      %v3846 = vsel %vm3785, %v3781, 0.0
      %v3847 = vsel %vm3785, %v3782, 0.0
      %v3848 = vsel %vm3785, %v3783, 0.0
      %v3849 = vsel %vm3785, %v3784, 0.0
      %3850 = vst [vmem:[%s199] sm:$0xff] %v3786
      %3851 = vst [vmem:[%s199 + $0x8] sm:$0xff] %v3787
      %3852 = vst [vmem:[%s199 + $0x10] sm:$0xff] %v3788
      %3853 = vst [vmem:[%s199 + $0x18] sm:$0xff] %v3789
      %3854 = vst [vmem:[%s199 + $0x20] sm:$0xff] %v3790
      %3855 = vst [vmem:[%s199 + $0x28] sm:$0xff] %v3791
      %3856 = vst [vmem:[%s199 + $0x30] sm:$0xff] %v3792
      %3857 = vst [vmem:[%s199 + $0x38] sm:$0xff] %v3793
      %3858 = vst [vmem:[%s199 + $0x40] sm:$0xff] %v3794
      %3859 = vst [vmem:[%s199 + $0x48] sm:$0xff] %v3795
      %3860 = vst [vmem:[%s199 + $0x50] sm:$0xff] %v3796
      %3861 = vst [vmem:[%s199 + $0x58] sm:$0xff] %v3797
      %3862 = vst [vmem:[%s199 + $0x60] sm:$0xff] %v3798
      %3863 = vst [vmem:[%s199 + $0x68] sm:$0xff] %v3799
      %3864 = vst [vmem:[%s199 + $0x70] sm:$0xff] %v3800
      %3865 = vst [vmem:[%s199 + $0x78] sm:$0xff] %v3801
      %3866 = vst [vmem:[%s199 + $0x80] sm:$0xff] %v3802
      %3867 = vst [vmem:[%s199 + $0x88] sm:$0xff] %v3803
      %3868 = vst [vmem:[%s199 + $0x90] sm:$0xff] %v3804
      %3869 = vst [vmem:[%s199 + $0x98] sm:$0xff] %v3805
      %3870 = vst [vmem:[%s199 + $0xa0] sm:$0xff] %v3806
      %3871 = vst [vmem:[%s199 + $0xa8] sm:$0xff] %v3807
      %3872 = vst [vmem:[%s199 + $0xb0] sm:$0xff] %v3808
      %3873 = vst [vmem:[%s199 + $0xb8] sm:$0xff] %v3809
      %3874 = vst [vmem:[%s199 + $0xc0] sm:$0xff] %v3810
      %3875 = vst [vmem:[%s199 + $0xc8] sm:$0xff] %v3811
      %3876 = vst [vmem:[%s199 + $0xd0] sm:$0xff] %v3812
      %3877 = vst [vmem:[%s199 + $0xd8] sm:$0xff] %v3813
      %3878 = vst [vmem:[%s199 + $0xe0] sm:$0xff] %v3814
      %3879 = vst [vmem:[%s199 + $0xe8] sm:$0xff] %v3815
      %3880 = vst [vmem:[%s199 + $0xf0] sm:$0xff] %v3816
      %3881 = vst [vmem:[%s199 + $0xf8] sm:$0xff] %v3817
      %3882 = vst [vmem:[%s199 + $0x100] sm:$0xff] %v3818
      %3883 = vst [vmem:[%s199 + $0x108] sm:$0xff] %v3819
      %3884 = vst [vmem:[%s199 + $0x110] sm:$0xff] %v3820
      %3885 = vst [vmem:[%s199 + $0x118] sm:$0xff] %v3821
      %3886 = vst [vmem:[%s199 + $0x120] sm:$0xff] %v3822
      %3887 = vst [vmem:[%s199 + $0x128] sm:$0xff] %v3823
      %3888 = vst [vmem:[%s199 + $0x130] sm:$0xff] %v3824
      %3889 = vst [vmem:[%s199 + $0x138] sm:$0xff] %v3825
      %3890 = vst [vmem:[%s199 + $0x140] sm:$0xff] %v3826
      %3891 = vst [vmem:[%s199 + $0x148] sm:$0xff] %v3827
      %3892 = vst [vmem:[%s199 + $0x150] sm:$0xff] %v3828
      %3893 = vst [vmem:[%s199 + $0x158] sm:$0xff] %v3829
      %3894 = vst [vmem:[%s199 + $0x160] sm:$0xff] %v3830
      %3895 = vst [vmem:[%s199 + $0x168] sm:$0xff] %v3831
      %3896 = vst [vmem:[%s199 + $0x170] sm:$0xff] %v3832
      %3897 = vst [vmem:[%s199 + $0x178] sm:$0xff] %v3833
      %3898 = vst [vmem:[%s199 + $0x180] sm:$0xff] %v3834
      %3899 = vst [vmem:[%s199 + $0x188] sm:$0xff] %v3835
      %3900 = vst [vmem:[%s199 + $0x190] sm:$0xff] %v3836
      %3901 = vst [vmem:[%s199 + $0x198] sm:$0xff] %v3837
      %3902 = vst [vmem:[%s199 + $0x1a0] sm:$0xff] %v3838
      %3903 = vst [vmem:[%s199 + $0x1a8] sm:$0xff] %v3839
      %3904 = vst [vmem:[%s199 + $0x1b0] sm:$0xff] %v3840
      %3905 = vst [vmem:[%s199 + $0x1b8] sm:$0xff] %v3841
      %3906 = vst [vmem:[%s199 + $0x1c0] sm:$0xff] %v3842
      %3907 = vst [vmem:[%s199 + $0x1c8] sm:$0xff] %v3843
      %3908 = vst [vmem:[%s199 + $0x1d0] sm:$0xff] %v3844
      %3909 = vst [vmem:[%s199 + $0x1d8] sm:$0xff] %v3845
      %3910 = vst [vmem:[%s199 + $0x1e0] sm:$0xff] %v3846
      %3911 = vst [vmem:[%s199 + $0x1e8] sm:$0xff] %v3847
      %3912 = vst [vmem:[%s199 + $0x1f0] sm:$0xff] %v3848
      %3913 = vst [vmem:[%s199 + $0x1f8] sm:$0xff] %v3849
      %s3914 = smul.u32 64, %s15
      %p3915 = scmp.lt.s32.totalorder %s3914, 127
      %s3916 = scalar_select %p3915, %s3914, 127
      %s3917 = smul.addr %s3916, 8
      %s3918 = scalar_lea.vmem %s4, %s3917
      // Predicated region
      $region37: #{lookup.1} parent=35 // pred_check
        %p3919 = pneg %p122
      $region38: #{lookup.1} parent=35 // pred_check_branch
        %3921 = sbr.rel (%p3919) target = $region40
      $region39: #{lookup.1} parent=35 // pred_region
        %s3922 = smul.u32 64, %s15
      $region40: #{lookup.1} parent=35 // pred_fallthru
        _
    $region36: #{lookup.1} parent=5 // pred_fallthru
      _
    %p3923 = scmp.le.s32.totalorder 2, %s10
    // Predicated region
    $region41: #{lookup.1} parent=5 // pred_check
      %p3924 = pneg %p3923
    $region42: #{lookup.1} parent=5 // pred_check_branch
      %3926 = sbr.rel (%p3924) target = $region44
    $region43: #{lookup.1} parent=5 // pred_region
      %s3927 = ssub.s32 %s10, 2
      // Predicated region
      $region45: #{lookup.1} parent=43 // pred_check
        %p3928 = pneg %p128
      $region46: #{lookup.1} parent=43 // pred_check_branch
        %3930 = sbr.rel (%p3928) target = $region48
      $region47: #{lookup.1} parent=43 // pred_region
        %s3931 = smul.u32 64, %s16
        %p3932 = scmp.lt.s32.totalorder %s3931, 127
        %s3933 = scalar_select %p3932, %s3931, 127
        %s3934 = smul.addr %s3933, 8
        %s3935 = scalar_lea.vmem %s4, %s3934
      $region48: #{lookup.1} parent=43 // pred_fallthru
        _
    $region44: #{lookup.1} parent=5 // pred_fallthru
      _
  $region6: #{lookup.1} parent=0 // loop_footer
    %s14 = sadd.s32 1, %s10
  $region7: #{lookup.1} parent=0 // loop_footer_branch
    %9 = sbr.rel target = $region3
  $region8: #{lookup.1} parent=0 // loop_exit
    _

</llo_original>
